<compile_context>
chip_gen: v5e
topology: v5e:2x2
jax: 0.10.0
libtpu: 0.0.40
codegen_flags: <defaults>
</compile_context>

<pallas_src>
import functools

import jax
import jax.numpy as jnp
from jax.experimental import pallas as pl
from jax.experimental.pallas import tpu as pltpu


# ----------------------------------------------------------------------------
# Fused Pallas kernel: conv1+relu+pool -> conv2+relu+pool -> flatten -> MLP
# ----------------------------------------------------------------------------
def fused_cnn_kernel(p1_ref, w1_ref, b1_ref, w2_ref, b2_ref,
                     fw1_ref, fb1_ref, fw2_ref, fb2_ref, o_ref):
    """One batch block of the whole forward pass.

    p1_ref : [bb, 256, 16] bf16  stage-1 im2col patches.  Row (within b) =
             j*16 + p*8 + ih (pooled conv1 position (i, j), i = 2*ih + p),
             lanes = 4x4 input-window tap (wh*4 + ww).
    w1_ref : [16, 64]   bf16  conv1 weight [tap, pool_pos*16 + cout]
                              (3x3 kernel zero-embedded per pool position).
    b1_ref : [1, 64]    f32   conv1 bias tiled over the 4 pool positions.
    w2_ref : [256, 128] bf16  conv2 weight [win_tap*16 + cin, pool_pos*32 + cout].
    b2_ref : [1, 128]   f32   conv2 bias tiled over the 4 pool positions.
    fw1_ref: [2048,128] bf16  fc1 weight, rows pre-permuted to the kernel's
                              (v, u, c) flatten order, cols padded 100 -> 128.
    fb1_ref: [1, 128]   f32
    fw2_ref: [128, 128] bf16  fc2 weight (100 -> 128 rows, NC -> 128 cols).
    fb2_ref: [1, 128]   f32
    o_ref  : [bb, 128]  f32   lane-dense output (slice [:, :NC] outside).
    """
    bb = o_ref.shape[0]

    # ---- stage 1: conv1 as one GEMM, 2x2 max-pool over 4 x 16-lane groups ---
    p1 = p1_ref[...].reshape(bb * 256, 16)
    z1 = jnp.dot(p1, w1_ref[...], preferred_element_type=jnp.float32)  # [bb*256,64]
    z1 = jnp.maximum(z1 + b1_ref[...], 0.0)
    y1 = jnp.maximum(jnp.maximum(z1[:, 0:16], z1[:, 16:32]),
                     jnp.maximum(z1[:, 32:48], z1[:, 48:64]))          # [bb*256,16]

    # ---- regroup y1 into lane-dense "image rows" (lanes = j*16 + c) ---------
    # y1 rows are ordered (b, j, p, ih) with spatial row i = 2*ih + p.
    y1r = y1.reshape(bb, 16, 2, 8, 16)                                 # [b,j,p,ih,c]
    ev = jnp.concatenate([y1r[:, j, 0] for j in range(16)], axis=-1)   # rows i=2*ih
    od = jnp.concatenate([y1r[:, j, 1] for j in range(16)], axis=-1)   # rows i=2*ih+1

    # ---- stage-2 on-chip im2col ---------------------------------------------
    # Padded-row needed for window offset wh at pooled output row u is 2u+wh:
    #   wh=0 -> spatial row 2u-1 (odd rows shifted down, zero halo at u=0)
    #   wh=1 -> spatial row 2u   (ev)
    #   wh=2 -> spatial row 2u+1 (od)
    #   wh=3 -> spatial row 2u+2 (even rows shifted up, zero halo at u=7)
    row_ids = jax.lax.broadcasted_iota(jnp.int32, (bb, 8, 256), 1)
    r0 = jnp.where(row_ids == 0, 0.0, pltpu.roll(od, shift=1, axis=1))
    r3 = jnp.where(row_ids == 7, 0.0, pltpu.roll(ev, shift=7, axis=1))
    zc = jnp.zeros((bb, 8, 16), jnp.float32)
    planes = [jnp.concatenate([zc, r, zc], axis=-1)        # pad cols -> 288 lanes
              for r in (r0, ev, od, r3)]                   # each [bb, 8, 288]

    # 64-lane window at lane offset 32*v covers padded cols 2v..2v+3 (x 16 ch).
    cols = []
    for v in range(8):
        lo = 32 * v
        cols.append(jnp.concatenate([p[:, :, lo:lo + 64] for p in planes],
                                    axis=-1))              # [bb, 8(u), 256]
    patches2 = jnp.stack(cols, axis=1)                      # [bb, 8(v), 8(u), 256]
    patches2 = patches2.reshape(bb * 64, 256).astype(jnp.bfloat16)

    # ---- stage 2: conv2 as one K=256 / N=128 GEMM, pool over 32-lane groups -
    z2 = jnp.dot(patches2, w2_ref[...], preferred_element_type=jnp.float32)
    z2 = jnp.maximum(z2 + b2_ref[...], 0.0)                 # [bb*64, 128]
    y2 = jnp.maximum(jnp.maximum(z2[:, 0:32], z2[:, 32:64]),
                     jnp.maximum(z2[:, 64:96], z2[:, 96:128]))  # [bb*64, 32]

    # ---- flatten: rows (b, v, u) x 32 ch -> [bb, 2048] ----------------------
    # fw1's rows were permuted host-side to this (v, u, c) order, so the
    # flatten is a plain lane re-pack (no transposes, no per-batch loop).
    y2r = y2.astype(jnp.bfloat16).reshape(bb, 64, 32)
    flat = jnp.concatenate([y2r[:, q] for q in range(64)], axis=-1)    # [bb,2048]

    # ---- MLP: Linear(2048,128) -> ReLU -> Linear(128,128) -------------------
    h1 = jnp.dot(flat, fw1_ref[...], preferred_element_type=jnp.float32)
    h1 = jnp.maximum(h1 + fb1_ref[...], 0.0).astype(jnp.bfloat16)
    out = jnp.dot(h1, fw2_ref[...], preferred_element_type=jnp.float32)
    o_ref[...] = out + fb2_ref[...]                                    # [bb, 128]


# ----------------------------------------------------------------------------
# XLA-side glue: compact stage-1 im2col (16 static strided slices + stack).
# TODO(synk): could be moved fully in-kernel off the raw image, but with the
# 4x-smaller patch tensor it is no longer a bottleneck at these sizes.
# ----------------------------------------------------------------------------
def _build_stage1_patches(x):
    """x: [B,1,32,32] f32 -> [B, 256, 16] bf16 stage-1 patches.

    Row (within a sample) = j*16 + p*8 + ih, covering the 4x4 window of the
    zero-padded input needed by pooled conv1 output (i, j) = (2*ih + p, j);
    lanes = window tap wh*4 + ww.
    """
    B = x.shape[0]
    xpad = jnp.pad(x[:, 0], ((0, 0), (1, 1), (1, 1)))          # [B, 34, 34]
    taps = [xpad[:, wh:wh + 31:2, ww:ww + 31:2]                # [B, 16(i), 16(j)]
            for wh in range(4) for ww in range(4)]
    p1 = jnp.stack(taps, axis=-1)                              # [B, 16, 16, 16]
    p1 = p1.reshape(B, 8, 2, 16, 16).transpose(0, 3, 2, 1, 4)  # [B, j, p, ih, tap]
    return p1.reshape(B, 256, 16).astype(jnp.bfloat16)


# ----------------------------------------------------------------------------
# Parameters (PyTorch-style init) and kernel-friendly host-side repacking
# ----------------------------------------------------------------------------
def init_torch_params(key, num_classes):
    ks = jax.random.split(key, 8)

    def u(k, shape, fan_in):
        bound = 1.0 / jnp.sqrt(jnp.float32(fan_in))
        return jax.random.uniform(k, shape, jnp.float32, -bound, bound)

    w1 = u(ks[0], (16, 1, 3, 3), 9)             # Conv2d(1,16,3)   [O,I,kh,kw]
    b1 = u(ks[1], (16,), 9)
    w2 = u(ks[2], (32, 16, 3, 3), 144)          # Conv2d(16,32,3)
    b2 = u(ks[3], (32,), 144)
    fw1 = u(ks[4], (100, 32 * 8 * 8), 2048)     # Linear(2048,100) [out,in]
    fb1 = u(ks[5], (100,), 2048)
    fw2 = u(ks[6], (num_classes, 100), 100)     # Linear(100,NC)
    fb2 = u(ks[7], (num_classes,), 100)
    return (w1, b1, w2, b2, fw1, fb1, fw2, fb2)


def to_kernel_params(tp, num_classes):
    w1, b1, w2, b2, fw1, fb1, fw2, fb2 = tp
    nh = fw1.shape[0]
    assert num_classes <= 128, "fc2 output is padded to 128 lanes"
    assert nh <= 128, "fc1 hidden width is padded to 128 lanes"
    assert fw1.shape[1] == 32 * 8 * 8

    # Both convs: embed the 3x3 kernel into the 4x4 pooling window, once per
    # pool position g = ph*2 + pw, so pool parities live in the GEMM N dim.
    w1k = jnp.zeros((16, 64), jnp.float32)
    w2k = jnp.zeros((256, 128), jnp.float32)
    for ph in range(2):
        for pw in range(2):
            g = ph * 2 + pw
            for dh in range(3):
                for dw in range(3):
                    wh, ww = ph + dh, pw + dw
                    k1 = wh * 4 + ww
                    w1k = w1k.at[k1, g * 16:(g + 1) * 16].set(w1[:, 0, dh, dw])
                    r2 = k1 * 16
                    w2k = w2k.at[r2:r2 + 16, g * 32:(g + 1) * 32].set(
                        w2[:, :, dh, dw].T)
    b1k = jnp.tile(b1, 4).reshape(1, 64)
    b2k = jnp.tile(b2, 4).reshape(1, 128)

    # fc1: permute rows from torch's (c, u, v) flatten order to the kernel's
    # (v, u, c) order; pad hidden 100 -> 128 and classes NC -> 128.
    fw1p = fw1.reshape(nh, 32, 8, 8).transpose(3, 2, 1, 0).reshape(2048, nh)
    fw1k = jnp.zeros((2048, 128), jnp.float32).at[:, :nh].set(fw1p)
    fb1k = jnp.zeros((1, 128), jnp.float32).at[0, :nh].set(fb1)
    fw2k = jnp.zeros((128, 128), jnp.float32).at[:nh, :num_classes].set(fw2.T)
    fb2k = jnp.zeros((1, 128), jnp.float32).at[0, :num_classes].set(fb2)

    return (w1k.astype(jnp.bfloat16), b1k,
            w2k.astype(jnp.bfloat16), b2k,
            fw1k.astype(jnp.bfloat16), fb1k,
            fw2k.astype(jnp.bfloat16), fb2k)


# ----------------------------------------------------------------------------
# Forward pass: one fused pallas_call, batch-blocked "parallel" grid
# ----------------------------------------------------------------------------
def _pick_batch_block(B):
    for cand in (16, 8):
        if B > cand and B % cand == 0:
            return cand
    return B


@functools.partial(jax.jit, static_argnums=(2,))
def cnn_forward(x, kparams, num_classes):
    w1k, b1k, w2k, b2k, fw1k, fb1k, fw2k, fb2k = kparams
    B = x.shape[0]
    p1 = _build_stage1_patches(x)                         # [B, 256, 16] bf16
    bb = _pick_batch_block(B)

    def full_spec(arr):
        assert arr.ndim == 2
        return pl.BlockSpec(arr.shape, lambda b: (0, 0))

    out = pl.pallas_call(
        fused_cnn_kernel,
        out_shape=jax.ShapeDtypeStruct((B, 128), jnp.float32),
        grid=(B // bb,),
        in_specs=[
            pl.BlockSpec((bb, 256, 16), lambda b: (b, 0, 0)),
            full_spec(w1k), full_spec(b1k),
            full_spec(w2k), full_spec(b2k),
            full_spec(fw1k), full_spec(fb1k),
            full_spec(fw2k), full_spec(fb2k),
        ],
        out_specs=pl.BlockSpec((bb, 128), lambda b: (b, 0)),
        compiler_params=pltpu.CompilerParams(
            dimension_semantics=("parallel",)),
    )(p1, w1k, b1k, w2k, b2k, fw1k, fb1k, fw2k, fb2k)
    return out[:, :num_classes]


# ----------------------------------------------------------------------------
# Pure-JAX f32 reference reproducing the PyTorch module (NCHW)
# ----------------------------------------------------------------------------
def torch_ref_forward(x, tp):
    w1, b1, w2, b2, fw1, fb1, fw2, fb2 = tp

    def conv(x, w, b):
        y = jax.lax.conv_general_dilated(
            x, w, (1, 1), ((1, 1), (1, 1)),
            dimension_numbers=("NCHW", "OIHW", "NCHW"))
        return y + b[None, :, None, None]

    def pool(x):
        return jax.lax.reduce_window(x, -jnp.inf, jax.lax.max,
                                     (1, 1, 2, 2), (1, 1, 2, 2), "VALID")

    y = pool(jnp.maximum(conv(x, w1, b1), 0.0))
    y = pool(jnp.maximum(conv(y, w2, b2), 0.0))
    flat = y.reshape(y.shape[0], -1)
    h = jnp.maximum(flat @ fw1.T + fb1, 0.0)
    return h @ fw2.T + fb2


if __name__ == "__main__":
    num_classes = 10
    key = jax.random.PRNGKey(0)
    kx, kp = jax.random.split(key)

    # Spatial size must be 32x32 so that 32*8*8 matches the fc1 input dim.
    x = jax.random.normal(kx, (2, 1, 32, 32), jnp.float32)

    torch_params = init_torch_params(kp, num_classes)
    kernel_params = to_kernel_params(torch_params, num_classes)

    out = cnn_forward(x, kernel_params, num_classes)
    out = jax.block_until_ready(out)

    ref = torch_ref_forward(x, torch_params)
    assert out.shape == (2, num_classes), out.shape
    # bf16 matmuls with f32 accumulation vs. a pure-f32 reference.
    max_err = float(jnp.max(jnp.abs(out - ref)))
    assert jnp.allclose(out, ref, atol=3e-2, rtol=3e-2), max_err

    print("KERNEL_OK")
</pallas_src>

<mosaic_0001>
module attributes {stable_mosaic.version = 11 : i64} {
  func.func @fused_cnn_kernel(%arg0: i32, %arg1: memref<2x256x16xbf16, #tpu.memory_space<vmem>>, %arg2: memref<16x64xbf16, #tpu.memory_space<vmem>>, %arg3: memref<1x64xf32, #tpu.memory_space<vmem>>, %arg4: memref<256x128xbf16, #tpu.memory_space<vmem>>, %arg5: memref<1x128xf32, #tpu.memory_space<vmem>>, %arg6: memref<2048x128xbf16, #tpu.memory_space<vmem>>, %arg7: memref<1x128xf32, #tpu.memory_space<vmem>>, %arg8: memref<128x128xbf16, #tpu.memory_space<vmem>>, %arg9: memref<1x128xf32, #tpu.memory_space<vmem>>, %arg10: memref<2x128xf32, #tpu.memory_space<vmem>>) attributes {dimension_semantics = [#tpu.dimension_semantics<parallel>], iteration_bounds = array<i64: 1>, scalar_prefetch = 0 : i64, scratch_operands = 0 : i64, tpu.core_type = #tpu.core_type<tc>, window_params = [{transform_indices = @transform_0, window_bounds = array<i64: 2, 256, 16>}, {pipeline_mode = #tpu.pipeline_mode<synchronous>, transform_indices = @transform_1, window_bounds = array<i64: 16, 64>}, {pipeline_mode = #tpu.pipeline_mode<synchronous>, transform_indices = @transform_2, window_bounds = array<i64: 1, 64>}, {pipeline_mode = #tpu.pipeline_mode<synchronous>, transform_indices = @transform_3, window_bounds = array<i64: 256, 128>}, {pipeline_mode = #tpu.pipeline_mode<synchronous>, transform_indices = @transform_4, window_bounds = array<i64: 1, 128>}, {pipeline_mode = #tpu.pipeline_mode<synchronous>, transform_indices = @transform_5, window_bounds = array<i64: 2048, 128>}, {pipeline_mode = #tpu.pipeline_mode<synchronous>, transform_indices = @transform_6, window_bounds = array<i64: 1, 128>}, {pipeline_mode = #tpu.pipeline_mode<synchronous>, transform_indices = @transform_7, window_bounds = array<i64: 128, 128>}, {pipeline_mode = #tpu.pipeline_mode<synchronous>, transform_indices = @transform_8, window_bounds = array<i64: 1, 128>}, {transform_indices = @transform_9, window_bounds = array<i64: 2, 128>}]} {
    %c0 = arith.constant 0 : index
    %c0_0 = arith.constant 0 : index
    %c0_1 = arith.constant 0 : index
    %0 = vector.load %arg1[%c0, %c0_0, %c0_1] : memref<2x256x16xbf16, #tpu.memory_space<vmem>>, vector<2x256x16xbf16>
    %1 = vector.shape_cast %0 : vector<2x256x16xbf16> to vector<512x16xbf16>
    %c0_2 = arith.constant 0 : index
    %c0_3 = arith.constant 0 : index
    %2 = vector.load %arg2[%c0_2, %c0_3] : memref<16x64xbf16, #tpu.memory_space<vmem>>, vector<16x64xbf16>
    %cst = arith.constant dense<0.000000e+00> : vector<512x64xf32>
    %3 = tpu.matmul %1, %2, %cst {dimension_numbers = #tpu.dot_dimension_numbers<[1], [0], [0], [1], [0, 0, 1, 1], [], []>} : vector<512x16xbf16>, vector<16x64xbf16>, vector<512x64xf32> -> vector<512x64xf32>
    %c0_4 = arith.constant 0 : index
    %c0_5 = arith.constant 0 : index
    %4 = vector.load %arg3[%c0_4, %c0_5] : memref<1x64xf32, #tpu.memory_space<vmem>>, vector<1x64xf32>
    %5 = vector.broadcast %4 : vector<1x64xf32> to vector<512x64xf32>
    %6 = arith.addf %3, %5 : vector<512x64xf32>
    %cst_6 = arith.constant 0.000000e+00 : f32
    %7 = vector.broadcast %cst_6 : f32 to vector<512x64xf32>
    %8 = arith.maximumf %6, %7 : vector<512x64xf32>
    %9 = vector.extract_strided_slice %8 {offsets = [0, 0], sizes = [512, 16], strides = [1, 1]} : vector<512x64xf32> to vector<512x16xf32>
    %10 = vector.extract_strided_slice %8 {offsets = [0, 16], sizes = [512, 16], strides = [1, 1]} : vector<512x64xf32> to vector<512x16xf32>
    %11 = arith.maximumf %9, %10 : vector<512x16xf32>
    %12 = vector.extract_strided_slice %8 {offsets = [0, 32], sizes = [512, 16], strides = [1, 1]} : vector<512x64xf32> to vector<512x16xf32>
    %13 = vector.extract_strided_slice %8 {offsets = [0, 48], sizes = [512, 16], strides = [1, 1]} : vector<512x64xf32> to vector<512x16xf32>
    %14 = arith.maximumf %12, %13 : vector<512x16xf32>
    %15 = arith.maximumf %11, %14 : vector<512x16xf32>
    %16 = vector.shape_cast %15 : vector<512x16xf32> to vector<2x16x2x8x16xf32>
    %17 = vector.extract_strided_slice %16 {offsets = [0, 0, 0, 0, 0], sizes = [2, 1, 1, 8, 16], strides = [1, 1, 1, 1, 1]} : vector<2x16x2x8x16xf32> to vector<2x1x1x8x16xf32>
    %18 = vector.shape_cast %17 : vector<2x1x1x8x16xf32> to vector<2x8x16xf32>
    %19 = vector.extract_strided_slice %16 {offsets = [0, 1, 0, 0, 0], sizes = [2, 1, 1, 8, 16], strides = [1, 1, 1, 1, 1]} : vector<2x16x2x8x16xf32> to vector<2x1x1x8x16xf32>
    %20 = vector.shape_cast %19 : vector<2x1x1x8x16xf32> to vector<2x8x16xf32>
    %21 = vector.extract_strided_slice %16 {offsets = [0, 2, 0, 0, 0], sizes = [2, 1, 1, 8, 16], strides = [1, 1, 1, 1, 1]} : vector<2x16x2x8x16xf32> to vector<2x1x1x8x16xf32>
    %22 = vector.shape_cast %21 : vector<2x1x1x8x16xf32> to vector<2x8x16xf32>
    %23 = vector.extract_strided_slice %16 {offsets = [0, 3, 0, 0, 0], sizes = [2, 1, 1, 8, 16], strides = [1, 1, 1, 1, 1]} : vector<2x16x2x8x16xf32> to vector<2x1x1x8x16xf32>
    %24 = vector.shape_cast %23 : vector<2x1x1x8x16xf32> to vector<2x8x16xf32>
    %25 = vector.extract_strided_slice %16 {offsets = [0, 4, 0, 0, 0], sizes = [2, 1, 1, 8, 16], strides = [1, 1, 1, 1, 1]} : vector<2x16x2x8x16xf32> to vector<2x1x1x8x16xf32>
    %26 = vector.shape_cast %25 : vector<2x1x1x8x16xf32> to vector<2x8x16xf32>
    %27 = vector.extract_strided_slice %16 {offsets = [0, 5, 0, 0, 0], sizes = [2, 1, 1, 8, 16], strides = [1, 1, 1, 1, 1]} : vector<2x16x2x8x16xf32> to vector<2x1x1x8x16xf32>
    %28 = vector.shape_cast %27 : vector<2x1x1x8x16xf32> to vector<2x8x16xf32>
    %29 = vector.extract_strided_slice %16 {offsets = [0, 6, 0, 0, 0], sizes = [2, 1, 1, 8, 16], strides = [1, 1, 1, 1, 1]} : vector<2x16x2x8x16xf32> to vector<2x1x1x8x16xf32>
    %30 = vector.shape_cast %29 : vector<2x1x1x8x16xf32> to vector<2x8x16xf32>
    %31 = vector.extract_strided_slice %16 {offsets = [0, 7, 0, 0, 0], sizes = [2, 1, 1, 8, 16], strides = [1, 1, 1, 1, 1]} : vector<2x16x2x8x16xf32> to vector<2x1x1x8x16xf32>
    %32 = vector.shape_cast %31 : vector<2x1x1x8x16xf32> to vector<2x8x16xf32>
    %33 = vector.extract_strided_slice %16 {offsets = [0, 8, 0, 0, 0], sizes = [2, 1, 1, 8, 16], strides = [1, 1, 1, 1, 1]} : vector<2x16x2x8x16xf32> to vector<2x1x1x8x16xf32>
    %34 = vector.shape_cast %33 : vector<2x1x1x8x16xf32> to vector<2x8x16xf32>
    %35 = vector.extract_strided_slice %16 {offsets = [0, 9, 0, 0, 0], sizes = [2, 1, 1, 8, 16], strides = [1, 1, 1, 1, 1]} : vector<2x16x2x8x16xf32> to vector<2x1x1x8x16xf32>
    %36 = vector.shape_cast %35 : vector<2x1x1x8x16xf32> to vector<2x8x16xf32>
    %37 = vector.extract_strided_slice %16 {offsets = [0, 10, 0, 0, 0], sizes = [2, 1, 1, 8, 16], strides = [1, 1, 1, 1, 1]} : vector<2x16x2x8x16xf32> to vector<2x1x1x8x16xf32>
    %38 = vector.shape_cast %37 : vector<2x1x1x8x16xf32> to vector<2x8x16xf32>
    %39 = vector.extract_strided_slice %16 {offsets = [0, 11, 0, 0, 0], sizes = [2, 1, 1, 8, 16], strides = [1, 1, 1, 1, 1]} : vector<2x16x2x8x16xf32> to vector<2x1x1x8x16xf32>
    %40 = vector.shape_cast %39 : vector<2x1x1x8x16xf32> to vector<2x8x16xf32>
    %41 = vector.extract_strided_slice %16 {offsets = [0, 12, 0, 0, 0], sizes = [2, 1, 1, 8, 16], strides = [1, 1, 1, 1, 1]} : vector<2x16x2x8x16xf32> to vector<2x1x1x8x16xf32>
    %42 = vector.shape_cast %41 : vector<2x1x1x8x16xf32> to vector<2x8x16xf32>
    %43 = vector.extract_strided_slice %16 {offsets = [0, 13, 0, 0, 0], sizes = [2, 1, 1, 8, 16], strides = [1, 1, 1, 1, 1]} : vector<2x16x2x8x16xf32> to vector<2x1x1x8x16xf32>
    %44 = vector.shape_cast %43 : vector<2x1x1x8x16xf32> to vector<2x8x16xf32>
    %45 = vector.extract_strided_slice %16 {offsets = [0, 14, 0, 0, 0], sizes = [2, 1, 1, 8, 16], strides = [1, 1, 1, 1, 1]} : vector<2x16x2x8x16xf32> to vector<2x1x1x8x16xf32>
    %46 = vector.shape_cast %45 : vector<2x1x1x8x16xf32> to vector<2x8x16xf32>
    %47 = vector.extract_strided_slice %16 {offsets = [0, 15, 0, 0, 0], sizes = [2, 1, 1, 8, 16], strides = [1, 1, 1, 1, 1]} : vector<2x16x2x8x16xf32> to vector<2x1x1x8x16xf32>
    %48 = vector.shape_cast %47 : vector<2x1x1x8x16xf32> to vector<2x8x16xf32>
    %49 = tpu.concatenate %18, %20, %22, %24, %26, %28, %30, %32, %34, %36, %38, %40, %42, %44, %46, %48 in 2 : vector<2x8x16xf32>, vector<2x8x16xf32>, vector<2x8x16xf32>, vector<2x8x16xf32>, vector<2x8x16xf32>, vector<2x8x16xf32>, vector<2x8x16xf32>, vector<2x8x16xf32>, vector<2x8x16xf32>, vector<2x8x16xf32>, vector<2x8x16xf32>, vector<2x8x16xf32>, vector<2x8x16xf32>, vector<2x8x16xf32>, vector<2x8x16xf32>, vector<2x8x16xf32> -> vector<2x8x256xf32>
    %50 = vector.extract_strided_slice %16 {offsets = [0, 0, 1, 0, 0], sizes = [2, 1, 1, 8, 16], strides = [1, 1, 1, 1, 1]} : vector<2x16x2x8x16xf32> to vector<2x1x1x8x16xf32>
    %51 = vector.shape_cast %50 : vector<2x1x1x8x16xf32> to vector<2x8x16xf32>
    %52 = vector.extract_strided_slice %16 {offsets = [0, 1, 1, 0, 0], sizes = [2, 1, 1, 8, 16], strides = [1, 1, 1, 1, 1]} : vector<2x16x2x8x16xf32> to vector<2x1x1x8x16xf32>
    %53 = vector.shape_cast %52 : vector<2x1x1x8x16xf32> to vector<2x8x16xf32>
    %54 = vector.extract_strided_slice %16 {offsets = [0, 2, 1, 0, 0], sizes = [2, 1, 1, 8, 16], strides = [1, 1, 1, 1, 1]} : vector<2x16x2x8x16xf32> to vector<2x1x1x8x16xf32>
    %55 = vector.shape_cast %54 : vector<2x1x1x8x16xf32> to vector<2x8x16xf32>
    %56 = vector.extract_strided_slice %16 {offsets = [0, 3, 1, 0, 0], sizes = [2, 1, 1, 8, 16], strides = [1, 1, 1, 1, 1]} : vector<2x16x2x8x16xf32> to vector<2x1x1x8x16xf32>
    %57 = vector.shape_cast %56 : vector<2x1x1x8x16xf32> to vector<2x8x16xf32>
    %58 = vector.extract_strided_slice %16 {offsets = [0, 4, 1, 0, 0], sizes = [2, 1, 1, 8, 16], strides = [1, 1, 1, 1, 1]} : vector<2x16x2x8x16xf32> to vector<2x1x1x8x16xf32>
    %59 = vector.shape_cast %58 : vector<2x1x1x8x16xf32> to vector<2x8x16xf32>
    %60 = vector.extract_strided_slice %16 {offsets = [0, 5, 1, 0, 0], sizes = [2, 1, 1, 8, 16], strides = [1, 1, 1, 1, 1]} : vector<2x16x2x8x16xf32> to vector<2x1x1x8x16xf32>
    %61 = vector.shape_cast %60 : vector<2x1x1x8x16xf32> to vector<2x8x16xf32>
    %62 = vector.extract_strided_slice %16 {offsets = [0, 6, 1, 0, 0], sizes = [2, 1, 1, 8, 16], strides = [1, 1, 1, 1, 1]} : vector<2x16x2x8x16xf32> to vector<2x1x1x8x16xf32>
    %63 = vector.shape_cast %62 : vector<2x1x1x8x16xf32> to vector<2x8x16xf32>
    %64 = vector.extract_strided_slice %16 {offsets = [0, 7, 1, 0, 0], sizes = [2, 1, 1, 8, 16], strides = [1, 1, 1, 1, 1]} : vector<2x16x2x8x16xf32> to vector<2x1x1x8x16xf32>
    %65 = vector.shape_cast %64 : vector<2x1x1x8x16xf32> to vector<2x8x16xf32>
    %66 = vector.extract_strided_slice %16 {offsets = [0, 8, 1, 0, 0], sizes = [2, 1, 1, 8, 16], strides = [1, 1, 1, 1, 1]} : vector<2x16x2x8x16xf32> to vector<2x1x1x8x16xf32>
    %67 = vector.shape_cast %66 : vector<2x1x1x8x16xf32> to vector<2x8x16xf32>
    %68 = vector.extract_strided_slice %16 {offsets = [0, 9, 1, 0, 0], sizes = [2, 1, 1, 8, 16], strides = [1, 1, 1, 1, 1]} : vector<2x16x2x8x16xf32> to vector<2x1x1x8x16xf32>
    %69 = vector.shape_cast %68 : vector<2x1x1x8x16xf32> to vector<2x8x16xf32>
    %70 = vector.extract_strided_slice %16 {offsets = [0, 10, 1, 0, 0], sizes = [2, 1, 1, 8, 16], strides = [1, 1, 1, 1, 1]} : vector<2x16x2x8x16xf32> to vector<2x1x1x8x16xf32>
    %71 = vector.shape_cast %70 : vector<2x1x1x8x16xf32> to vector<2x8x16xf32>
    %72 = vector.extract_strided_slice %16 {offsets = [0, 11, 1, 0, 0], sizes = [2, 1, 1, 8, 16], strides = [1, 1, 1, 1, 1]} : vector<2x16x2x8x16xf32> to vector<2x1x1x8x16xf32>
    %73 = vector.shape_cast %72 : vector<2x1x1x8x16xf32> to vector<2x8x16xf32>
    %74 = vector.extract_strided_slice %16 {offsets = [0, 12, 1, 0, 0], sizes = [2, 1, 1, 8, 16], strides = [1, 1, 1, 1, 1]} : vector<2x16x2x8x16xf32> to vector<2x1x1x8x16xf32>
    %75 = vector.shape_cast %74 : vector<2x1x1x8x16xf32> to vector<2x8x16xf32>
    %76 = vector.extract_strided_slice %16 {offsets = [0, 13, 1, 0, 0], sizes = [2, 1, 1, 8, 16], strides = [1, 1, 1, 1, 1]} : vector<2x16x2x8x16xf32> to vector<2x1x1x8x16xf32>
    %77 = vector.shape_cast %76 : vector<2x1x1x8x16xf32> to vector<2x8x16xf32>
    %78 = vector.extract_strided_slice %16 {offsets = [0, 14, 1, 0, 0], sizes = [2, 1, 1, 8, 16], strides = [1, 1, 1, 1, 1]} : vector<2x16x2x8x16xf32> to vector<2x1x1x8x16xf32>
    %79 = vector.shape_cast %78 : vector<2x1x1x8x16xf32> to vector<2x8x16xf32>
    %80 = vector.extract_strided_slice %16 {offsets = [0, 15, 1, 0, 0], sizes = [2, 1, 1, 8, 16], strides = [1, 1, 1, 1, 1]} : vector<2x16x2x8x16xf32> to vector<2x1x1x8x16xf32>
    %81 = vector.shape_cast %80 : vector<2x1x1x8x16xf32> to vector<2x8x16xf32>
    %82 = tpu.concatenate %51, %53, %55, %57, %59, %61, %63, %65, %67, %69, %71, %73, %75, %77, %79, %81 in 2 : vector<2x8x16xf32>, vector<2x8x16xf32>, vector<2x8x16xf32>, vector<2x8x16xf32>, vector<2x8x16xf32>, vector<2x8x16xf32>, vector<2x8x16xf32>, vector<2x8x16xf32>, vector<2x8x16xf32>, vector<2x8x16xf32>, vector<2x8x16xf32>, vector<2x8x16xf32>, vector<2x8x16xf32>, vector<2x8x16xf32>, vector<2x8x16xf32>, vector<2x8x16xf32> -> vector<2x8x256xf32>
    %83 = tpu.iota {dimensions = array<i32: 1>} : vector<2x8x256xi32>
    %c0_i32 = arith.constant 0 : i32
    %84 = vector.broadcast %c0_i32 : i32 to vector<2x8x256xi32>
    %85 = arith.cmpi eq, %83, %84 : vector<2x8x256xi32>
    %c1_i32 = arith.constant 1 : i32
    %86 = tpu.dynamic_rotate %82 by %c1_i32 dim 1 : vector<2x8x256xf32>, i32 -> vector<2x8x256xf32>
    %cst_7 = arith.constant 0.000000e+00 : f32
    %87 = vector.broadcast %cst_7 : f32 to vector<2x8x256xf32>
    %88 = arith.select %85, %87, %86 : vector<2x8x256xi1>, vector<2x8x256xf32>
    %c7_i32 = arith.constant 7 : i32
    %89 = vector.broadcast %c7_i32 : i32 to vector<2x8x256xi32>
    %90 = arith.cmpi eq, %83, %89 : vector<2x8x256xi32>
    %c7_i32_8 = arith.constant 7 : i32
    %91 = tpu.dynamic_rotate %49 by %c7_i32_8 dim 1 : vector<2x8x256xf32>, i32 -> vector<2x8x256xf32>
    %cst_9 = arith.constant 0.000000e+00 : f32
    %92 = vector.broadcast %cst_9 : f32 to vector<2x8x256xf32>
    %93 = arith.select %90, %92, %91 : vector<2x8x256xi1>, vector<2x8x256xf32>
    %cst_10 = arith.constant 0.000000e+00 : f32
    %94 = vector.broadcast %cst_10 : f32 to vector<2x8x16xf32>
    %95 = tpu.concatenate %94, %88, %94 in 2 : vector<2x8x16xf32>, vector<2x8x256xf32>, vector<2x8x16xf32> -> vector<2x8x288xf32>
    %96 = tpu.concatenate %94, %49, %94 in 2 : vector<2x8x16xf32>, vector<2x8x256xf32>, vector<2x8x16xf32> -> vector<2x8x288xf32>
    %97 = tpu.concatenate %94, %82, %94 in 2 : vector<2x8x16xf32>, vector<2x8x256xf32>, vector<2x8x16xf32> -> vector<2x8x288xf32>
    %98 = tpu.concatenate %94, %93, %94 in 2 : vector<2x8x16xf32>, vector<2x8x256xf32>, vector<2x8x16xf32> -> vector<2x8x288xf32>
    %99 = vector.extract_strided_slice %95 {offsets = [0, 0, 0], sizes = [2, 8, 64], strides = [1, 1, 1]} : vector<2x8x288xf32> to vector<2x8x64xf32>
    %100 = vector.extract_strided_slice %96 {offsets = [0, 0, 0], sizes = [2, 8, 64], strides = [1, 1, 1]} : vector<2x8x288xf32> to vector<2x8x64xf32>
    %101 = vector.extract_strided_slice %97 {offsets = [0, 0, 0], sizes = [2, 8, 64], strides = [1, 1, 1]} : vector<2x8x288xf32> to vector<2x8x64xf32>
    %102 = vector.extract_strided_slice %98 {offsets = [0, 0, 0], sizes = [2, 8, 64], strides = [1, 1, 1]} : vector<2x8x288xf32> to vector<2x8x64xf32>
    %103 = tpu.concatenate %99, %100, %101, %102 in 2 : vector<2x8x64xf32>, vector<2x8x64xf32>, vector<2x8x64xf32>, vector<2x8x64xf32> -> vector<2x8x256xf32>
    %104 = vector.extract_strided_slice %95 {offsets = [0, 0, 32], sizes = [2, 8, 64], strides = [1, 1, 1]} : vector<2x8x288xf32> to vector<2x8x64xf32>
    %105 = vector.extract_strided_slice %96 {offsets = [0, 0, 32], sizes = [2, 8, 64], strides = [1, 1, 1]} : vector<2x8x288xf32> to vector<2x8x64xf32>
    %106 = vector.extract_strided_slice %97 {offsets = [0, 0, 32], sizes = [2, 8, 64], strides = [1, 1, 1]} : vector<2x8x288xf32> to vector<2x8x64xf32>
    %107 = vector.extract_strided_slice %98 {offsets = [0, 0, 32], sizes = [2, 8, 64], strides = [1, 1, 1]} : vector<2x8x288xf32> to vector<2x8x64xf32>
    %108 = tpu.concatenate %104, %105, %106, %107 in 2 : vector<2x8x64xf32>, vector<2x8x64xf32>, vector<2x8x64xf32>, vector<2x8x64xf32> -> vector<2x8x256xf32>
    %109 = vector.extract_strided_slice %95 {offsets = [0, 0, 64], sizes = [2, 8, 64], strides = [1, 1, 1]} : vector<2x8x288xf32> to vector<2x8x64xf32>
    %110 = vector.extract_strided_slice %96 {offsets = [0, 0, 64], sizes = [2, 8, 64], strides = [1, 1, 1]} : vector<2x8x288xf32> to vector<2x8x64xf32>
    %111 = vector.extract_strided_slice %97 {offsets = [0, 0, 64], sizes = [2, 8, 64], strides = [1, 1, 1]} : vector<2x8x288xf32> to vector<2x8x64xf32>
    %112 = vector.extract_strided_slice %98 {offsets = [0, 0, 64], sizes = [2, 8, 64], strides = [1, 1, 1]} : vector<2x8x288xf32> to vector<2x8x64xf32>
    %113 = tpu.concatenate %109, %110, %111, %112 in 2 : vector<2x8x64xf32>, vector<2x8x64xf32>, vector<2x8x64xf32>, vector<2x8x64xf32> -> vector<2x8x256xf32>
    %114 = vector.extract_strided_slice %95 {offsets = [0, 0, 96], sizes = [2, 8, 64], strides = [1, 1, 1]} : vector<2x8x288xf32> to vector<2x8x64xf32>
    %115 = vector.extract_strided_slice %96 {offsets = [0, 0, 96], sizes = [2, 8, 64], strides = [1, 1, 1]} : vector<2x8x288xf32> to vector<2x8x64xf32>
    %116 = vector.extract_strided_slice %97 {offsets = [0, 0, 96], sizes = [2, 8, 64], strides = [1, 1, 1]} : vector<2x8x288xf32> to vector<2x8x64xf32>
    %117 = vector.extract_strided_slice %98 {offsets = [0, 0, 96], sizes = [2, 8, 64], strides = [1, 1, 1]} : vector<2x8x288xf32> to vector<2x8x64xf32>
    %118 = tpu.concatenate %114, %115, %116, %117 in 2 : vector<2x8x64xf32>, vector<2x8x64xf32>, vector<2x8x64xf32>, vector<2x8x64xf32> -> vector<2x8x256xf32>
    %119 = vector.extract_strided_slice %95 {offsets = [0, 0, 128], sizes = [2, 8, 64], strides = [1, 1, 1]} : vector<2x8x288xf32> to vector<2x8x64xf32>
    %120 = vector.extract_strided_slice %96 {offsets = [0, 0, 128], sizes = [2, 8, 64], strides = [1, 1, 1]} : vector<2x8x288xf32> to vector<2x8x64xf32>
    %121 = vector.extract_strided_slice %97 {offsets = [0, 0, 128], sizes = [2, 8, 64], strides = [1, 1, 1]} : vector<2x8x288xf32> to vector<2x8x64xf32>
    %122 = vector.extract_strided_slice %98 {offsets = [0, 0, 128], sizes = [2, 8, 64], strides = [1, 1, 1]} : vector<2x8x288xf32> to vector<2x8x64xf32>
    %123 = tpu.concatenate %119, %120, %121, %122 in 2 : vector<2x8x64xf32>, vector<2x8x64xf32>, vector<2x8x64xf32>, vector<2x8x64xf32> -> vector<2x8x256xf32>
    %124 = vector.extract_strided_slice %95 {offsets = [0, 0, 160], sizes = [2, 8, 64], strides = [1, 1, 1]} : vector<2x8x288xf32> to vector<2x8x64xf32>
    %125 = vector.extract_strided_slice %96 {offsets = [0, 0, 160], sizes = [2, 8, 64], strides = [1, 1, 1]} : vector<2x8x288xf32> to vector<2x8x64xf32>
    %126 = vector.extract_strided_slice %97 {offsets = [0, 0, 160], sizes = [2, 8, 64], strides = [1, 1, 1]} : vector<2x8x288xf32> to vector<2x8x64xf32>
    %127 = vector.extract_strided_slice %98 {offsets = [0, 0, 160], sizes = [2, 8, 64], strides = [1, 1, 1]} : vector<2x8x288xf32> to vector<2x8x64xf32>
    %128 = tpu.concatenate %124, %125, %126, %127 in 2 : vector<2x8x64xf32>, vector<2x8x64xf32>, vector<2x8x64xf32>, vector<2x8x64xf32> -> vector<2x8x256xf32>
    %129 = vector.extract_strided_slice %95 {offsets = [0, 0, 192], sizes = [2, 8, 64], strides = [1, 1, 1]} : vector<2x8x288xf32> to vector<2x8x64xf32>
    %130 = vector.extract_strided_slice %96 {offsets = [0, 0, 192], sizes = [2, 8, 64], strides = [1, 1, 1]} : vector<2x8x288xf32> to vector<2x8x64xf32>
    %131 = vector.extract_strided_slice %97 {offsets = [0, 0, 192], sizes = [2, 8, 64], strides = [1, 1, 1]} : vector<2x8x288xf32> to vector<2x8x64xf32>
    %132 = vector.extract_strided_slice %98 {offsets = [0, 0, 192], sizes = [2, 8, 64], strides = [1, 1, 1]} : vector<2x8x288xf32> to vector<2x8x64xf32>
    %133 = tpu.concatenate %129, %130, %131, %132 in 2 : vector<2x8x64xf32>, vector<2x8x64xf32>, vector<2x8x64xf32>, vector<2x8x64xf32> -> vector<2x8x256xf32>
    %134 = vector.extract_strided_slice %95 {offsets = [0, 0, 224], sizes = [2, 8, 64], strides = [1, 1, 1]} : vector<2x8x288xf32> to vector<2x8x64xf32>
    %135 = vector.extract_strided_slice %96 {offsets = [0, 0, 224], sizes = [2, 8, 64], strides = [1, 1, 1]} : vector<2x8x288xf32> to vector<2x8x64xf32>
    %136 = vector.extract_strided_slice %97 {offsets = [0, 0, 224], sizes = [2, 8, 64], strides = [1, 1, 1]} : vector<2x8x288xf32> to vector<2x8x64xf32>
    %137 = vector.extract_strided_slice %98 {offsets = [0, 0, 224], sizes = [2, 8, 64], strides = [1, 1, 1]} : vector<2x8x288xf32> to vector<2x8x64xf32>
    %138 = tpu.concatenate %134, %135, %136, %137 in 2 : vector<2x8x64xf32>, vector<2x8x64xf32>, vector<2x8x64xf32>, vector<2x8x64xf32> -> vector<2x8x256xf32>
    %139 = vector.shape_cast %103 : vector<2x8x256xf32> to vector<2x1x8x256xf32>
    %140 = vector.shape_cast %108 : vector<2x8x256xf32> to vector<2x1x8x256xf32>
    %141 = vector.shape_cast %113 : vector<2x8x256xf32> to vector<2x1x8x256xf32>
    %142 = vector.shape_cast %118 : vector<2x8x256xf32> to vector<2x1x8x256xf32>
    %143 = vector.shape_cast %123 : vector<2x8x256xf32> to vector<2x1x8x256xf32>
    %144 = vector.shape_cast %128 : vector<2x8x256xf32> to vector<2x1x8x256xf32>
    %145 = vector.shape_cast %133 : vector<2x8x256xf32> to vector<2x1x8x256xf32>
    %146 = vector.shape_cast %138 : vector<2x8x256xf32> to vector<2x1x8x256xf32>
    %147 = tpu.concatenate %139, %140, %141, %142, %143, %144, %145, %146 in 1 : vector<2x1x8x256xf32>, vector<2x1x8x256xf32>, vector<2x1x8x256xf32>, vector<2x1x8x256xf32>, vector<2x1x8x256xf32>, vector<2x1x8x256xf32>, vector<2x1x8x256xf32>, vector<2x1x8x256xf32> -> vector<2x8x8x256xf32>
    %148 = vector.shape_cast %147 : vector<2x8x8x256xf32> to vector<128x256xf32>
    %149 = arith.truncf %148 : vector<128x256xf32> to vector<128x256xbf16>
    %c0_11 = arith.constant 0 : index
    %c0_12 = arith.constant 0 : index
    %150 = vector.load %arg4[%c0_11, %c0_12] : memref<256x128xbf16, #tpu.memory_space<vmem>>, vector<256x128xbf16>
    %cst_13 = arith.constant dense<0.000000e+00> : vector<128x128xf32>
    %151 = tpu.matmul %149, %150, %cst_13 {dimension_numbers = #tpu.dot_dimension_numbers<[1], [0], [0], [1], [0, 0, 1, 1], [], []>} : vector<128x256xbf16>, vector<256x128xbf16>, vector<128x128xf32> -> vector<128x128xf32>
    %c0_14 = arith.constant 0 : index
    %c0_15 = arith.constant 0 : index
    %152 = vector.load %arg5[%c0_14, %c0_15] : memref<1x128xf32, #tpu.memory_space<vmem>>, vector<1x128xf32>
    %153 = vector.broadcast %152 : vector<1x128xf32> to vector<128x128xf32>
    %154 = arith.addf %151, %153 : vector<128x128xf32>
    %cst_16 = arith.constant 0.000000e+00 : f32
    %155 = vector.broadcast %cst_16 : f32 to vector<128x128xf32>
    %156 = arith.maximumf %154, %155 : vector<128x128xf32>
    %157 = vector.extract_strided_slice %156 {offsets = [0, 0], sizes = [128, 32], strides = [1, 1]} : vector<128x128xf32> to vector<128x32xf32>
    %158 = vector.extract_strided_slice %156 {offsets = [0, 32], sizes = [128, 32], strides = [1, 1]} : vector<128x128xf32> to vector<128x32xf32>
    %159 = arith.maximumf %157, %158 : vector<128x32xf32>
    %160 = vector.extract_strided_slice %156 {offsets = [0, 64], sizes = [128, 32], strides = [1, 1]} : vector<128x128xf32> to vector<128x32xf32>
    %161 = vector.extract_strided_slice %156 {offsets = [0, 96], sizes = [128, 32], strides = [1, 1]} : vector<128x128xf32> to vector<128x32xf32>
    %162 = arith.maximumf %160, %161 : vector<128x32xf32>
    %163 = arith.maximumf %159, %162 : vector<128x32xf32>
    %164 = arith.truncf %163 : vector<128x32xf32> to vector<128x32xbf16>
    %165 = vector.shape_cast %164 : vector<128x32xbf16> to vector<2x64x32xbf16>
    %166 = vector.extract_strided_slice %165 {offsets = [0, 0, 0], sizes = [2, 1, 32], strides = [1, 1, 1]} : vector<2x64x32xbf16> to vector<2x1x32xbf16>
    %167 = vector.shape_cast %166 : vector<2x1x32xbf16> to vector<2x32xbf16>
    %168 = vector.extract_strided_slice %165 {offsets = [0, 1, 0], sizes = [2, 1, 32], strides = [1, 1, 1]} : vector<2x64x32xbf16> to vector<2x1x32xbf16>
    %169 = vector.shape_cast %168 : vector<2x1x32xbf16> to vector<2x32xbf16>
    %170 = vector.extract_strided_slice %165 {offsets = [0, 2, 0], sizes = [2, 1, 32], strides = [1, 1, 1]} : vector<2x64x32xbf16> to vector<2x1x32xbf16>
    %171 = vector.shape_cast %170 : vector<2x1x32xbf16> to vector<2x32xbf16>
    %172 = vector.extract_strided_slice %165 {offsets = [0, 3, 0], sizes = [2, 1, 32], strides = [1, 1, 1]} : vector<2x64x32xbf16> to vector<2x1x32xbf16>
    %173 = vector.shape_cast %172 : vector<2x1x32xbf16> to vector<2x32xbf16>
    %174 = vector.extract_strided_slice %165 {offsets = [0, 4, 0], sizes = [2, 1, 32], strides = [1, 1, 1]} : vector<2x64x32xbf16> to vector<2x1x32xbf16>
    %175 = vector.shape_cast %174 : vector<2x1x32xbf16> to vector<2x32xbf16>
    %176 = vector.extract_strided_slice %165 {offsets = [0, 5, 0], sizes = [2, 1, 32], strides = [1, 1, 1]} : vector<2x64x32xbf16> to vector<2x1x32xbf16>
    %177 = vector.shape_cast %176 : vector<2x1x32xbf16> to vector<2x32xbf16>
    %178 = vector.extract_strided_slice %165 {offsets = [0, 6, 0], sizes = [2, 1, 32], strides = [1, 1, 1]} : vector<2x64x32xbf16> to vector<2x1x32xbf16>
    %179 = vector.shape_cast %178 : vector<2x1x32xbf16> to vector<2x32xbf16>
    %180 = vector.extract_strided_slice %165 {offsets = [0, 7, 0], sizes = [2, 1, 32], strides = [1, 1, 1]} : vector<2x64x32xbf16> to vector<2x1x32xbf16>
    %181 = vector.shape_cast %180 : vector<2x1x32xbf16> to vector<2x32xbf16>
    %182 = vector.extract_strided_slice %165 {offsets = [0, 8, 0], sizes = [2, 1, 32], strides = [1, 1, 1]} : vector<2x64x32xbf16> to vector<2x1x32xbf16>
    %183 = vector.shape_cast %182 : vector<2x1x32xbf16> to vector<2x32xbf16>
    %184 = vector.extract_strided_slice %165 {offsets = [0, 9, 0], sizes = [2, 1, 32], strides = [1, 1, 1]} : vector<2x64x32xbf16> to vector<2x1x32xbf16>
    %185 = vector.shape_cast %184 : vector<2x1x32xbf16> to vector<2x32xbf16>
    %186 = vector.extract_strided_slice %165 {offsets = [0, 10, 0], sizes = [2, 1, 32], strides = [1, 1, 1]} : vector<2x64x32xbf16> to vector<2x1x32xbf16>
    %187 = vector.shape_cast %186 : vector<2x1x32xbf16> to vector<2x32xbf16>
    %188 = vector.extract_strided_slice %165 {offsets = [0, 11, 0], sizes = [2, 1, 32], strides = [1, 1, 1]} : vector<2x64x32xbf16> to vector<2x1x32xbf16>
    %189 = vector.shape_cast %188 : vector<2x1x32xbf16> to vector<2x32xbf16>
    %190 = vector.extract_strided_slice %165 {offsets = [0, 12, 0], sizes = [2, 1, 32], strides = [1, 1, 1]} : vector<2x64x32xbf16> to vector<2x1x32xbf16>
    %191 = vector.shape_cast %190 : vector<2x1x32xbf16> to vector<2x32xbf16>
    %192 = vector.extract_strided_slice %165 {offsets = [0, 13, 0], sizes = [2, 1, 32], strides = [1, 1, 1]} : vector<2x64x32xbf16> to vector<2x1x32xbf16>
    %193 = vector.shape_cast %192 : vector<2x1x32xbf16> to vector<2x32xbf16>
    %194 = vector.extract_strided_slice %165 {offsets = [0, 14, 0], sizes = [2, 1, 32], strides = [1, 1, 1]} : vector<2x64x32xbf16> to vector<2x1x32xbf16>
    %195 = vector.shape_cast %194 : vector<2x1x32xbf16> to vector<2x32xbf16>
    %196 = vector.extract_strided_slice %165 {offsets = [0, 15, 0], sizes = [2, 1, 32], strides = [1, 1, 1]} : vector<2x64x32xbf16> to vector<2x1x32xbf16>
    %197 = vector.shape_cast %196 : vector<2x1x32xbf16> to vector<2x32xbf16>
    %198 = vector.extract_strided_slice %165 {offsets = [0, 16, 0], sizes = [2, 1, 32], strides = [1, 1, 1]} : vector<2x64x32xbf16> to vector<2x1x32xbf16>
    %199 = vector.shape_cast %198 : vector<2x1x32xbf16> to vector<2x32xbf16>
    %200 = vector.extract_strided_slice %165 {offsets = [0, 17, 0], sizes = [2, 1, 32], strides = [1, 1, 1]} : vector<2x64x32xbf16> to vector<2x1x32xbf16>
    %201 = vector.shape_cast %200 : vector<2x1x32xbf16> to vector<2x32xbf16>
    %202 = vector.extract_strided_slice %165 {offsets = [0, 18, 0], sizes = [2, 1, 32], strides = [1, 1, 1]} : vector<2x64x32xbf16> to vector<2x1x32xbf16>
    %203 = vector.shape_cast %202 : vector<2x1x32xbf16> to vector<2x32xbf16>
    %204 = vector.extract_strided_slice %165 {offsets = [0, 19, 0], sizes = [2, 1, 32], strides = [1, 1, 1]} : vector<2x64x32xbf16> to vector<2x1x32xbf16>
    %205 = vector.shape_cast %204 : vector<2x1x32xbf16> to vector<2x32xbf16>
    %206 = vector.extract_strided_slice %165 {offsets = [0, 20, 0], sizes = [2, 1, 32], strides = [1, 1, 1]} : vector<2x64x32xbf16> to vector<2x1x32xbf16>
    %207 = vector.shape_cast %206 : vector<2x1x32xbf16> to vector<2x32xbf16>
    %208 = vector.extract_strided_slice %165 {offsets = [0, 21, 0], sizes = [2, 1, 32], strides = [1, 1, 1]} : vector<2x64x32xbf16> to vector<2x1x32xbf16>
    %209 = vector.shape_cast %208 : vector<2x1x32xbf16> to vector<2x32xbf16>
    %210 = vector.extract_strided_slice %165 {offsets = [0, 22, 0], sizes = [2, 1, 32], strides = [1, 1, 1]} : vector<2x64x32xbf16> to vector<2x1x32xbf16>
    %211 = vector.shape_cast %210 : vector<2x1x32xbf16> to vector<2x32xbf16>
    %212 = vector.extract_strided_slice %165 {offsets = [0, 23, 0], sizes = [2, 1, 32], strides = [1, 1, 1]} : vector<2x64x32xbf16> to vector<2x1x32xbf16>
    %213 = vector.shape_cast %212 : vector<2x1x32xbf16> to vector<2x32xbf16>
    %214 = vector.extract_strided_slice %165 {offsets = [0, 24, 0], sizes = [2, 1, 32], strides = [1, 1, 1]} : vector<2x64x32xbf16> to vector<2x1x32xbf16>
    %215 = vector.shape_cast %214 : vector<2x1x32xbf16> to vector<2x32xbf16>
    %216 = vector.extract_strided_slice %165 {offsets = [0, 25, 0], sizes = [2, 1, 32], strides = [1, 1, 1]} : vector<2x64x32xbf16> to vector<2x1x32xbf16>
    %217 = vector.shape_cast %216 : vector<2x1x32xbf16> to vector<2x32xbf16>
    %218 = vector.extract_strided_slice %165 {offsets = [0, 26, 0], sizes = [2, 1, 32], strides = [1, 1, 1]} : vector<2x64x32xbf16> to vector<2x1x32xbf16>
    %219 = vector.shape_cast %218 : vector<2x1x32xbf16> to vector<2x32xbf16>
    %220 = vector.extract_strided_slice %165 {offsets = [0, 27, 0], sizes = [2, 1, 32], strides = [1, 1, 1]} : vector<2x64x32xbf16> to vector<2x1x32xbf16>
    %221 = vector.shape_cast %220 : vector<2x1x32xbf16> to vector<2x32xbf16>
    %222 = vector.extract_strided_slice %165 {offsets = [0, 28, 0], sizes = [2, 1, 32], strides = [1, 1, 1]} : vector<2x64x32xbf16> to vector<2x1x32xbf16>
    %223 = vector.shape_cast %222 : vector<2x1x32xbf16> to vector<2x32xbf16>
    %224 = vector.extract_strided_slice %165 {offsets = [0, 29, 0], sizes = [2, 1, 32], strides = [1, 1, 1]} : vector<2x64x32xbf16> to vector<2x1x32xbf16>
    %225 = vector.shape_cast %224 : vector<2x1x32xbf16> to vector<2x32xbf16>
    %226 = vector.extract_strided_slice %165 {offsets = [0, 30, 0], sizes = [2, 1, 32], strides = [1, 1, 1]} : vector<2x64x32xbf16> to vector<2x1x32xbf16>
    %227 = vector.shape_cast %226 : vector<2x1x32xbf16> to vector<2x32xbf16>
    %228 = vector.extract_strided_slice %165 {offsets = [0, 31, 0], sizes = [2, 1, 32], strides = [1, 1, 1]} : vector<2x64x32xbf16> to vector<2x1x32xbf16>
    %229 = vector.shape_cast %228 : vector<2x1x32xbf16> to vector<2x32xbf16>
    %230 = vector.extract_strided_slice %165 {offsets = [0, 32, 0], sizes = [2, 1, 32], strides = [1, 1, 1]} : vector<2x64x32xbf16> to vector<2x1x32xbf16>
    %231 = vector.shape_cast %230 : vector<2x1x32xbf16> to vector<2x32xbf16>
    %232 = vector.extract_strided_slice %165 {offsets = [0, 33, 0], sizes = [2, 1, 32], strides = [1, 1, 1]} : vector<2x64x32xbf16> to vector<2x1x32xbf16>
    %233 = vector.shape_cast %232 : vector<2x1x32xbf16> to vector<2x32xbf16>
    %234 = vector.extract_strided_slice %165 {offsets = [0, 34, 0], sizes = [2, 1, 32], strides = [1, 1, 1]} : vector<2x64x32xbf16> to vector<2x1x32xbf16>
    %235 = vector.shape_cast %234 : vector<2x1x32xbf16> to vector<2x32xbf16>
    %236 = vector.extract_strided_slice %165 {offsets = [0, 35, 0], sizes = [2, 1, 32], strides = [1, 1, 1]} : vector<2x64x32xbf16> to vector<2x1x32xbf16>
    %237 = vector.shape_cast %236 : vector<2x1x32xbf16> to vector<2x32xbf16>
    %238 = vector.extract_strided_slice %165 {offsets = [0, 36, 0], sizes = [2, 1, 32], strides = [1, 1, 1]} : vector<2x64x32xbf16> to vector<2x1x32xbf16>
    %239 = vector.shape_cast %238 : vector<2x1x32xbf16> to vector<2x32xbf16>
    %240 = vector.extract_strided_slice %165 {offsets = [0, 37, 0], sizes = [2, 1, 32], strides = [1, 1, 1]} : vector<2x64x32xbf16> to vector<2x1x32xbf16>
    %241 = vector.shape_cast %240 : vector<2x1x32xbf16> to vector<2x32xbf16>
    %242 = vector.extract_strided_slice %165 {offsets = [0, 38, 0], sizes = [2, 1, 32], strides = [1, 1, 1]} : vector<2x64x32xbf16> to vector<2x1x32xbf16>
    %243 = vector.shape_cast %242 : vector<2x1x32xbf16> to vector<2x32xbf16>
    %244 = vector.extract_strided_slice %165 {offsets = [0, 39, 0], sizes = [2, 1, 32], strides = [1, 1, 1]} : vector<2x64x32xbf16> to vector<2x1x32xbf16>
    %245 = vector.shape_cast %244 : vector<2x1x32xbf16> to vector<2x32xbf16>
    %246 = vector.extract_strided_slice %165 {offsets = [0, 40, 0], sizes = [2, 1, 32], strides = [1, 1, 1]} : vector<2x64x32xbf16> to vector<2x1x32xbf16>
    %247 = vector.shape_cast %246 : vector<2x1x32xbf16> to vector<2x32xbf16>
    %248 = vector.extract_strided_slice %165 {offsets = [0, 41, 0], sizes = [2, 1, 32], strides = [1, 1, 1]} : vector<2x64x32xbf16> to vector<2x1x32xbf16>
    %249 = vector.shape_cast %248 : vector<2x1x32xbf16> to vector<2x32xbf16>
    %250 = vector.extract_strided_slice %165 {offsets = [0, 42, 0], sizes = [2, 1, 32], strides = [1, 1, 1]} : vector<2x64x32xbf16> to vector<2x1x32xbf16>
    %251 = vector.shape_cast %250 : vector<2x1x32xbf16> to vector<2x32xbf16>
    %252 = vector.extract_strided_slice %165 {offsets = [0, 43, 0], sizes = [2, 1, 32], strides = [1, 1, 1]} : vector<2x64x32xbf16> to vector<2x1x32xbf16>
    %253 = vector.shape_cast %252 : vector<2x1x32xbf16> to vector<2x32xbf16>
    %254 = vector.extract_strided_slice %165 {offsets = [0, 44, 0], sizes = [2, 1, 32], strides = [1, 1, 1]} : vector<2x64x32xbf16> to vector<2x1x32xbf16>
    %255 = vector.shape_cast %254 : vector<2x1x32xbf16> to vector<2x32xbf16>
    %256 = vector.extract_strided_slice %165 {offsets = [0, 45, 0], sizes = [2, 1, 32], strides = [1, 1, 1]} : vector<2x64x32xbf16> to vector<2x1x32xbf16>
    %257 = vector.shape_cast %256 : vector<2x1x32xbf16> to vector<2x32xbf16>
    %258 = vector.extract_strided_slice %165 {offsets = [0, 46, 0], sizes = [2, 1, 32], strides = [1, 1, 1]} : vector<2x64x32xbf16> to vector<2x1x32xbf16>
    %259 = vector.shape_cast %258 : vector<2x1x32xbf16> to vector<2x32xbf16>
    %260 = vector.extract_strided_slice %165 {offsets = [0, 47, 0], sizes = [2, 1, 32], strides = [1, 1, 1]} : vector<2x64x32xbf16> to vector<2x1x32xbf16>
    %261 = vector.shape_cast %260 : vector<2x1x32xbf16> to vector<2x32xbf16>
    %262 = vector.extract_strided_slice %165 {offsets = [0, 48, 0], sizes = [2, 1, 32], strides = [1, 1, 1]} : vector<2x64x32xbf16> to vector<2x1x32xbf16>
    %263 = vector.shape_cast %262 : vector<2x1x32xbf16> to vector<2x32xbf16>
    %264 = vector.extract_strided_slice %165 {offsets = [0, 49, 0], sizes = [2, 1, 32], strides = [1, 1, 1]} : vector<2x64x32xbf16> to vector<2x1x32xbf16>
    %265 = vector.shape_cast %264 : vector<2x1x32xbf16> to vector<2x32xbf16>
    %266 = vector.extract_strided_slice %165 {offsets = [0, 50, 0], sizes = [2, 1, 32], strides = [1, 1, 1]} : vector<2x64x32xbf16> to vector<2x1x32xbf16>
    %267 = vector.shape_cast %266 : vector<2x1x32xbf16> to vector<2x32xbf16>
    %268 = vector.extract_strided_slice %165 {offsets = [0, 51, 0], sizes = [2, 1, 32], strides = [1, 1, 1]} : vector<2x64x32xbf16> to vector<2x1x32xbf16>
    %269 = vector.shape_cast %268 : vector<2x1x32xbf16> to vector<2x32xbf16>
    %270 = vector.extract_strided_slice %165 {offsets = [0, 52, 0], sizes = [2, 1, 32], strides = [1, 1, 1]} : vector<2x64x32xbf16> to vector<2x1x32xbf16>
    %271 = vector.shape_cast %270 : vector<2x1x32xbf16> to vector<2x32xbf16>
    %272 = vector.extract_strided_slice %165 {offsets = [0, 53, 0], sizes = [2, 1, 32], strides = [1, 1, 1]} : vector<2x64x32xbf16> to vector<2x1x32xbf16>
    %273 = vector.shape_cast %272 : vector<2x1x32xbf16> to vector<2x32xbf16>
    %274 = vector.extract_strided_slice %165 {offsets = [0, 54, 0], sizes = [2, 1, 32], strides = [1, 1, 1]} : vector<2x64x32xbf16> to vector<2x1x32xbf16>
    %275 = vector.shape_cast %274 : vector<2x1x32xbf16> to vector<2x32xbf16>
    %276 = vector.extract_strided_slice %165 {offsets = [0, 55, 0], sizes = [2, 1, 32], strides = [1, 1, 1]} : vector<2x64x32xbf16> to vector<2x1x32xbf16>
    %277 = vector.shape_cast %276 : vector<2x1x32xbf16> to vector<2x32xbf16>
    %278 = vector.extract_strided_slice %165 {offsets = [0, 56, 0], sizes = [2, 1, 32], strides = [1, 1, 1]} : vector<2x64x32xbf16> to vector<2x1x32xbf16>
    %279 = vector.shape_cast %278 : vector<2x1x32xbf16> to vector<2x32xbf16>
    %280 = vector.extract_strided_slice %165 {offsets = [0, 57, 0], sizes = [2, 1, 32], strides = [1, 1, 1]} : vector<2x64x32xbf16> to vector<2x1x32xbf16>
    %281 = vector.shape_cast %280 : vector<2x1x32xbf16> to vector<2x32xbf16>
    %282 = vector.extract_strided_slice %165 {offsets = [0, 58, 0], sizes = [2, 1, 32], strides = [1, 1, 1]} : vector<2x64x32xbf16> to vector<2x1x32xbf16>
    %283 = vector.shape_cast %282 : vector<2x1x32xbf16> to vector<2x32xbf16>
    %284 = vector.extract_strided_slice %165 {offsets = [0, 59, 0], sizes = [2, 1, 32], strides = [1, 1, 1]} : vector<2x64x32xbf16> to vector<2x1x32xbf16>
    %285 = vector.shape_cast %284 : vector<2x1x32xbf16> to vector<2x32xbf16>
    %286 = vector.extract_strided_slice %165 {offsets = [0, 60, 0], sizes = [2, 1, 32], strides = [1, 1, 1]} : vector<2x64x32xbf16> to vector<2x1x32xbf16>
    %287 = vector.shape_cast %286 : vector<2x1x32xbf16> to vector<2x32xbf16>
    %288 = vector.extract_strided_slice %165 {offsets = [0, 61, 0], sizes = [2, 1, 32], strides = [1, 1, 1]} : vector<2x64x32xbf16> to vector<2x1x32xbf16>
    %289 = vector.shape_cast %288 : vector<2x1x32xbf16> to vector<2x32xbf16>
    %290 = vector.extract_strided_slice %165 {offsets = [0, 62, 0], sizes = [2, 1, 32], strides = [1, 1, 1]} : vector<2x64x32xbf16> to vector<2x1x32xbf16>
    %291 = vector.shape_cast %290 : vector<2x1x32xbf16> to vector<2x32xbf16>
    %292 = vector.extract_strided_slice %165 {offsets = [0, 63, 0], sizes = [2, 1, 32], strides = [1, 1, 1]} : vector<2x64x32xbf16> to vector<2x1x32xbf16>
    %293 = vector.shape_cast %292 : vector<2x1x32xbf16> to vector<2x32xbf16>
    %294 = tpu.concatenate %167, %169, %171, %173, %175, %177, %179, %181, %183, %185, %187, %189, %191, %193, %195, %197 in 1 : vector<2x32xbf16>, vector<2x32xbf16>, vector<2x32xbf16>, vector<2x32xbf16>, vector<2x32xbf16>, vector<2x32xbf16>, vector<2x32xbf16>, vector<2x32xbf16>, vector<2x32xbf16>, vector<2x32xbf16>, vector<2x32xbf16>, vector<2x32xbf16>, vector<2x32xbf16>, vector<2x32xbf16>, vector<2x32xbf16>, vector<2x32xbf16> -> vector<2x512xbf16>
    %295 = tpu.concatenate %199, %201, %203, %205, %207, %209, %211, %213, %215, %217, %219, %221, %223, %225, %227, %229 in 1 : vector<2x32xbf16>, vector<2x32xbf16>, vector<2x32xbf16>, vector<2x32xbf16>, vector<2x32xbf16>, vector<2x32xbf16>, vector<2x32xbf16>, vector<2x32xbf16>, vector<2x32xbf16>, vector<2x32xbf16>, vector<2x32xbf16>, vector<2x32xbf16>, vector<2x32xbf16>, vector<2x32xbf16>, vector<2x32xbf16>, vector<2x32xbf16> -> vector<2x512xbf16>
    %296 = tpu.concatenate %231, %233, %235, %237, %239, %241, %243, %245, %247, %249, %251, %253, %255, %257, %259, %261 in 1 : vector<2x32xbf16>, vector<2x32xbf16>, vector<2x32xbf16>, vector<2x32xbf16>, vector<2x32xbf16>, vector<2x32xbf16>, vector<2x32xbf16>, vector<2x32xbf16>, vector<2x32xbf16>, vector<2x32xbf16>, vector<2x32xbf16>, vector<2x32xbf16>, vector<2x32xbf16>, vector<2x32xbf16>, vector<2x32xbf16>, vector<2x32xbf16> -> vector<2x512xbf16>
    %297 = tpu.concatenate %263, %265, %267, %269, %271, %273, %275, %277, %279, %281, %283, %285, %287, %289, %291, %293 in 1 : vector<2x32xbf16>, vector<2x32xbf16>, vector<2x32xbf16>, vector<2x32xbf16>, vector<2x32xbf16>, vector<2x32xbf16>, vector<2x32xbf16>, vector<2x32xbf16>, vector<2x32xbf16>, vector<2x32xbf16>, vector<2x32xbf16>, vector<2x32xbf16>, vector<2x32xbf16>, vector<2x32xbf16>, vector<2x32xbf16>, vector<2x32xbf16> -> vector<2x512xbf16>
    %298 = tpu.concatenate %294, %295, %296, %297 in 1 : vector<2x512xbf16>, vector<2x512xbf16>, vector<2x512xbf16>, vector<2x512xbf16> -> vector<2x2048xbf16>
    %c0_17 = arith.constant 0 : index
    %c0_18 = arith.constant 0 : index
    %299 = vector.load %arg6[%c0_17, %c0_18] : memref<2048x128xbf16, #tpu.memory_space<vmem>>, vector<2048x128xbf16>
    %cst_19 = arith.constant dense<0.000000e+00> : vector<2x128xf32>
    %300 = tpu.matmul %298, %299, %cst_19 {dimension_numbers = #tpu.dot_dimension_numbers<[1], [0], [0], [1], [0, 0, 1, 1], [], []>} : vector<2x2048xbf16>, vector<2048x128xbf16>, vector<2x128xf32> -> vector<2x128xf32>
    %c0_20 = arith.constant 0 : index
    %c0_21 = arith.constant 0 : index
    %301 = vector.load %arg7[%c0_20, %c0_21] : memref<1x128xf32, #tpu.memory_space<vmem>>, vector<1x128xf32>
    %302 = vector.broadcast %301 : vector<1x128xf32> to vector<2x128xf32>
    %303 = arith.addf %300, %302 : vector<2x128xf32>
    %cst_22 = arith.constant 0.000000e+00 : f32
    %304 = vector.broadcast %cst_22 : f32 to vector<2x128xf32>
    %305 = arith.maximumf %303, %304 : vector<2x128xf32>
    %306 = arith.truncf %305 : vector<2x128xf32> to vector<2x128xbf16>
    %c0_23 = arith.constant 0 : index
    %c0_24 = arith.constant 0 : index
    %307 = vector.load %arg8[%c0_23, %c0_24] : memref<128x128xbf16, #tpu.memory_space<vmem>>, vector<128x128xbf16>
    %cst_25 = arith.constant dense<0.000000e+00> : vector<2x128xf32>
    %308 = tpu.matmul %306, %307, %cst_25 {dimension_numbers = #tpu.dot_dimension_numbers<[1], [0], [0], [1], [0, 0, 1, 1], [], []>} : vector<2x128xbf16>, vector<128x128xbf16>, vector<2x128xf32> -> vector<2x128xf32>
    %c0_26 = arith.constant 0 : index
    %c0_27 = arith.constant 0 : index
    %309 = vector.load %arg9[%c0_26, %c0_27] : memref<1x128xf32, #tpu.memory_space<vmem>>, vector<1x128xf32>
    %310 = vector.broadcast %309 : vector<1x128xf32> to vector<2x128xf32>
    %311 = arith.addf %308, %310 : vector<2x128xf32>
    %c0_28 = arith.constant 0 : index
    %c0_29 = arith.constant 0 : index
    %312 = vector.load %arg10[%c0_28, %c0_29] : memref<2x128xf32, #tpu.memory_space<vmem>>, vector<2x128xf32>
    tpu.vector_store %arg10[%c0_28, %c0_29], %311 {strides = array<i32>} : memref<2x128xf32, #tpu.memory_space<vmem>>, vector<2x128xf32>,
    return
  }
  func.func @transform_0(%arg0: i32) -> (i32, i32, i32) {
    %c0_i32 = arith.constant 0 : i32
    %c0_i32_0 = arith.constant 0 : i32
    %c0_i32_1 = arith.constant 0 : i32
    return %arg0, %c0_i32, %c0_i32_0 : i32, i32, i32
  }
  func.func @transform_1(%arg0: i32) -> (i32, i32) {
    %c0_i32 = arith.constant 0 : i32
    %c0_i32_0 = arith.constant 0 : i32
    %c0_i32_1 = arith.constant 0 : i32
    return %c0_i32, %c0_i32_0 : i32, i32
  }
  func.func @transform_2(%arg0: i32) -> (i32, i32) {
    %c0_i32 = arith.constant 0 : i32
    %c0_i32_0 = arith.constant 0 : i32
    %c0_i32_1 = arith.constant 0 : i32
    return %c0_i32, %c0_i32_0 : i32, i32
  }
  func.func @transform_3(%arg0: i32) -> (i32, i32) {
    %c0_i32 = arith.constant 0 : i32
    %c0_i32_0 = arith.constant 0 : i32
    %c0_i32_1 = arith.constant 0 : i32
    return %c0_i32, %c0_i32_0 : i32, i32
  }
  func.func @transform_4(%arg0: i32) -> (i32, i32) {
    %c0_i32 = arith.constant 0 : i32
    %c0_i32_0 = arith.constant 0 : i32
    %c0_i32_1 = arith.constant 0 : i32
    return %c0_i32, %c0_i32_0 : i32, i32
  }
  func.func @transform_5(%arg0: i32) -> (i32, i32) {
    %c0_i32 = arith.constant 0 : i32
    %c0_i32_0 = arith.constant 0 : i32
    %c0_i32_1 = arith.constant 0 : i32
    return %c0_i32, %c0_i32_0 : i32, i32
  }
  func.func @transform_6(%arg0: i32) -> (i32, i32) {
    %c0_i32 = arith.constant 0 : i32
    %c0_i32_0 = arith.constant 0 : i32
    %c0_i32_1 = arith.constant 0 : i32
    return %c0_i32, %c0_i32_0 : i32, i32
  }
  func.func @transform_7(%arg0: i32) -> (i32, i32) {
    %c0_i32 = arith.constant 0 : i32
    %c0_i32_0 = arith.constant 0 : i32
    %c0_i32_1 = arith.constant 0 : i32
    return %c0_i32, %c0_i32_0 : i32, i32
  }
  func.func @transform_8(%arg0: i32) -> (i32, i32) {
    %c0_i32 = arith.constant 0 : i32
    %c0_i32_0 = arith.constant 0 : i32
    %c0_i32_1 = arith.constant 0 : i32
    return %c0_i32, %c0_i32_0 : i32, i32
  }
  func.func @transform_9(%arg0: i32) -> (i32, i32) {
    %c0_i32 = arith.constant 0 : i32
    %c0_i32_0 = arith.constant 0 : i32
    return %arg0, %c0_i32 : i32, i32
  }
}

</mosaic_0001>

<llo_original>
// kernel: cnn_forward.1
$region0: #{cnn_forward.1}
  #allocation0 [shape = 'u32[]', space=smem, size = 0x4, offset = 0x4, fixed_abs, tag = 'smem constant byte address 0x4 - core index']
  #allocation1 [shape = 'u32[72,128]{1,0:T(1,128)}', space=vmem, size = 0x9000, scoped, tag = 'internal scratch']
  %s0 = inlined_call_operand.vmem [shape: bf16[2,256,16], index: 0, kind: input, shape index: {}]
  %s1 = inlined_call_operand.vmem [shape: bf16[16,64], index: 1, kind: input, shape index: {}]
  %s2 = inlined_call_operand.vmem [shape: f32[1,64], index: 2, kind: input, shape index: {}]
  %s3 = inlined_call_operand.vmem [shape: bf16[256,128], index: 3, kind: input, shape index: {}]
  %s4 = inlined_call_operand.vmem [shape: f32[1,128], index: 4, kind: input, shape index: {}]
  %s5 = inlined_call_operand.vmem [shape: bf16[2048,128], index: 5, kind: input, shape index: {}]
  %s6 = inlined_call_operand.vmem [shape: f32[1,128], index: 6, kind: input, shape index: {}]
  %s7 = inlined_call_operand.vmem [shape: bf16[128,128], index: 7, kind: input, shape index: {}]
  %s8 = inlined_call_operand.vmem [shape: f32[1,128], index: 8, kind: input, shape index: {}]
  %s9 = inlined_call_operand.hbm [shape: f32[2,128], index: 9, kind: output, shape index: {}]
  %s10 = sld [smem:[#allocation0]]
  $region46: #{cnn_forward.1} parent=0
    _
  %s12 = ssub.s32 1, %s10
  %s13 = scalar_select 0, %s12, %s10
  $region1: #{cnn_forward.1} parent=0
    #allocation2 [shape = 'u8[1024]{0}', space=vmem, size = 0x400, scoped, tag = 'output window, operand 0, single buffered']
    #allocation3 [shape = 's32[1]{0}', space=sflag, size = 0x4, scoped, tag = 'scoped memory for cnn_forward.1']
    %14 = vsyncpa [#allocation3], 0
    // Predicated region
    $region2: #{cnn_forward.1} parent=1 // pred_check
      _
    $region3: #{cnn_forward.1} parent=1 // pred_check_branch
      %16 = sbr.rel (0) target = $region5
    $region4: #{cnn_forward.1} parent=1 // pred_region
      _
    $region5: #{cnn_forward.1} parent=1 // pred_fallthru
      _
    // Predicated region
    $region6: #{cnn_forward.1} parent=1 // pred_check
      _
    $region7: #{cnn_forward.1} parent=1 // pred_check_branch
      %18 = sbr.rel (0) target = $region9
    $region8: #{cnn_forward.1} parent=1 // pred_region
      _
    $region9: #{cnn_forward.1} parent=1 // pred_fallthru
      _
    // Predicated region
    $region10: #{cnn_forward.1} parent=1 // pred_check
      _
    $region11: #{cnn_forward.1} parent=1 // pred_check_branch
      %20 = sbr.rel (0) target = $region13
    $region12: #{cnn_forward.1} parent=1 // pred_region
      _
    $region13: #{cnn_forward.1} parent=1 // pred_fallthru
      _
    // Predicated region
    $region14: #{cnn_forward.1} parent=1 // pred_check
      _
    $region15: #{cnn_forward.1} parent=1 // pred_check_branch
      %22 = sbr.rel (0) target = $region17
    $region16: #{cnn_forward.1} parent=1 // pred_region
      _
    $region17: #{cnn_forward.1} parent=1 // pred_fallthru
      _
    // Predicated region
    $region18: #{cnn_forward.1} parent=1 // pred_check
      _
    $region19: #{cnn_forward.1} parent=1 // pred_check_branch
      %24 = sbr.rel (0) target = $region21
    $region20: #{cnn_forward.1} parent=1 // pred_region
      _
    $region21: #{cnn_forward.1} parent=1 // pred_fallthru
      _
    // Predicated region
    $region22: #{cnn_forward.1} parent=1 // pred_check
      _
    $region23: #{cnn_forward.1} parent=1 // pred_check_branch
      %26 = sbr.rel (0) target = $region25
    $region24: #{cnn_forward.1} parent=1 // pred_region
      _
    $region25: #{cnn_forward.1} parent=1 // pred_fallthru
      _
    // Predicated region
    $region26: #{cnn_forward.1} parent=1 // pred_check
      _
    $region27: #{cnn_forward.1} parent=1 // pred_check_branch
      %28 = sbr.rel (0) target = $region29
    $region28: #{cnn_forward.1} parent=1 // pred_region
      _
    $region29: #{cnn_forward.1} parent=1 // pred_fallthru
      _
    // Predicated region
    $region30: #{cnn_forward.1} parent=1 // pred_check
      _
    $region31: #{cnn_forward.1} parent=1 // pred_check_branch
      %30 = sbr.rel (0) target = $region33
    $region32: #{cnn_forward.1} parent=1 // pred_region
      _
    $region33: #{cnn_forward.1} parent=1 // pred_fallthru
      _
    // Predicated region
    $region34: #{cnn_forward.1} parent=1 // pred_check
      _
    $region35: #{cnn_forward.1} parent=1 // pred_check_branch
      %32 = sbr.rel (0) target = $region37
    $region36: #{cnn_forward.1} parent=1 // pred_region
      _
    $region37: #{cnn_forward.1} parent=1 // pred_fallthru
      _
    %v34 = vld [vmem:[%s0] sm:$0xf]
    %v35 = vld [vmem:[%s0 + $0x4] sm:$0xf]
    %v36 = vld [vmem:[%s0 + $0x8] sm:$0xf]
    %v37 = vld [vmem:[%s0 + $0xc] sm:$0xf]
    %v38 = vld [vmem:[%s0 + $0x10] sm:$0xf]
    %v39 = vld [vmem:[%s0 + $0x14] sm:$0xf]
    %v40 = vld [vmem:[%s0 + $0x18] sm:$0xf]
    %v41 = vld [vmem:[%s0 + $0x1c] sm:$0xf]
    %v42 = vld [vmem:[%s0 + $0x20] sm:$0xf]
    %v43 = vld [vmem:[%s0 + $0x24] sm:$0xf]
    %v44 = vld [vmem:[%s0 + $0x28] sm:$0xf]
    %v45 = vld [vmem:[%s0 + $0x2c] sm:$0xf]
    %v46 = vld [vmem:[%s0 + $0x30] sm:$0xf]
    %v47 = vld [vmem:[%s0 + $0x34] sm:$0xf]
    %v48 = vld [vmem:[%s0 + $0x38] sm:$0xf]
    %v49 = vld [vmem:[%s0 + $0x3c] sm:$0xf]
    %v50 = vld [vmem:[%s0 + $0x40] sm:$0xf]
    %v51 = vld [vmem:[%s0 + $0x44] sm:$0xf]
    %v52 = vld [vmem:[%s0 + $0x48] sm:$0xf]
    %v53 = vld [vmem:[%s0 + $0x4c] sm:$0xf]
    %v54 = vld [vmem:[%s0 + $0x50] sm:$0xf]
    %v55 = vld [vmem:[%s0 + $0x54] sm:$0xf]
    %v56 = vld [vmem:[%s0 + $0x58] sm:$0xf]
    %v57 = vld [vmem:[%s0 + $0x5c] sm:$0xf]
    %v58 = vld [vmem:[%s0 + $0x60] sm:$0xf]
    %v59 = vld [vmem:[%s0 + $0x64] sm:$0xf]
    %v60 = vld [vmem:[%s0 + $0x68] sm:$0xf]
    %v61 = vld [vmem:[%s0 + $0x6c] sm:$0xf]
    %v62 = vld [vmem:[%s0 + $0x70] sm:$0xf]
    %v63 = vld [vmem:[%s0 + $0x74] sm:$0xf]
    %v64 = vld [vmem:[%s0 + $0x78] sm:$0xf]
    %v65 = vld [vmem:[%s0 + $0x7c] sm:$0xf]
    %v66 = vld [vmem:[%s0 + $0x80] sm:$0xf]
    %v67 = vld [vmem:[%s0 + $0x84] sm:$0xf]
    %v68 = vld [vmem:[%s0 + $0x88] sm:$0xf]
    %v69 = vld [vmem:[%s0 + $0x8c] sm:$0xf]
    %v70 = vld [vmem:[%s0 + $0x90] sm:$0xf]
    %v71 = vld [vmem:[%s0 + $0x94] sm:$0xf]
    %v72 = vld [vmem:[%s0 + $0x98] sm:$0xf]
    %v73 = vld [vmem:[%s0 + $0x9c] sm:$0xf]
    %v74 = vld [vmem:[%s0 + $0xa0] sm:$0xf]
    %v75 = vld [vmem:[%s0 + $0xa4] sm:$0xf]
    %v76 = vld [vmem:[%s0 + $0xa8] sm:$0xf]
    %v77 = vld [vmem:[%s0 + $0xac] sm:$0xf]
    %v78 = vld [vmem:[%s0 + $0xb0] sm:$0xf]
    %v79 = vld [vmem:[%s0 + $0xb4] sm:$0xf]
    %v80 = vld [vmem:[%s0 + $0xb8] sm:$0xf]
    %v81 = vld [vmem:[%s0 + $0xbc] sm:$0xf]
    %v82 = vld [vmem:[%s0 + $0xc0] sm:$0xf]
    %v83 = vld [vmem:[%s0 + $0xc4] sm:$0xf]
    %v84 = vld [vmem:[%s0 + $0xc8] sm:$0xf]
    %v85 = vld [vmem:[%s0 + $0xcc] sm:$0xf]
    %v86 = vld [vmem:[%s0 + $0xd0] sm:$0xf]
    %v87 = vld [vmem:[%s0 + $0xd4] sm:$0xf]
    %v88 = vld [vmem:[%s0 + $0xd8] sm:$0xf]
    %v89 = vld [vmem:[%s0 + $0xdc] sm:$0xf]
    %v90 = vld [vmem:[%s0 + $0xe0] sm:$0xf]
    %v91 = vld [vmem:[%s0 + $0xe4] sm:$0xf]
    %v92 = vld [vmem:[%s0 + $0xe8] sm:$0xf]
    %v93 = vld [vmem:[%s0 + $0xec] sm:$0xf]
    %v94 = vld [vmem:[%s0 + $0xf0] sm:$0xf]
    %v95 = vld [vmem:[%s0 + $0xf4] sm:$0xf]
    %v96 = vld [vmem:[%s0 + $0xf8] sm:$0xf]
    %v97 = vld [vmem:[%s0 + $0xfc] sm:$0xf]
    %v98 = vld [vmem:[%s1] sm:$0xf]
    %v99 = vld [vmem:[%s1 + $0x4] sm:$0xf]
    %v100 = vld [vmem:[%s2] sm:$0x1]
    %v102 = vperm.slane %v100, 0
    %v168 = vunpack.c.l.b16 %v34
    %v169 = vunpack.c.l.b16 %v35
    %v170 = vunpack.c.l.b16 %v36
    %v171 = vunpack.c.l.b16 %v37
    %v172 = vunpack.c.l.b16 %v38
    %v173 = vunpack.c.l.b16 %v39
    %v174 = vunpack.c.l.b16 %v40
    %v175 = vunpack.c.l.b16 %v41
    %v176 = vunpack.c.l.b16 %v42
    %v177 = vunpack.c.l.b16 %v43
    %v178 = vunpack.c.l.b16 %v44
    %v179 = vunpack.c.l.b16 %v45
    %v180 = vunpack.c.l.b16 %v46
    %v181 = vunpack.c.l.b16 %v47
    %v182 = vunpack.c.l.b16 %v48
    %v183 = vunpack.c.l.b16 %v49
    %v184 = vunpack.c.l.b16 %v50
    %v185 = vunpack.c.l.b16 %v51
    %v186 = vunpack.c.l.b16 %v52
    %v187 = vunpack.c.l.b16 %v53
    %v188 = vunpack.c.l.b16 %v54
    %v189 = vunpack.c.l.b16 %v55
    %v190 = vunpack.c.l.b16 %v56
    %v191 = vunpack.c.l.b16 %v57
    %v192 = vunpack.c.l.b16 %v58
    %v193 = vunpack.c.l.b16 %v59
    %v194 = vunpack.c.l.b16 %v60
    %v195 = vunpack.c.l.b16 %v61
    %v196 = vunpack.c.l.b16 %v62
    %v197 = vunpack.c.l.b16 %v63
    %v198 = vunpack.c.l.b16 %v64
    %v199 = vunpack.c.l.b16 %v65
    %v200 = vunpack.c.l.b16 %v66
    %v201 = vunpack.c.l.b16 %v67
    %v202 = vunpack.c.l.b16 %v68
    %v203 = vunpack.c.l.b16 %v69
    %v204 = vunpack.c.l.b16 %v70
    %v205 = vunpack.c.l.b16 %v71
    %v206 = vunpack.c.l.b16 %v72
    %v207 = vunpack.c.l.b16 %v73
    %v208 = vunpack.c.l.b16 %v74
    %v209 = vunpack.c.l.b16 %v75
    %v210 = vunpack.c.l.b16 %v76
    %v211 = vunpack.c.l.b16 %v77
    %v212 = vunpack.c.l.b16 %v78
    %v213 = vunpack.c.l.b16 %v79
    %v214 = vunpack.c.l.b16 %v80
    %v215 = vunpack.c.l.b16 %v81
    %v216 = vunpack.c.l.b16 %v82
    %v217 = vunpack.c.l.b16 %v83
    %v218 = vunpack.c.l.b16 %v84
    %v219 = vunpack.c.l.b16 %v85
    %v220 = vunpack.c.l.b16 %v86
    %v221 = vunpack.c.l.b16 %v87
    %v222 = vunpack.c.l.b16 %v88
    %v223 = vunpack.c.l.b16 %v89
    %v224 = vunpack.c.l.b16 %v90
    %v225 = vunpack.c.l.b16 %v91
    %v226 = vunpack.c.l.b16 %v92
    %v227 = vunpack.c.l.b16 %v93
    %v228 = vunpack.c.l.b16 %v94
    %v229 = vunpack.c.l.b16 %v95
    %v230 = vunpack.c.l.b16 %v96
    %v231 = vunpack.c.l.b16 %v97
    %v232 = vpack.c.b16 %v169, %v168
    %v233 = vpack.c.b16 %v171, %v170
    %v234 = vpack.c.b16 %v173, %v172
    %v235 = vpack.c.b16 %v175, %v174
    %v236 = vpack.c.b16 %v177, %v176
    %v237 = vpack.c.b16 %v179, %v178
    %v238 = vpack.c.b16 %v181, %v180
    %v239 = vpack.c.b16 %v183, %v182
    %v240 = vpack.c.b16 %v185, %v184
    %v241 = vpack.c.b16 %v187, %v186
    %v242 = vpack.c.b16 %v189, %v188
    %v243 = vpack.c.b16 %v191, %v190
    %v244 = vpack.c.b16 %v193, %v192
    %v245 = vpack.c.b16 %v195, %v194
    %v246 = vpack.c.b16 %v197, %v196
    %v247 = vpack.c.b16 %v199, %v198
    %v248 = vpack.c.b16 %v201, %v200
    %v249 = vpack.c.b16 %v203, %v202
    %v250 = vpack.c.b16 %v205, %v204
    %v251 = vpack.c.b16 %v207, %v206
    %v252 = vpack.c.b16 %v209, %v208
    %v253 = vpack.c.b16 %v211, %v210
    %v254 = vpack.c.b16 %v213, %v212
    %v255 = vpack.c.b16 %v215, %v214
    %v256 = vpack.c.b16 %v217, %v216
    %v257 = vpack.c.b16 %v219, %v218
    %v258 = vpack.c.b16 %v221, %v220
    %v259 = vpack.c.b16 %v223, %v222
    %v260 = vpack.c.b16 %v225, %v224
    %v261 = vpack.c.b16 %v227, %v226
    %v262 = vpack.c.b16 %v229, %v228
    %v263 = vpack.c.b16 %v231, %v230
    %v266 = vunpack.c.l.b16 %v98
    %v267 = vunpack.c.l.b16 %v99
    %v268 = vpack.c.b16 %v267, %v266
    %vm270 = vcmask 130048
    %v272 = vsel %vm270, %v232, 0
    %v275 = vsel %vm270, %v233, 0
    %v278 = vsel %vm270, %v234, 0
    %v281 = vsel %vm270, %v235, 0
    %v284 = vsel %vm270, %v236, 0
    %v287 = vsel %vm270, %v237, 0
    %v290 = vsel %vm270, %v238, 0
    %v293 = vsel %vm270, %v239, 0
    %v296 = vsel %vm270, %v240, 0
    %v299 = vsel %vm270, %v241, 0
    %v302 = vsel %vm270, %v242, 0
    %v305 = vsel %vm270, %v243, 0
    %v308 = vsel %vm270, %v244, 0
    %v311 = vsel %vm270, %v245, 0
    %v314 = vsel %vm270, %v246, 0
    %v317 = vsel %vm270, %v247, 0
    %v320 = vsel %vm270, %v248, 0
    %v323 = vsel %vm270, %v249, 0
    %v326 = vsel %vm270, %v250, 0
    %v329 = vsel %vm270, %v251, 0
    %v332 = vsel %vm270, %v252, 0
    %v335 = vsel %vm270, %v253, 0
    %v338 = vsel %vm270, %v254, 0
    %v341 = vsel %vm270, %v255, 0
    %v344 = vsel %vm270, %v256, 0
    %v347 = vsel %vm270, %v257, 0
    %v350 = vsel %vm270, %v258, 0
    %v353 = vsel %vm270, %v259, 0
    %v356 = vsel %vm270, %v260, 0
    %v359 = vsel %vm270, %v261, 0
    %v362 = vsel %vm270, %v262, 0
    %v365 = vsel %vm270, %v263, 0
    %367 = vmatpush.bf16.msra.mxu0 0
    %368 = vmatpush.bf16.msra.mxu0 0
    %369 = vmatpush.bf16.msra.mxu0 0
    %370 = vmatpush.bf16.msra.mxu0 0
    %371 = vmatpush.bf16.msra.mxu0 0
    %372 = vmatpush.bf16.msra.mxu0 0
    %373 = vmatpush.bf16.msra.mxu0 0
    %374 = vmatpush.bf16.msra.mxu0 %v268
    %375 = vmatmul.bf16.gmra.mxu0 %v272
    %v376 = vpop.f32.mrf.mxu0
    %v377 = vadd.f32 %v102, %v376
    %v378 = vpop.f32.mrf.mxu0
    %v379 = vadd.f32 %v102, %v378
    %380 = vmatmul.bf16.gmra.mxu0 %v275
    %v381 = vpop.f32.mrf.mxu0
    %v382 = vadd.f32 %v102, %v381
    %v383 = vpop.f32.mrf.mxu0
    %v384 = vadd.f32 %v102, %v383
    %385 = vmatmul.bf16.gmra.mxu0 %v278
    %v386 = vpop.f32.mrf.mxu0
    %v387 = vadd.f32 %v102, %v386
    %v388 = vpop.f32.mrf.mxu0
    %v389 = vadd.f32 %v102, %v388
    %390 = vmatmul.bf16.gmra.mxu0 %v281
    %v391 = vpop.f32.mrf.mxu0
    %v392 = vadd.f32 %v102, %v391
    %v393 = vpop.f32.mrf.mxu0
    %v394 = vadd.f32 %v102, %v393
    %395 = vmatmul.bf16.gmra.mxu0 %v284
    %v396 = vpop.f32.mrf.mxu0
    %v397 = vadd.f32 %v102, %v396
    %v398 = vpop.f32.mrf.mxu0
    %v399 = vadd.f32 %v102, %v398
    %400 = vmatmul.bf16.gmra.mxu0 %v287
    %v401 = vpop.f32.mrf.mxu0
    %v402 = vadd.f32 %v102, %v401
    %v403 = vpop.f32.mrf.mxu0
    %v404 = vadd.f32 %v102, %v403
    %405 = vmatmul.bf16.gmra.mxu0 %v290
    %v406 = vpop.f32.mrf.mxu0
    %v407 = vadd.f32 %v102, %v406
    %v408 = vpop.f32.mrf.mxu0
    %v409 = vadd.f32 %v102, %v408
    %410 = vmatmul.bf16.gmra.mxu0 %v293
    %v411 = vpop.f32.mrf.mxu0
    %v412 = vadd.f32 %v102, %v411
    %v413 = vpop.f32.mrf.mxu0
    %v414 = vadd.f32 %v102, %v413
    %415 = vmatmul.bf16.gmra.mxu0 %v296
    %v416 = vpop.f32.mrf.mxu0
    %v417 = vadd.f32 %v102, %v416
    %v418 = vpop.f32.mrf.mxu0
    %v419 = vadd.f32 %v102, %v418
    %420 = vmatmul.bf16.gmra.mxu0 %v299
    %v421 = vpop.f32.mrf.mxu0
    %v422 = vadd.f32 %v102, %v421
    %v423 = vpop.f32.mrf.mxu0
    %v424 = vadd.f32 %v102, %v423
    %425 = vmatmul.bf16.gmra.mxu0 %v302
    %v426 = vpop.f32.mrf.mxu0
    %v427 = vadd.f32 %v102, %v426
    %v428 = vpop.f32.mrf.mxu0
    %v429 = vadd.f32 %v102, %v428
    %430 = vmatmul.bf16.gmra.mxu0 %v305
    %v431 = vpop.f32.mrf.mxu0
    %v432 = vadd.f32 %v102, %v431
    %v433 = vpop.f32.mrf.mxu0
    %v434 = vadd.f32 %v102, %v433
    %435 = vmatmul.bf16.gmra.mxu0 %v308
    %v436 = vpop.f32.mrf.mxu0
    %v437 = vadd.f32 %v102, %v436
    %v438 = vpop.f32.mrf.mxu0
    %v439 = vadd.f32 %v102, %v438
    %440 = vmatmul.bf16.gmra.mxu0 %v311
    %v441 = vpop.f32.mrf.mxu0
    %v442 = vadd.f32 %v102, %v441
    %v443 = vpop.f32.mrf.mxu0
    %v444 = vadd.f32 %v102, %v443
    %445 = vmatmul.bf16.gmra.mxu0 %v314
    %v446 = vpop.f32.mrf.mxu0
    %v447 = vadd.f32 %v102, %v446
    %v448 = vpop.f32.mrf.mxu0
    %v449 = vadd.f32 %v102, %v448
    %450 = vmatmul.bf16.gmra.mxu0 %v317
    %v451 = vpop.f32.mrf.mxu0
    %v452 = vadd.f32 %v102, %v451
    %v453 = vpop.f32.mrf.mxu0
    %v454 = vadd.f32 %v102, %v453
    %455 = vmatmul.bf16.gmra.mxu0 %v320
    %v456 = vpop.f32.mrf.mxu0
    %v457 = vadd.f32 %v102, %v456
    %v458 = vpop.f32.mrf.mxu0
    %v459 = vadd.f32 %v102, %v458
    %460 = vmatmul.bf16.gmra.mxu0 %v323
    %v461 = vpop.f32.mrf.mxu0
    %v462 = vadd.f32 %v102, %v461
    %v463 = vpop.f32.mrf.mxu0
    %v464 = vadd.f32 %v102, %v463
    %465 = vmatmul.bf16.gmra.mxu0 %v326
    %v466 = vpop.f32.mrf.mxu0
    %v467 = vadd.f32 %v102, %v466
    %v468 = vpop.f32.mrf.mxu0
    %v469 = vadd.f32 %v102, %v468
    %470 = vmatmul.bf16.gmra.mxu0 %v329
    %v471 = vpop.f32.mrf.mxu0
    %v472 = vadd.f32 %v102, %v471
    %v473 = vpop.f32.mrf.mxu0
    %v474 = vadd.f32 %v102, %v473
    %475 = vmatmul.bf16.gmra.mxu0 %v332
    %v476 = vpop.f32.mrf.mxu0
    %v477 = vadd.f32 %v102, %v476
    %v478 = vpop.f32.mrf.mxu0
    %v479 = vadd.f32 %v102, %v478
    %480 = vmatmul.bf16.gmra.mxu0 %v335
    %v481 = vpop.f32.mrf.mxu0
    %v482 = vadd.f32 %v102, %v481
    %v483 = vpop.f32.mrf.mxu0
    %v484 = vadd.f32 %v102, %v483
    %485 = vmatmul.bf16.gmra.mxu0 %v338
    %v486 = vpop.f32.mrf.mxu0
    %v487 = vadd.f32 %v102, %v486
    %v488 = vpop.f32.mrf.mxu0
    %v489 = vadd.f32 %v102, %v488
    %490 = vmatmul.bf16.gmra.mxu0 %v341
    %v491 = vpop.f32.mrf.mxu0
    %v492 = vadd.f32 %v102, %v491
    %v493 = vpop.f32.mrf.mxu0
    %v494 = vadd.f32 %v102, %v493
    %495 = vmatmul.bf16.gmra.mxu0 %v344
    %v496 = vpop.f32.mrf.mxu0
    %v497 = vadd.f32 %v102, %v496
    %v498 = vpop.f32.mrf.mxu0
    %v499 = vadd.f32 %v102, %v498
    %500 = vmatmul.bf16.gmra.mxu0 %v347
    %v501 = vpop.f32.mrf.mxu0
    %v502 = vadd.f32 %v102, %v501
    %v503 = vpop.f32.mrf.mxu0
    %v504 = vadd.f32 %v102, %v503
    %505 = vmatmul.bf16.gmra.mxu0 %v350
    %v506 = vpop.f32.mrf.mxu0
    %v507 = vadd.f32 %v102, %v506
    %v508 = vpop.f32.mrf.mxu0
    %v509 = vadd.f32 %v102, %v508
    %510 = vmatmul.bf16.gmra.mxu0 %v353
    %v511 = vpop.f32.mrf.mxu0
    %v512 = vadd.f32 %v102, %v511
    %v513 = vpop.f32.mrf.mxu0
    %v514 = vadd.f32 %v102, %v513
    %515 = vmatmul.bf16.gmra.mxu0 %v356
    %v516 = vpop.f32.mrf.mxu0
    %v517 = vadd.f32 %v102, %v516
    %v518 = vpop.f32.mrf.mxu0
    %v519 = vadd.f32 %v102, %v518
    %520 = vmatmul.bf16.gmra.mxu0 %v359
    %v521 = vpop.f32.mrf.mxu0
    %v522 = vadd.f32 %v102, %v521
    %v523 = vpop.f32.mrf.mxu0
    %v524 = vadd.f32 %v102, %v523
    %525 = vmatmul.bf16.gmra.mxu0 %v362
    %v526 = vpop.f32.mrf.mxu0
    %v527 = vadd.f32 %v102, %v526
    %v528 = vpop.f32.mrf.mxu0
    %v529 = vadd.f32 %v102, %v528
    %530 = vmatmul.bf16.gmra.mxu0 %v365
    %v531 = vpop.f32.mrf.mxu0
    %v532 = vadd.f32 %v102, %v531
    %v533 = vpop.f32.mrf.mxu0
    %v534 = vadd.f32 %v102, %v533
    %535 = vdwg.mxu0
    %v536 = vmax.f32 %v377, 0.0
    %v537 = vmax.f32 %v379, 0.0
    %v538 = vmax.f32 %v382, 0.0
    %v539 = vmax.f32 %v384, 0.0
    %v540 = vmax.f32 %v387, 0.0
    %v541 = vmax.f32 %v389, 0.0
    %v542 = vmax.f32 %v392, 0.0
    %v543 = vmax.f32 %v394, 0.0
    %v544 = vmax.f32 %v397, 0.0
    %v545 = vmax.f32 %v399, 0.0
    %v546 = vmax.f32 %v402, 0.0
    %v547 = vmax.f32 %v404, 0.0
    %v548 = vmax.f32 %v407, 0.0
    %v549 = vmax.f32 %v409, 0.0
    %v550 = vmax.f32 %v412, 0.0
    %v551 = vmax.f32 %v414, 0.0
    %v552 = vmax.f32 %v417, 0.0
    %v553 = vmax.f32 %v419, 0.0
    %v554 = vmax.f32 %v422, 0.0
    %v555 = vmax.f32 %v424, 0.0
    %v556 = vmax.f32 %v427, 0.0
    %v557 = vmax.f32 %v429, 0.0
    %v558 = vmax.f32 %v432, 0.0
    %v559 = vmax.f32 %v434, 0.0
    %v560 = vmax.f32 %v437, 0.0
    %v561 = vmax.f32 %v439, 0.0
    %v562 = vmax.f32 %v442, 0.0
    %v563 = vmax.f32 %v444, 0.0
    %v564 = vmax.f32 %v447, 0.0
    %v565 = vmax.f32 %v449, 0.0
    %v566 = vmax.f32 %v452, 0.0
    %v567 = vmax.f32 %v454, 0.0
    %v568 = vmax.f32 %v457, 0.0
    %v569 = vmax.f32 %v459, 0.0
    %v570 = vmax.f32 %v462, 0.0
    %v571 = vmax.f32 %v464, 0.0
    %v572 = vmax.f32 %v467, 0.0
    %v573 = vmax.f32 %v469, 0.0
    %v574 = vmax.f32 %v472, 0.0
    %v575 = vmax.f32 %v474, 0.0
    %v576 = vmax.f32 %v477, 0.0
    %v577 = vmax.f32 %v479, 0.0
    %v578 = vmax.f32 %v482, 0.0
    %v579 = vmax.f32 %v484, 0.0
    %v580 = vmax.f32 %v487, 0.0
    %v581 = vmax.f32 %v489, 0.0
    %v582 = vmax.f32 %v492, 0.0
    %v583 = vmax.f32 %v494, 0.0
    %v584 = vmax.f32 %v497, 0.0
    %v585 = vmax.f32 %v499, 0.0
    %v586 = vmax.f32 %v502, 0.0
    %v587 = vmax.f32 %v504, 0.0
    %v588 = vmax.f32 %v507, 0.0
    %v589 = vmax.f32 %v509, 0.0
    %v590 = vmax.f32 %v512, 0.0
    %v591 = vmax.f32 %v514, 0.0
    %v592 = vmax.f32 %v517, 0.0
    %v593 = vmax.f32 %v519, 0.0
    %v594 = vmax.f32 %v522, 0.0
    %v595 = vmax.f32 %v524, 0.0
    %v596 = vmax.f32 %v527, 0.0
    %v597 = vmax.f32 %v529, 0.0
    %v598 = vmax.f32 %v532, 0.0
    %v599 = vmax.f32 %v534, 0.0
    %664 = vrot.lane.b32.xlu0 %v536, 112
    %v665 = vpop.permute.xlu0 %664
    %666 = vrot.lane.b32.xlu0 %v537, 112
    %v667 = vpop.permute.xlu0 %666
    %668 = vrot.lane.b32.xlu0 %v538, 112
    %v669 = vpop.permute.xlu0 %668
    %670 = vrot.lane.b32.xlu0 %v539, 112
    %v671 = vpop.permute.xlu0 %670
    %672 = vrot.lane.b32.xlu0 %v540, 112
    %v673 = vpop.permute.xlu0 %672
    %674 = vrot.lane.b32.xlu0 %v541, 112
    %v675 = vpop.permute.xlu0 %674
    %676 = vrot.lane.b32.xlu0 %v542, 112
    %v677 = vpop.permute.xlu0 %676
    %678 = vrot.lane.b32.xlu0 %v543, 112
    %v679 = vpop.permute.xlu0 %678
    %680 = vrot.lane.b32.xlu0 %v544, 112
    %v681 = vpop.permute.xlu0 %680
    %682 = vrot.lane.b32.xlu0 %v545, 112
    %v683 = vpop.permute.xlu0 %682
    %684 = vrot.lane.b32.xlu0 %v546, 112
    %v685 = vpop.permute.xlu0 %684
    %686 = vrot.lane.b32.xlu0 %v547, 112
    %v687 = vpop.permute.xlu0 %686
    %688 = vrot.lane.b32.xlu0 %v548, 112
    %v689 = vpop.permute.xlu0 %688
    %690 = vrot.lane.b32.xlu0 %v549, 112
    %v691 = vpop.permute.xlu0 %690
    %692 = vrot.lane.b32.xlu0 %v550, 112
    %v693 = vpop.permute.xlu0 %692
    %694 = vrot.lane.b32.xlu0 %v551, 112
    %v695 = vpop.permute.xlu0 %694
    %696 = vrot.lane.b32.xlu0 %v552, 112
    %v697 = vpop.permute.xlu0 %696
    %698 = vrot.lane.b32.xlu0 %v553, 112
    %v699 = vpop.permute.xlu0 %698
    %700 = vrot.lane.b32.xlu0 %v554, 112
    %v701 = vpop.permute.xlu0 %700
    %702 = vrot.lane.b32.xlu0 %v555, 112
    %v703 = vpop.permute.xlu0 %702
    %704 = vrot.lane.b32.xlu0 %v556, 112
    %v705 = vpop.permute.xlu0 %704
    %706 = vrot.lane.b32.xlu0 %v557, 112
    %v707 = vpop.permute.xlu0 %706
    %708 = vrot.lane.b32.xlu0 %v558, 112
    %v709 = vpop.permute.xlu0 %708
    %710 = vrot.lane.b32.xlu0 %v559, 112
    %v711 = vpop.permute.xlu0 %710
    %712 = vrot.lane.b32.xlu0 %v560, 112
    %v713 = vpop.permute.xlu0 %712
    %714 = vrot.lane.b32.xlu0 %v561, 112
    %v715 = vpop.permute.xlu0 %714
    %716 = vrot.lane.b32.xlu0 %v562, 112
    %v717 = vpop.permute.xlu0 %716
    %718 = vrot.lane.b32.xlu0 %v563, 112
    %v719 = vpop.permute.xlu0 %718
    %720 = vrot.lane.b32.xlu0 %v564, 112
    %v721 = vpop.permute.xlu0 %720
    %722 = vrot.lane.b32.xlu0 %v565, 112
    %v723 = vpop.permute.xlu0 %722
    %724 = vrot.lane.b32.xlu0 %v566, 112
    %v725 = vpop.permute.xlu0 %724
    %726 = vrot.lane.b32.xlu0 %v567, 112
    %v727 = vpop.permute.xlu0 %726
    %728 = vrot.lane.b32.xlu0 %v568, 112
    %v729 = vpop.permute.xlu0 %728
    %730 = vrot.lane.b32.xlu0 %v569, 112
    %v731 = vpop.permute.xlu0 %730
    %732 = vrot.lane.b32.xlu0 %v570, 112
    %v733 = vpop.permute.xlu0 %732
    %734 = vrot.lane.b32.xlu0 %v571, 112
    %v735 = vpop.permute.xlu0 %734
    %736 = vrot.lane.b32.xlu0 %v572, 112
    %v737 = vpop.permute.xlu0 %736
    %738 = vrot.lane.b32.xlu0 %v573, 112
    %v739 = vpop.permute.xlu0 %738
    %740 = vrot.lane.b32.xlu0 %v574, 112
    %v741 = vpop.permute.xlu0 %740
    %742 = vrot.lane.b32.xlu0 %v575, 112
    %v743 = vpop.permute.xlu0 %742
    %744 = vrot.lane.b32.xlu0 %v576, 112
    %v745 = vpop.permute.xlu0 %744
    %746 = vrot.lane.b32.xlu0 %v577, 112
    %v747 = vpop.permute.xlu0 %746
    %748 = vrot.lane.b32.xlu0 %v578, 112
    %v749 = vpop.permute.xlu0 %748
    %750 = vrot.lane.b32.xlu0 %v579, 112
    %v751 = vpop.permute.xlu0 %750
    %752 = vrot.lane.b32.xlu0 %v580, 112
    %v753 = vpop.permute.xlu0 %752
    %754 = vrot.lane.b32.xlu0 %v581, 112
    %v755 = vpop.permute.xlu0 %754
    %756 = vrot.lane.b32.xlu0 %v582, 112
    %v757 = vpop.permute.xlu0 %756
    %758 = vrot.lane.b32.xlu0 %v583, 112
    %v759 = vpop.permute.xlu0 %758
    %760 = vrot.lane.b32.xlu0 %v584, 112
    %v761 = vpop.permute.xlu0 %760
    %762 = vrot.lane.b32.xlu0 %v585, 112
    %v763 = vpop.permute.xlu0 %762
    %764 = vrot.lane.b32.xlu0 %v586, 112
    %v765 = vpop.permute.xlu0 %764
    %766 = vrot.lane.b32.xlu0 %v587, 112
    %v767 = vpop.permute.xlu0 %766
    %768 = vrot.lane.b32.xlu0 %v588, 112
    %v769 = vpop.permute.xlu0 %768
    %770 = vrot.lane.b32.xlu0 %v589, 112
    %v771 = vpop.permute.xlu0 %770
    %772 = vrot.lane.b32.xlu0 %v590, 112
    %v773 = vpop.permute.xlu0 %772
    %774 = vrot.lane.b32.xlu0 %v591, 112
    %v775 = vpop.permute.xlu0 %774
    %776 = vrot.lane.b32.xlu0 %v592, 112
    %v777 = vpop.permute.xlu0 %776
    %778 = vrot.lane.b32.xlu0 %v593, 112
    %v779 = vpop.permute.xlu0 %778
    %780 = vrot.lane.b32.xlu0 %v594, 112
    %v781 = vpop.permute.xlu0 %780
    %782 = vrot.lane.b32.xlu0 %v595, 112
    %v783 = vpop.permute.xlu0 %782
    %784 = vrot.lane.b32.xlu0 %v596, 112
    %v785 = vpop.permute.xlu0 %784
    %786 = vrot.lane.b32.xlu0 %v597, 112
    %v787 = vpop.permute.xlu0 %786
    %788 = vrot.lane.b32.xlu0 %v598, 112
    %v789 = vpop.permute.xlu0 %788
    %790 = vrot.lane.b32.xlu0 %v599, 112
    %v791 = vpop.permute.xlu0 %790
    %v856 = vmax.f32 %v536, %v665
    %v857 = vmax.f32 %v537, %v667
    %v858 = vmax.f32 %v538, %v669
    %v859 = vmax.f32 %v539, %v671
    %v860 = vmax.f32 %v540, %v673
    %v861 = vmax.f32 %v541, %v675
    %v862 = vmax.f32 %v542, %v677
    %v863 = vmax.f32 %v543, %v679
    %v864 = vmax.f32 %v544, %v681
    %v865 = vmax.f32 %v545, %v683
    %v866 = vmax.f32 %v546, %v685
    %v867 = vmax.f32 %v547, %v687
    %v868 = vmax.f32 %v548, %v689
    %v869 = vmax.f32 %v549, %v691
    %v870 = vmax.f32 %v550, %v693
    %v871 = vmax.f32 %v551, %v695
    %v872 = vmax.f32 %v552, %v697
    %v873 = vmax.f32 %v553, %v699
    %v874 = vmax.f32 %v554, %v701
    %v875 = vmax.f32 %v555, %v703
    %v876 = vmax.f32 %v556, %v705
    %v877 = vmax.f32 %v557, %v707
    %v878 = vmax.f32 %v558, %v709
    %v879 = vmax.f32 %v559, %v711
    %v880 = vmax.f32 %v560, %v713
    %v881 = vmax.f32 %v561, %v715
    %v882 = vmax.f32 %v562, %v717
    %v883 = vmax.f32 %v563, %v719
    %v884 = vmax.f32 %v564, %v721
    %v885 = vmax.f32 %v565, %v723
    %v886 = vmax.f32 %v566, %v725
    %v887 = vmax.f32 %v567, %v727
    %v888 = vmax.f32 %v568, %v729
    %v889 = vmax.f32 %v569, %v731
    %v890 = vmax.f32 %v570, %v733
    %v891 = vmax.f32 %v571, %v735
    %v892 = vmax.f32 %v572, %v737
    %v893 = vmax.f32 %v573, %v739
    %v894 = vmax.f32 %v574, %v741
    %v895 = vmax.f32 %v575, %v743
    %v896 = vmax.f32 %v576, %v745
    %v897 = vmax.f32 %v577, %v747
    %v898 = vmax.f32 %v578, %v749
    %v899 = vmax.f32 %v579, %v751
    %v900 = vmax.f32 %v580, %v753
    %v901 = vmax.f32 %v581, %v755
    %v902 = vmax.f32 %v582, %v757
    %v903 = vmax.f32 %v583, %v759
    %v904 = vmax.f32 %v584, %v761
    %v905 = vmax.f32 %v585, %v763
    %v906 = vmax.f32 %v586, %v765
    %v907 = vmax.f32 %v587, %v767
    %v908 = vmax.f32 %v588, %v769
    %v909 = vmax.f32 %v589, %v771
    %v910 = vmax.f32 %v590, %v773
    %v911 = vmax.f32 %v591, %v775
    %v912 = vmax.f32 %v592, %v777
    %v913 = vmax.f32 %v593, %v779
    %v914 = vmax.f32 %v594, %v781
    %v915 = vmax.f32 %v595, %v783
    %v916 = vmax.f32 %v596, %v785
    %v917 = vmax.f32 %v597, %v787
    %v918 = vmax.f32 %v598, %v789
    %v919 = vmax.f32 %v599, %v791
    %984 = vrot.lane.b32.xlu0 %v856, 96
    %v985 = vpop.permute.xlu0 %984
    %986 = vrot.lane.b32.xlu0 %v857, 96
    %v987 = vpop.permute.xlu0 %986
    %988 = vrot.lane.b32.xlu0 %v858, 96
    %v989 = vpop.permute.xlu0 %988
    %990 = vrot.lane.b32.xlu0 %v859, 96
    %v991 = vpop.permute.xlu0 %990
    %992 = vrot.lane.b32.xlu0 %v860, 96
    %v993 = vpop.permute.xlu0 %992
    %994 = vrot.lane.b32.xlu0 %v861, 96
    %v995 = vpop.permute.xlu0 %994
    %996 = vrot.lane.b32.xlu0 %v862, 96
    %v997 = vpop.permute.xlu0 %996
    %998 = vrot.lane.b32.xlu0 %v863, 96
    %v999 = vpop.permute.xlu0 %998
    %1000 = vrot.lane.b32.xlu0 %v864, 96
    %v1001 = vpop.permute.xlu0 %1000
    %1002 = vrot.lane.b32.xlu0 %v865, 96
    %v1003 = vpop.permute.xlu0 %1002
    %1004 = vrot.lane.b32.xlu0 %v866, 96
    %v1005 = vpop.permute.xlu0 %1004
    %1006 = vrot.lane.b32.xlu0 %v867, 96
    %v1007 = vpop.permute.xlu0 %1006
    %1008 = vrot.lane.b32.xlu0 %v868, 96
    %v1009 = vpop.permute.xlu0 %1008
    %1010 = vrot.lane.b32.xlu0 %v869, 96
    %v1011 = vpop.permute.xlu0 %1010
    %1012 = vrot.lane.b32.xlu0 %v870, 96
    %v1013 = vpop.permute.xlu0 %1012
    %1014 = vrot.lane.b32.xlu0 %v871, 96
    %v1015 = vpop.permute.xlu0 %1014
    %1016 = vrot.lane.b32.xlu0 %v872, 96
    %v1017 = vpop.permute.xlu0 %1016
    %1018 = vrot.lane.b32.xlu0 %v873, 96
    %v1019 = vpop.permute.xlu0 %1018
    %1020 = vrot.lane.b32.xlu0 %v874, 96
    %v1021 = vpop.permute.xlu0 %1020
    %1022 = vrot.lane.b32.xlu0 %v875, 96
    %v1023 = vpop.permute.xlu0 %1022
    %1024 = vrot.lane.b32.xlu0 %v876, 96
    %v1025 = vpop.permute.xlu0 %1024
    %1026 = vrot.lane.b32.xlu0 %v877, 96
    %v1027 = vpop.permute.xlu0 %1026
    %1028 = vrot.lane.b32.xlu0 %v878, 96
    %v1029 = vpop.permute.xlu0 %1028
    %1030 = vrot.lane.b32.xlu0 %v879, 96
    %v1031 = vpop.permute.xlu0 %1030
    %1032 = vrot.lane.b32.xlu0 %v880, 96
    %v1033 = vpop.permute.xlu0 %1032
    %1034 = vrot.lane.b32.xlu0 %v881, 96
    %v1035 = vpop.permute.xlu0 %1034
    %1036 = vrot.lane.b32.xlu0 %v882, 96
    %v1037 = vpop.permute.xlu0 %1036
    %1038 = vrot.lane.b32.xlu0 %v883, 96
    %v1039 = vpop.permute.xlu0 %1038
    %1040 = vrot.lane.b32.xlu0 %v884, 96
    %v1041 = vpop.permute.xlu0 %1040
    %1042 = vrot.lane.b32.xlu0 %v885, 96
    %v1043 = vpop.permute.xlu0 %1042
    %1044 = vrot.lane.b32.xlu0 %v886, 96
    %v1045 = vpop.permute.xlu0 %1044
    %1046 = vrot.lane.b32.xlu0 %v887, 96
    %v1047 = vpop.permute.xlu0 %1046
    %1048 = vrot.lane.b32.xlu0 %v888, 96
    %v1049 = vpop.permute.xlu0 %1048
    %1050 = vrot.lane.b32.xlu0 %v889, 96
    %v1051 = vpop.permute.xlu0 %1050
    %1052 = vrot.lane.b32.xlu0 %v890, 96
    %v1053 = vpop.permute.xlu0 %1052
    %1054 = vrot.lane.b32.xlu0 %v891, 96
    %v1055 = vpop.permute.xlu0 %1054
    %1056 = vrot.lane.b32.xlu0 %v892, 96
    %v1057 = vpop.permute.xlu0 %1056
    %1058 = vrot.lane.b32.xlu0 %v893, 96
    %v1059 = vpop.permute.xlu0 %1058
    %1060 = vrot.lane.b32.xlu0 %v894, 96
    %v1061 = vpop.permute.xlu0 %1060
    %1062 = vrot.lane.b32.xlu0 %v895, 96
    %v1063 = vpop.permute.xlu0 %1062
    %1064 = vrot.lane.b32.xlu0 %v896, 96
    %v1065 = vpop.permute.xlu0 %1064
    %1066 = vrot.lane.b32.xlu0 %v897, 96
    %v1067 = vpop.permute.xlu0 %1066
    %1068 = vrot.lane.b32.xlu0 %v898, 96
    %v1069 = vpop.permute.xlu0 %1068
    %1070 = vrot.lane.b32.xlu0 %v899, 96
    %v1071 = vpop.permute.xlu0 %1070
    %1072 = vrot.lane.b32.xlu0 %v900, 96
    %v1073 = vpop.permute.xlu0 %1072
    %1074 = vrot.lane.b32.xlu0 %v901, 96
    %v1075 = vpop.permute.xlu0 %1074
    %1076 = vrot.lane.b32.xlu0 %v902, 96
    %v1077 = vpop.permute.xlu0 %1076
    %1078 = vrot.lane.b32.xlu0 %v903, 96
    %v1079 = vpop.permute.xlu0 %1078
    %1080 = vrot.lane.b32.xlu0 %v904, 96
    %v1081 = vpop.permute.xlu0 %1080
    %1082 = vrot.lane.b32.xlu0 %v905, 96
    %v1083 = vpop.permute.xlu0 %1082
    %1084 = vrot.lane.b32.xlu0 %v906, 96
    %v1085 = vpop.permute.xlu0 %1084
    %1086 = vrot.lane.b32.xlu0 %v907, 96
    %v1087 = vpop.permute.xlu0 %1086
    %1088 = vrot.lane.b32.xlu0 %v908, 96
    %v1089 = vpop.permute.xlu0 %1088
    %1090 = vrot.lane.b32.xlu0 %v909, 96
    %v1091 = vpop.permute.xlu0 %1090
    %1092 = vrot.lane.b32.xlu0 %v910, 96
    %v1093 = vpop.permute.xlu0 %1092
    %1094 = vrot.lane.b32.xlu0 %v911, 96
    %v1095 = vpop.permute.xlu0 %1094
    %1096 = vrot.lane.b32.xlu0 %v912, 96
    %v1097 = vpop.permute.xlu0 %1096
    %1098 = vrot.lane.b32.xlu0 %v913, 96
    %v1099 = vpop.permute.xlu0 %1098
    %1100 = vrot.lane.b32.xlu0 %v914, 96
    %v1101 = vpop.permute.xlu0 %1100
    %1102 = vrot.lane.b32.xlu0 %v915, 96
    %v1103 = vpop.permute.xlu0 %1102
    %1104 = vrot.lane.b32.xlu0 %v916, 96
    %v1105 = vpop.permute.xlu0 %1104
    %1106 = vrot.lane.b32.xlu0 %v917, 96
    %v1107 = vpop.permute.xlu0 %1106
    %1108 = vrot.lane.b32.xlu0 %v918, 96
    %v1109 = vpop.permute.xlu0 %1108
    %1110 = vrot.lane.b32.xlu0 %v919, 96
    %v1111 = vpop.permute.xlu0 %1110
    %v1176 = vmax.f32 %v856, %v985
    %v1177 = vmax.f32 %v857, %v987
    %v1178 = vmax.f32 %v858, %v989
    %v1179 = vmax.f32 %v859, %v991
    %v1180 = vmax.f32 %v860, %v993
    %v1181 = vmax.f32 %v861, %v995
    %v1182 = vmax.f32 %v862, %v997
    %v1183 = vmax.f32 %v863, %v999
    %v1184 = vmax.f32 %v864, %v1001
    %v1185 = vmax.f32 %v865, %v1003
    %v1186 = vmax.f32 %v866, %v1005
    %v1187 = vmax.f32 %v867, %v1007
    %v1188 = vmax.f32 %v868, %v1009
    %v1189 = vmax.f32 %v869, %v1011
    %v1190 = vmax.f32 %v870, %v1013
    %v1191 = vmax.f32 %v871, %v1015
    %v1192 = vmax.f32 %v872, %v1017
    %v1193 = vmax.f32 %v873, %v1019
    %v1194 = vmax.f32 %v874, %v1021
    %v1195 = vmax.f32 %v875, %v1023
    %v1196 = vmax.f32 %v876, %v1025
    %v1197 = vmax.f32 %v877, %v1027
    %v1198 = vmax.f32 %v878, %v1029
    %v1199 = vmax.f32 %v879, %v1031
    %v1200 = vmax.f32 %v880, %v1033
    %v1201 = vmax.f32 %v881, %v1035
    %v1202 = vmax.f32 %v882, %v1037
    %v1203 = vmax.f32 %v883, %v1039
    %v1204 = vmax.f32 %v884, %v1041
    %v1205 = vmax.f32 %v885, %v1043
    %v1206 = vmax.f32 %v886, %v1045
    %v1207 = vmax.f32 %v887, %v1047
    %v1208 = vmax.f32 %v888, %v1049
    %v1209 = vmax.f32 %v889, %v1051
    %v1210 = vmax.f32 %v890, %v1053
    %v1211 = vmax.f32 %v891, %v1055
    %v1212 = vmax.f32 %v892, %v1057
    %v1213 = vmax.f32 %v893, %v1059
    %v1214 = vmax.f32 %v894, %v1061
    %v1215 = vmax.f32 %v895, %v1063
    %v1216 = vmax.f32 %v896, %v1065
    %v1217 = vmax.f32 %v897, %v1067
    %v1218 = vmax.f32 %v898, %v1069
    %v1219 = vmax.f32 %v899, %v1071
    %v1220 = vmax.f32 %v900, %v1073
    %v1221 = vmax.f32 %v901, %v1075
    %v1222 = vmax.f32 %v902, %v1077
    %v1223 = vmax.f32 %v903, %v1079
    %v1224 = vmax.f32 %v904, %v1081
    %v1225 = vmax.f32 %v905, %v1083
    %v1226 = vmax.f32 %v906, %v1085
    %v1227 = vmax.f32 %v907, %v1087
    %v1228 = vmax.f32 %v908, %v1089
    %v1229 = vmax.f32 %v909, %v1091
    %v1230 = vmax.f32 %v910, %v1093
    %v1231 = vmax.f32 %v911, %v1095
    %v1232 = vmax.f32 %v912, %v1097
    %v1233 = vmax.f32 %v913, %v1099
    %v1234 = vmax.f32 %v914, %v1101
    %v1235 = vmax.f32 %v915, %v1103
    %v1236 = vmax.f32 %v916, %v1105
    %v1237 = vmax.f32 %v917, %v1107
    %v1238 = vmax.f32 %v918, %v1109
    %v1239 = vmax.f32 %v919, %v1111
    %1242 = vrot.lane.b32.xlu0 %v1178, 16
    %v1243 = vpop.permute.xlu0 %1242
    %1244 = vrot.lane.b32.xlu0 %v1210, 16
    %v1245 = vpop.permute.xlu0 %1244
    %1250 = vrot.lane.b32.xlu0 %v1180, 32
    %v1251 = vpop.permute.xlu0 %1250
    %1252 = vrot.lane.b32.xlu0 %v1212, 32
    %v1253 = vpop.permute.xlu0 %1252
    %1258 = vrot.lane.b32.xlu0 %v1182, 48
    %v1259 = vpop.permute.xlu0 %1258
    %1260 = vrot.lane.b32.xlu0 %v1214, 48
    %v1261 = vpop.permute.xlu0 %1260
    %1266 = vrot.lane.b32.xlu0 %v1184, 64
    %v1267 = vpop.permute.xlu0 %1266
    %1268 = vrot.lane.b32.xlu0 %v1216, 64
    %v1269 = vpop.permute.xlu0 %1268
    %1274 = vrot.lane.b32.xlu0 %v1186, 80
    %v1275 = vpop.permute.xlu0 %1274
    %1276 = vrot.lane.b32.xlu0 %v1218, 80
    %v1277 = vpop.permute.xlu0 %1276
    %1282 = vrot.lane.b32.xlu0 %v1188, 96
    %v1283 = vpop.permute.xlu0 %1282
    %1284 = vrot.lane.b32.xlu0 %v1220, 96
    %v1285 = vpop.permute.xlu0 %1284
    %1290 = vrot.lane.b32.xlu0 %v1190, 112
    %v1291 = vpop.permute.xlu0 %1290
    %1292 = vrot.lane.b32.xlu0 %v1222, 112
    %v1293 = vpop.permute.xlu0 %1292
    %1298 = vrot.lane.b32.xlu0 %v1194, 16
    %v1299 = vpop.permute.xlu0 %1298
    %1300 = vrot.lane.b32.xlu0 %v1226, 16
    %v1301 = vpop.permute.xlu0 %1300
    %1306 = vrot.lane.b32.xlu0 %v1196, 32
    %v1307 = vpop.permute.xlu0 %1306
    %1308 = vrot.lane.b32.xlu0 %v1228, 32
    %v1309 = vpop.permute.xlu0 %1308
    %1314 = vrot.lane.b32.xlu0 %v1198, 48
    %v1315 = vpop.permute.xlu0 %1314
    %1316 = vrot.lane.b32.xlu0 %v1230, 48
    %v1317 = vpop.permute.xlu0 %1316
    %1322 = vrot.lane.b32.xlu0 %v1200, 64
    %v1323 = vpop.permute.xlu0 %1322
    %1324 = vrot.lane.b32.xlu0 %v1232, 64
    %v1325 = vpop.permute.xlu0 %1324
    %1330 = vrot.lane.b32.xlu0 %v1202, 80
    %v1331 = vpop.permute.xlu0 %1330
    %1332 = vrot.lane.b32.xlu0 %v1234, 80
    %v1333 = vpop.permute.xlu0 %1332
    %1338 = vrot.lane.b32.xlu0 %v1204, 96
    %v1339 = vpop.permute.xlu0 %1338
    %1340 = vrot.lane.b32.xlu0 %v1236, 96
    %v1341 = vpop.permute.xlu0 %1340
    %1346 = vrot.lane.b32.xlu0 %v1206, 112
    %v1347 = vpop.permute.xlu0 %1346
    %1348 = vrot.lane.b32.xlu0 %v1238, 112
    %v1349 = vpop.permute.xlu0 %1348
    %v1352 = vsel %vm270, %v1176, %v1243
    %v1353 = vsel %vm270, %v1208, %v1245
    %vm1354 = vcmask 261120
    %v1355 = vsel %vm1354, %v1352, %v1251
    %v1356 = vsel %vm1354, %v1353, %v1253
    %vm1357 = vcmask 392192
    %v1358 = vsel %vm1357, %v1355, %v1259
    %v1359 = vsel %vm1357, %v1356, %v1261
    %vm1360 = vcmask 523264
    %v1361 = vsel %vm1360, %v1358, %v1267
    %v1362 = vsel %vm1360, %v1359, %v1269
    %vm1363 = vcmask 654336
    %v1364 = vsel %vm1363, %v1361, %v1275
    %v1365 = vsel %vm1363, %v1362, %v1277
    %vm1366 = vcmask 785408
    %v1367 = vsel %vm1366, %v1364, %v1283
    %v1368 = vsel %vm1366, %v1365, %v1285
    %vm1369 = vcmask 916480
    %v1370 = vsel %vm1369, %v1367, %v1291
    %v1371 = vsel %vm1369, %v1368, %v1293
    %v1372 = vsel %vm270, %v1192, %v1299
    %v1373 = vsel %vm270, %v1224, %v1301
    %v1374 = vsel %vm1354, %v1372, %v1307
    %v1375 = vsel %vm1354, %v1373, %v1309
    %v1376 = vsel %vm1357, %v1374, %v1315
    %v1377 = vsel %vm1357, %v1375, %v1317
    %v1378 = vsel %vm1360, %v1376, %v1323
    %v1379 = vsel %vm1360, %v1377, %v1325
    %v1380 = vsel %vm1363, %v1378, %v1331
    %v1381 = vsel %vm1363, %v1379, %v1333
    %v1382 = vsel %vm1366, %v1380, %v1339
    %v1383 = vsel %vm1366, %v1381, %v1341
    %v1384 = vsel %vm1369, %v1382, %v1347
    %v1385 = vsel %vm1369, %v1383, %v1349
    %1388 = vrot.lane.b32.xlu0 %v1179, 16
    %v1389 = vpop.permute.xlu0 %1388
    %1390 = vrot.lane.b32.xlu0 %v1211, 16
    %v1391 = vpop.permute.xlu0 %1390
    %1396 = vrot.lane.b32.xlu0 %v1181, 32
    %v1397 = vpop.permute.xlu0 %1396
    %1398 = vrot.lane.b32.xlu0 %v1213, 32
    %v1399 = vpop.permute.xlu0 %1398
    %1404 = vrot.lane.b32.xlu0 %v1183, 48
    %v1405 = vpop.permute.xlu0 %1404
    %1406 = vrot.lane.b32.xlu0 %v1215, 48
    %v1407 = vpop.permute.xlu0 %1406
    %1412 = vrot.lane.b32.xlu0 %v1185, 64
    %v1413 = vpop.permute.xlu0 %1412
    %1414 = vrot.lane.b32.xlu0 %v1217, 64
    %v1415 = vpop.permute.xlu0 %1414
    %1420 = vrot.lane.b32.xlu0 %v1187, 80
    %v1421 = vpop.permute.xlu0 %1420
    %1422 = vrot.lane.b32.xlu0 %v1219, 80
    %v1423 = vpop.permute.xlu0 %1422
    %1428 = vrot.lane.b32.xlu0 %v1189, 96
    %v1429 = vpop.permute.xlu0 %1428
    %1430 = vrot.lane.b32.xlu0 %v1221, 96
    %v1431 = vpop.permute.xlu0 %1430
    %1436 = vrot.lane.b32.xlu0 %v1191, 112
    %v1437 = vpop.permute.xlu0 %1436
    %1438 = vrot.lane.b32.xlu0 %v1223, 112
    %v1439 = vpop.permute.xlu0 %1438
    %1444 = vrot.lane.b32.xlu0 %v1195, 16
    %v1445 = vpop.permute.xlu0 %1444
    %1446 = vrot.lane.b32.xlu0 %v1227, 16
    %v1447 = vpop.permute.xlu0 %1446
    %1452 = vrot.lane.b32.xlu0 %v1197, 32
    %v1453 = vpop.permute.xlu0 %1452
    %1454 = vrot.lane.b32.xlu0 %v1229, 32
    %v1455 = vpop.permute.xlu0 %1454
    %1460 = vrot.lane.b32.xlu0 %v1199, 48
    %v1461 = vpop.permute.xlu0 %1460
    %1462 = vrot.lane.b32.xlu0 %v1231, 48
    %v1463 = vpop.permute.xlu0 %1462
    %1468 = vrot.lane.b32.xlu0 %v1201, 64
    %v1469 = vpop.permute.xlu0 %1468
    %1470 = vrot.lane.b32.xlu0 %v1233, 64
    %v1471 = vpop.permute.xlu0 %1470
    %1476 = vrot.lane.b32.xlu0 %v1203, 80
    %v1477 = vpop.permute.xlu0 %1476
    %1478 = vrot.lane.b32.xlu0 %v1235, 80
    %v1479 = vpop.permute.xlu0 %1478
    %1484 = vrot.lane.b32.xlu0 %v1205, 96
    %v1485 = vpop.permute.xlu0 %1484
    %1486 = vrot.lane.b32.xlu0 %v1237, 96
    %v1487 = vpop.permute.xlu0 %1486
    %1492 = vrot.lane.b32.xlu0 %v1207, 112
    %v1493 = vpop.permute.xlu0 %1492
    %1494 = vrot.lane.b32.xlu0 %v1239, 112
    %v1495 = vpop.permute.xlu0 %1494
    %v1498 = vsel %vm270, %v1177, %v1389
    %v1499 = vsel %vm270, %v1209, %v1391
    %v1500 = vsel %vm1354, %v1498, %v1397
    %v1501 = vsel %vm1354, %v1499, %v1399
    %v1502 = vsel %vm1357, %v1500, %v1405
    %v1503 = vsel %vm1357, %v1501, %v1407
    %v1504 = vsel %vm1360, %v1502, %v1413
    %v1505 = vsel %vm1360, %v1503, %v1415
    %v1506 = vsel %vm1363, %v1504, %v1421
    %v1507 = vsel %vm1363, %v1505, %v1423
    %v1508 = vsel %vm1366, %v1506, %v1429
    %v1509 = vsel %vm1366, %v1507, %v1431
    %v1510 = vsel %vm1369, %v1508, %v1437
    %v1511 = vsel %vm1369, %v1509, %v1439
    %v1512 = vsel %vm270, %v1193, %v1445
    %v1513 = vsel %vm270, %v1225, %v1447
    %v1514 = vsel %vm1354, %v1512, %v1453
    %v1515 = vsel %vm1354, %v1513, %v1455
    %v1516 = vsel %vm1357, %v1514, %v1461
    %v1517 = vsel %vm1357, %v1515, %v1463
    %v1518 = vsel %vm1360, %v1516, %v1469
    %v1519 = vsel %vm1360, %v1517, %v1471
    %v1520 = vsel %vm1363, %v1518, %v1477
    %v1521 = vsel %vm1363, %v1519, %v1479
    %v1522 = vsel %vm1366, %v1520, %v1485
    %v1523 = vsel %vm1366, %v1521, %v1487
    %v1524 = vsel %vm1369, %v1522, %v1493
    %v1525 = vsel %vm1369, %v1523, %v1495
    %v1526 = vlaneseq
    %v1527 = vshrl.u32 %v1526, 7
    %vm1528 = vcmp.eq.s32.totalorder %v1527, 0
    %v1529 = vrot.slane %v1510, 7
    %v1530 = vrot.slane %v1524, 7
    %v1531 = vrot.slane %v1511, 7
    %v1532 = vrot.slane %v1525, 7
    %v1533 = vsel %vm1528, 0.0, %v1529
    %v1534 = vsel %vm1528, 0.0, %v1530
    %v1535 = vsel %vm1528, 0.0, %v1531
    %v1536 = vsel %vm1528, 0.0, %v1532
    %vm1537 = vcmp.eq.s32.totalorder %v1527, 7
    %v1538 = vrot.slane %v1370, 1
    %v1539 = vrot.slane %v1384, 1
    %v1540 = vrot.slane %v1371, 1
    %v1541 = vrot.slane %v1385, 1
    %v1542 = vsel %vm1537, 0.0, %v1538
    %v1543 = vsel %vm1537, 0.0, %v1539
    %v1544 = vsel %vm1537, 0.0, %v1540
    %v1545 = vsel %vm1537, 0.0, %v1541
    %1550 = vrot.lane.b32.xlu0 %v1533, 16
    %v1551 = vpop.permute.xlu0 %1550
    %1552 = vrot.lane.b32.xlu0 %v1534, 16
    %v1553 = vpop.permute.xlu0 %1552
    %1554 = vrot.lane.b32.xlu0 %v1535, 16
    %v1555 = vpop.permute.xlu0 %1554
    %1556 = vrot.lane.b32.xlu0 %v1536, 16
    %v1557 = vpop.permute.xlu0 %1556
    %v1558 = vsel %vm270, %v1551, %v1553
    %v1559 = vsel %vm270, %v1555, %v1557
    %v1566 = vsel %vm270, 0.0, %v1551
    %v1567 = vsel %vm270, 0.0, %v1555
    %v1568 = vsel %vm270, %v1553, 0.0
    %v1569 = vsel %vm270, %v1557, 0.0
    %1574 = vrot.lane.b32.xlu0 %v1370, 16
    %v1575 = vpop.permute.xlu0 %1574
    %1576 = vrot.lane.b32.xlu0 %v1384, 16
    %v1577 = vpop.permute.xlu0 %1576
    %1578 = vrot.lane.b32.xlu0 %v1371, 16
    %v1579 = vpop.permute.xlu0 %1578
    %1580 = vrot.lane.b32.xlu0 %v1385, 16
    %v1581 = vpop.permute.xlu0 %1580
    %v1582 = vsel %vm270, %v1575, %v1577
    %v1583 = vsel %vm270, %v1579, %v1581
    %v1590 = vsel %vm270, 0.0, %v1575
    %v1591 = vsel %vm270, 0.0, %v1579
    %v1592 = vsel %vm270, %v1577, 0.0
    %v1593 = vsel %vm270, %v1581, 0.0
    %1598 = vrot.lane.b32.xlu0 %v1510, 16
    %v1599 = vpop.permute.xlu0 %1598
    %1600 = vrot.lane.b32.xlu0 %v1524, 16
    %v1601 = vpop.permute.xlu0 %1600
    %1602 = vrot.lane.b32.xlu0 %v1511, 16
    %v1603 = vpop.permute.xlu0 %1602
    %1604 = vrot.lane.b32.xlu0 %v1525, 16
    %v1605 = vpop.permute.xlu0 %1604
    %v1606 = vsel %vm270, %v1599, %v1601
    %v1607 = vsel %vm270, %v1603, %v1605
    %v1614 = vsel %vm270, 0.0, %v1599
    %v1615 = vsel %vm270, 0.0, %v1603
    %v1616 = vsel %vm270, %v1601, 0.0
    %v1617 = vsel %vm270, %v1605, 0.0
    %1622 = vrot.lane.b32.xlu0 %v1542, 16
    %v1623 = vpop.permute.xlu0 %1622
    %1624 = vrot.lane.b32.xlu0 %v1543, 16
    %v1625 = vpop.permute.xlu0 %1624
    %1626 = vrot.lane.b32.xlu0 %v1544, 16
    %v1627 = vpop.permute.xlu0 %1626
    %1628 = vrot.lane.b32.xlu0 %v1545, 16
    %v1629 = vpop.permute.xlu0 %1628
    %v1630 = vsel %vm270, %v1623, %v1625
    %v1631 = vsel %vm270, %v1627, %v1629
    %v1638 = vsel %vm270, 0.0, %v1623
    %v1639 = vsel %vm270, 0.0, %v1627
    %v1640 = vsel %vm270, %v1625, 0.0
    %v1641 = vsel %vm270, %v1629, 0.0
    %1644 = vrot.lane.b32.xlu0 %v1590, 64
    %v1645 = vpop.permute.xlu0 %1644
    %1646 = vrot.lane.b32.xlu0 %v1591, 64
    %v1647 = vpop.permute.xlu0 %1646
    %1652 = vrot.lane.b32.xlu0 %v1638, 64
    %v1653 = vpop.permute.xlu0 %1652
    %1654 = vrot.lane.b32.xlu0 %v1639, 64
    %v1655 = vpop.permute.xlu0 %1654
    %v1658 = vsel %vm1360, %v1566, %v1645
    %v1659 = vsel %vm1360, %v1567, %v1647
    %v1660 = vsel %vm1360, %v1614, %v1653
    %v1661 = vsel %vm1360, %v1615, %v1655
    %1664 = vrot.lane.b32.xlu0 %v1566, 96
    %v1665 = vpop.permute.xlu0 %1664
    %1666 = vrot.lane.b32.xlu0 %v1567, 96
    %v1667 = vpop.permute.xlu0 %1666
    %1670 = vrot.lane.b32.xlu0 %v1590, 32
    %v1671 = vpop.permute.xlu0 %1670
    %1672 = vrot.lane.b32.xlu0 %v1591, 32
    %v1673 = vpop.permute.xlu0 %1672
    %1678 = vrot.lane.b32.xlu0 %v1614, 96
    %v1679 = vpop.permute.xlu0 %1678
    %1680 = vrot.lane.b32.xlu0 %v1615, 96
    %v1681 = vpop.permute.xlu0 %1680
    %1684 = vrot.lane.b32.xlu0 %v1638, 32
    %v1685 = vpop.permute.xlu0 %1684
    %1686 = vrot.lane.b32.xlu0 %v1639, 32
    %v1687 = vpop.permute.xlu0 %1686
    %v1690 = vsel %vm1360, %v1665, %v1671
    %v1691 = vsel %vm1360, %v1667, %v1673
    %v1692 = vsel %vm1360, %v1679, %v1685
    %v1693 = vsel %vm1360, %v1681, %v1687
    %1694 = vrot.lane.b32.xlu0 %v1566, 64
    %v1695 = vpop.permute.xlu0 %1694
    %1696 = vrot.lane.b32.xlu0 %v1567, 64
    %v1697 = vpop.permute.xlu0 %1696
    %1700 = vrot.lane.b32.xlu0 %v1614, 64
    %v1701 = vpop.permute.xlu0 %1700
    %1702 = vrot.lane.b32.xlu0 %v1615, 64
    %v1703 = vpop.permute.xlu0 %1702
    %v1706 = vsel %vm1360, %v1695, %v1590
    %v1707 = vsel %vm1360, %v1697, %v1591
    %v1708 = vsel %vm1360, %v1701, %v1638
    %v1709 = vsel %vm1360, %v1703, %v1639
    %1710 = vrot.lane.b32.xlu0 %v1566, 32
    %v1711 = vpop.permute.xlu0 %1710
    %1712 = vrot.lane.b32.xlu0 %v1558, 32
    %v1713 = vpop.permute.xlu0 %1712
    %1714 = vrot.lane.b32.xlu0 %v1567, 32
    %v1715 = vpop.permute.xlu0 %1714
    %1716 = vrot.lane.b32.xlu0 %v1559, 32
    %v1717 = vpop.permute.xlu0 %1716
    %v1718 = vsel %vm1354, %v1711, %v1713
    %v1719 = vsel %vm1354, %v1715, %v1717
    %1722 = vrot.lane.b32.xlu0 %v1590, 96
    %v1723 = vpop.permute.xlu0 %1722
    %1724 = vrot.lane.b32.xlu0 %v1582, 96
    %v1725 = vpop.permute.xlu0 %1724
    %1726 = vrot.lane.b32.xlu0 %v1591, 96
    %v1727 = vpop.permute.xlu0 %1726
    %1728 = vrot.lane.b32.xlu0 %v1583, 96
    %v1729 = vpop.permute.xlu0 %1728
    %v1730 = vsel %vm1366, %v1723, %v1725
    %v1731 = vsel %vm1366, %v1727, %v1729
    %1734 = vrot.lane.b32.xlu0 %v1614, 32
    %v1735 = vpop.permute.xlu0 %1734
    %1736 = vrot.lane.b32.xlu0 %v1606, 32
    %v1737 = vpop.permute.xlu0 %1736
    %1738 = vrot.lane.b32.xlu0 %v1615, 32
    %v1739 = vpop.permute.xlu0 %1738
    %1740 = vrot.lane.b32.xlu0 %v1607, 32
    %v1741 = vpop.permute.xlu0 %1740
    %v1742 = vsel %vm1354, %v1735, %v1737
    %v1743 = vsel %vm1354, %v1739, %v1741
    %1746 = vrot.lane.b32.xlu0 %v1638, 96
    %v1747 = vpop.permute.xlu0 %1746
    %1748 = vrot.lane.b32.xlu0 %v1630, 96
    %v1749 = vpop.permute.xlu0 %1748
    %1750 = vrot.lane.b32.xlu0 %v1639, 96
    %v1751 = vpop.permute.xlu0 %1750
    %1752 = vrot.lane.b32.xlu0 %v1631, 96
    %v1753 = vpop.permute.xlu0 %1752
    %v1754 = vsel %vm1366, %v1747, %v1749
    %v1755 = vsel %vm1366, %v1751, %v1753
    %v1758 = vsel %vm1360, %v1718, %v1730
    %v1759 = vsel %vm1360, %v1719, %v1731
    %v1760 = vsel %vm1360, %v1742, %v1754
    %v1761 = vsel %vm1360, %v1743, %v1755
    %1762 = vrot.lane.b32.xlu0 %v1582, 64
    %v1763 = vpop.permute.xlu0 %1762
    %1764 = vrot.lane.b32.xlu0 %v1583, 64
    %v1765 = vpop.permute.xlu0 %1764
    %1768 = vrot.lane.b32.xlu0 %v1630, 64
    %v1769 = vpop.permute.xlu0 %1768
    %1770 = vrot.lane.b32.xlu0 %v1631, 64
    %v1771 = vpop.permute.xlu0 %1770
    %v1774 = vsel %vm1360, %v1558, %v1763
    %v1775 = vsel %vm1360, %v1559, %v1765
    %v1776 = vsel %vm1360, %v1606, %v1769
    %v1777 = vsel %vm1360, %v1607, %v1771
    %1778 = vrot.lane.b32.xlu0 %v1558, 96
    %v1779 = vpop.permute.xlu0 %1778
    %1780 = vrot.lane.b32.xlu0 %v1559, 96
    %v1781 = vpop.permute.xlu0 %1780
    %1784 = vrot.lane.b32.xlu0 %v1582, 32
    %v1785 = vpop.permute.xlu0 %1784
    %1786 = vrot.lane.b32.xlu0 %v1583, 32
    %v1787 = vpop.permute.xlu0 %1786
    %1790 = vrot.lane.b32.xlu0 %v1606, 96
    %v1791 = vpop.permute.xlu0 %1790
    %1792 = vrot.lane.b32.xlu0 %v1607, 96
    %v1793 = vpop.permute.xlu0 %1792
    %1796 = vrot.lane.b32.xlu0 %v1630, 32
    %v1797 = vpop.permute.xlu0 %1796
    %1798 = vrot.lane.b32.xlu0 %v1631, 32
    %v1799 = vpop.permute.xlu0 %1798
    %v1802 = vsel %vm1360, %v1779, %v1785
    %v1803 = vsel %vm1360, %v1781, %v1787
    %v1804 = vsel %vm1360, %v1791, %v1797
    %v1805 = vsel %vm1360, %v1793, %v1799
    %1806 = vrot.lane.b32.xlu0 %v1558, 64
    %v1807 = vpop.permute.xlu0 %1806
    %1808 = vrot.lane.b32.xlu0 %v1559, 64
    %v1809 = vpop.permute.xlu0 %1808
    %1812 = vrot.lane.b32.xlu0 %v1606, 64
    %v1813 = vpop.permute.xlu0 %1812
    %1814 = vrot.lane.b32.xlu0 %v1607, 64
    %v1815 = vpop.permute.xlu0 %1814
    %v1818 = vsel %vm1360, %v1807, %v1582
    %v1819 = vsel %vm1360, %v1809, %v1583
    %v1820 = vsel %vm1360, %v1813, %v1630
    %v1821 = vsel %vm1360, %v1815, %v1631
    %1824 = vrot.lane.b32.xlu0 %v1568, 32
    %v1825 = vpop.permute.xlu0 %1824
    %1826 = vrot.lane.b32.xlu0 %v1569, 32
    %v1827 = vpop.permute.xlu0 %1826
    %v1828 = vsel %vm1354, %v1713, %v1825
    %v1829 = vsel %vm1354, %v1717, %v1827
    %1834 = vrot.lane.b32.xlu0 %v1592, 96
    %v1835 = vpop.permute.xlu0 %1834
    %1836 = vrot.lane.b32.xlu0 %v1593, 96
    %v1837 = vpop.permute.xlu0 %1836
    %v1838 = vsel %vm1366, %v1725, %v1835
    %v1839 = vsel %vm1366, %v1729, %v1837
    %1844 = vrot.lane.b32.xlu0 %v1616, 32
    %v1845 = vpop.permute.xlu0 %1844
    %1846 = vrot.lane.b32.xlu0 %v1617, 32
    %v1847 = vpop.permute.xlu0 %1846
    %v1848 = vsel %vm1354, %v1737, %v1845
    %v1849 = vsel %vm1354, %v1741, %v1847
    %1854 = vrot.lane.b32.xlu0 %v1640, 96
    %v1855 = vpop.permute.xlu0 %1854
    %1856 = vrot.lane.b32.xlu0 %v1641, 96
    %v1857 = vpop.permute.xlu0 %1856
    %v1858 = vsel %vm1366, %v1749, %v1855
    %v1859 = vsel %vm1366, %v1753, %v1857
    %v1862 = vsel %vm1360, %v1828, %v1838
    %v1863 = vsel %vm1360, %v1829, %v1839
    %v1864 = vsel %vm1360, %v1848, %v1858
    %v1865 = vsel %vm1360, %v1849, %v1859
    %v1866 = vpack.c.bf16 %v1690, %v1658
    %v1867 = vpack.c.bf16 %v1692, %v1660
    %v1868 = vpack.c.bf16 %v1758, %v1706
    %v1869 = vpack.c.bf16 %v1760, %v1708
    %v1870 = vpack.c.bf16 %v1802, %v1774
    %v1871 = vpack.c.bf16 %v1804, %v1776
    %v1872 = vpack.c.bf16 %v1862, %v1818
    %v1873 = vpack.c.bf16 %v1864, %v1820
    %v1874 = vpack.c.bf16 %v1691, %v1659
    %v1875 = vpack.c.bf16 %v1693, %v1661
    %v1876 = vpack.c.bf16 %v1759, %v1707
    %v1877 = vpack.c.bf16 %v1761, %v1709
    %v1878 = vpack.c.bf16 %v1803, %v1775
    %v1879 = vpack.c.bf16 %v1805, %v1777
    %v1880 = vpack.c.bf16 %v1863, %v1819
    %v1881 = vpack.c.bf16 %v1865, %v1821
    %v1882 = vld [vmem:[%s3] sm:$0xf]
    %v1883 = vld [vmem:[%s3 + $0x4] sm:$0xf]
    %v1884 = vld [vmem:[%s3 + $0x8] sm:$0xf]
    %v1885 = vld [vmem:[%s3 + $0xc] sm:$0xf]
    %v1886 = vld [vmem:[%s3 + $0x10] sm:$0xf]
    %v1887 = vld [vmem:[%s3 + $0x14] sm:$0xf]
    %v1888 = vld [vmem:[%s3 + $0x18] sm:$0xf]
    %v1889 = vld [vmem:[%s3 + $0x1c] sm:$0xf]
    %v1890 = vld [vmem:[%s3 + $0x20] sm:$0xf]
    %v1891 = vld [vmem:[%s3 + $0x24] sm:$0xf]
    %v1892 = vld [vmem:[%s3 + $0x28] sm:$0xf]
    %v1893 = vld [vmem:[%s3 + $0x2c] sm:$0xf]
    %v1894 = vld [vmem:[%s3 + $0x30] sm:$0xf]
    %v1895 = vld [vmem:[%s3 + $0x34] sm:$0xf]
    %v1896 = vld [vmem:[%s3 + $0x38] sm:$0xf]
    %v1897 = vld [vmem:[%s3 + $0x3c] sm:$0xf]
    %v1898 = vld [vmem:[%s3 + $0x40] sm:$0xf]
    %v1899 = vld [vmem:[%s3 + $0x44] sm:$0xf]
    %v1900 = vld [vmem:[%s3 + $0x48] sm:$0xf]
    %v1901 = vld [vmem:[%s3 + $0x4c] sm:$0xf]
    %v1902 = vld [vmem:[%s3 + $0x50] sm:$0xf]
    %v1903 = vld [vmem:[%s3 + $0x54] sm:$0xf]
    %v1904 = vld [vmem:[%s3 + $0x58] sm:$0xf]
    %v1905 = vld [vmem:[%s3 + $0x5c] sm:$0xf]
    %v1906 = vld [vmem:[%s3 + $0x60] sm:$0xf]
    %v1907 = vld [vmem:[%s3 + $0x64] sm:$0xf]
    %v1908 = vld [vmem:[%s3 + $0x68] sm:$0xf]
    %v1909 = vld [vmem:[%s3 + $0x6c] sm:$0xf]
    %v1910 = vld [vmem:[%s3 + $0x70] sm:$0xf]
    %v1911 = vld [vmem:[%s3 + $0x74] sm:$0xf]
    %v1912 = vld [vmem:[%s3 + $0x78] sm:$0xf]
    %v1913 = vld [vmem:[%s3 + $0x7c] sm:$0xf]
    %v1914 = vld [vmem:[%s4] sm:$0x1]
    %v1916 = vperm.slane %v1914, 0
    %v1950 = vunpack.c.l.b16 %v1882
    %v1951 = vunpack.c.l.b16 %v1883
    %v1952 = vunpack.c.l.b16 %v1884
    %v1953 = vunpack.c.l.b16 %v1885
    %v1954 = vunpack.c.l.b16 %v1886
    %v1955 = vunpack.c.l.b16 %v1887
    %v1956 = vunpack.c.l.b16 %v1888
    %v1957 = vunpack.c.l.b16 %v1889
    %v1958 = vunpack.c.l.b16 %v1890
    %v1959 = vunpack.c.l.b16 %v1891
    %v1960 = vunpack.c.l.b16 %v1892
    %v1961 = vunpack.c.l.b16 %v1893
    %v1962 = vunpack.c.l.b16 %v1894
    %v1963 = vunpack.c.l.b16 %v1895
    %v1964 = vunpack.c.l.b16 %v1896
    %v1965 = vunpack.c.l.b16 %v1897
    %v1966 = vunpack.c.l.b16 %v1898
    %v1967 = vunpack.c.l.b16 %v1899
    %v1968 = vunpack.c.l.b16 %v1900
    %v1969 = vunpack.c.l.b16 %v1901
    %v1970 = vunpack.c.l.b16 %v1902
    %v1971 = vunpack.c.l.b16 %v1903
    %v1972 = vunpack.c.l.b16 %v1904
    %v1973 = vunpack.c.l.b16 %v1905
    %v1974 = vunpack.c.l.b16 %v1906
    %v1975 = vunpack.c.l.b16 %v1907
    %v1976 = vunpack.c.l.b16 %v1908
    %v1977 = vunpack.c.l.b16 %v1909
    %v1978 = vunpack.c.l.b16 %v1910
    %v1979 = vunpack.c.l.b16 %v1911
    %v1980 = vunpack.c.l.b16 %v1912
    %v1981 = vunpack.c.l.b16 %v1913
    %v1982 = vpack.c.b16 %v1951, %v1950
    %v1983 = vpack.c.b16 %v1953, %v1952
    %v1984 = vpack.c.b16 %v1955, %v1954
    %v1985 = vpack.c.b16 %v1957, %v1956
    %v1986 = vpack.c.b16 %v1959, %v1958
    %v1987 = vpack.c.b16 %v1961, %v1960
    %v1988 = vpack.c.b16 %v1963, %v1962
    %v1989 = vpack.c.b16 %v1965, %v1964
    %v1990 = vpack.c.b16 %v1967, %v1966
    %v1991 = vpack.c.b16 %v1969, %v1968
    %v1992 = vpack.c.b16 %v1971, %v1970
    %v1993 = vpack.c.b16 %v1973, %v1972
    %v1994 = vpack.c.b16 %v1975, %v1974
    %v1995 = vpack.c.b16 %v1977, %v1976
    %v1996 = vpack.c.b16 %v1979, %v1978
    %v1997 = vpack.c.b16 %v1981, %v1980
    %2014 = vmatpush.bf16.msra.mxu0 %v1989
    %2015 = vmatpush.bf16.msra.mxu0 %v1988
    %2016 = vmatpush.bf16.msra.mxu0 %v1987
    %2017 = vmatpush.bf16.msra.mxu0 %v1986
    %2018 = vmatpush.bf16.msra.mxu0 %v1985
    %2019 = vmatpush.bf16.msra.mxu0 %v1984
    %2020 = vmatpush.bf16.msra.mxu0 %v1983
    %2021 = vmatpush.bf16.msra.mxu0 %v1982
    %2022 = vmatmul.bf16.gmra.mxu0 %v1866
    %v2023 = vpop.f32.mrf.mxu0
    %v2024 = vadd.f32 %v1916, %v2023
    %v2025 = vpop.f32.mrf.mxu0
    %v2026 = vadd.f32 %v1916, %v2025
    %2027 = vmatmul.bf16.gmra.mxu0 %v1868
    %v2028 = vpop.f32.mrf.mxu0
    %v2029 = vadd.f32 %v1916, %v2028
    %v2030 = vpop.f32.mrf.mxu0
    %v2031 = vadd.f32 %v1916, %v2030
    %2032 = vmatmul.bf16.gmra.mxu0 %v1870
    %v2033 = vpop.f32.mrf.mxu0
    %v2034 = vadd.f32 %v1916, %v2033
    %v2035 = vpop.f32.mrf.mxu0
    %v2036 = vadd.f32 %v1916, %v2035
    %2037 = vmatmul.bf16.gmra.mxu0 %v1872
    %v2038 = vpop.f32.mrf.mxu0
    %v2039 = vadd.f32 %v1916, %v2038
    %v2040 = vpop.f32.mrf.mxu0
    %v2041 = vadd.f32 %v1916, %v2040
    %2042 = vmatmul.bf16.gmra.mxu0 %v1874
    %v2043 = vpop.f32.mrf.mxu0
    %v2044 = vadd.f32 %v1916, %v2043
    %v2045 = vpop.f32.mrf.mxu0
    %v2046 = vadd.f32 %v1916, %v2045
    %2047 = vmatmul.bf16.gmra.mxu0 %v1876
    %v2048 = vpop.f32.mrf.mxu0
    %v2049 = vadd.f32 %v1916, %v2048
    %v2050 = vpop.f32.mrf.mxu0
    %v2051 = vadd.f32 %v1916, %v2050
    %2052 = vmatmul.bf16.gmra.mxu0 %v1878
    %v2053 = vpop.f32.mrf.mxu0
    %v2054 = vadd.f32 %v1916, %v2053
    %v2055 = vpop.f32.mrf.mxu0
    %v2056 = vadd.f32 %v1916, %v2055
    %2057 = vmatmul.bf16.gmra.mxu0 %v1880
    %v2058 = vpop.f32.mrf.mxu0
    %v2059 = vadd.f32 %v1916, %v2058
    %v2060 = vpop.f32.mrf.mxu0
    %v2061 = vadd.f32 %v1916, %v2060
    %2062 = vdwg.mxu0
    %2063 = vmatpush.bf16.msra.mxu0 %v1997
    %2064 = vmatpush.bf16.msra.mxu0 %v1996
    %2065 = vmatpush.bf16.msra.mxu0 %v1995
    %2066 = vmatpush.bf16.msra.mxu0 %v1994
    %2067 = vmatpush.bf16.msra.mxu0 %v1993
    %2068 = vmatpush.bf16.msra.mxu0 %v1992
    %2069 = vmatpush.bf16.msra.mxu0 %v1991
    %2070 = vmatpush.bf16.msra.mxu0 %v1990
    %2071 = vmatmul.bf16.gmra.mxu0 %v1867
    %v2072 = vpop.f32.mrf.mxu0
    %v2073 = vadd.f32 %v2024, %v2072
    %v2074 = vpop.f32.mrf.mxu0
    %v2075 = vadd.f32 %v2026, %v2074
    %2076 = vmatmul.bf16.gmra.mxu0 %v1869
    %v2077 = vpop.f32.mrf.mxu0
    %v2078 = vadd.f32 %v2029, %v2077
    %v2079 = vpop.f32.mrf.mxu0
    %v2080 = vadd.f32 %v2031, %v2079
    %2081 = vmatmul.bf16.gmra.mxu0 %v1871
    %v2082 = vpop.f32.mrf.mxu0
    %v2083 = vadd.f32 %v2034, %v2082
    %v2084 = vpop.f32.mrf.mxu0
    %v2085 = vadd.f32 %v2036, %v2084
    %2086 = vmatmul.bf16.gmra.mxu0 %v1873
    %v2087 = vpop.f32.mrf.mxu0
    %v2088 = vadd.f32 %v2039, %v2087
    %v2089 = vpop.f32.mrf.mxu0
    %v2090 = vadd.f32 %v2041, %v2089
    %2091 = vmatmul.bf16.gmra.mxu0 %v1875
    %v2092 = vpop.f32.mrf.mxu0
    %v2093 = vadd.f32 %v2044, %v2092
    %v2094 = vpop.f32.mrf.mxu0
    %v2095 = vadd.f32 %v2046, %v2094
    %2096 = vmatmul.bf16.gmra.mxu0 %v1877
    %v2097 = vpop.f32.mrf.mxu0
    %v2098 = vadd.f32 %v2049, %v2097
    %v2099 = vpop.f32.mrf.mxu0
    %v2100 = vadd.f32 %v2051, %v2099
    %2101 = vmatmul.bf16.gmra.mxu0 %v1879
    %v2102 = vpop.f32.mrf.mxu0
    %v2103 = vadd.f32 %v2054, %v2102
    %v2104 = vpop.f32.mrf.mxu0
    %v2105 = vadd.f32 %v2056, %v2104
    %2106 = vmatmul.bf16.gmra.mxu0 %v1881
    %v2107 = vpop.f32.mrf.mxu0
    %v2108 = vadd.f32 %v2059, %v2107
    %v2109 = vpop.f32.mrf.mxu0
    %v2110 = vadd.f32 %v2061, %v2109
    %2111 = vdwg.mxu0
    %v2112 = vmax.f32 %v2073, 0.0
    %v2113 = vmax.f32 %v2075, 0.0
    %v2114 = vmax.f32 %v2078, 0.0
    %v2115 = vmax.f32 %v2080, 0.0
    %v2116 = vmax.f32 %v2083, 0.0
    %v2117 = vmax.f32 %v2085, 0.0
    %v2118 = vmax.f32 %v2088, 0.0
    %v2119 = vmax.f32 %v2090, 0.0
    %v2120 = vmax.f32 %v2093, 0.0
    %v2121 = vmax.f32 %v2095, 0.0
    %v2122 = vmax.f32 %v2098, 0.0
    %v2123 = vmax.f32 %v2100, 0.0
    %v2124 = vmax.f32 %v2103, 0.0
    %v2125 = vmax.f32 %v2105, 0.0
    %v2126 = vmax.f32 %v2108, 0.0
    %v2127 = vmax.f32 %v2110, 0.0
    %2144 = vrot.lane.b32.xlu0 %v2112, 96
    %v2145 = vpop.permute.xlu0 %2144
    %2146 = vrot.lane.b32.xlu0 %v2113, 96
    %v2147 = vpop.permute.xlu0 %2146
    %2148 = vrot.lane.b32.xlu0 %v2114, 96
    %v2149 = vpop.permute.xlu0 %2148
    %2150 = vrot.lane.b32.xlu0 %v2115, 96
    %v2151 = vpop.permute.xlu0 %2150
    %2152 = vrot.lane.b32.xlu0 %v2116, 96
    %v2153 = vpop.permute.xlu0 %2152
    %2154 = vrot.lane.b32.xlu0 %v2117, 96
    %v2155 = vpop.permute.xlu0 %2154
    %2156 = vrot.lane.b32.xlu0 %v2118, 96
    %v2157 = vpop.permute.xlu0 %2156
    %2158 = vrot.lane.b32.xlu0 %v2119, 96
    %v2159 = vpop.permute.xlu0 %2158
    %2160 = vrot.lane.b32.xlu0 %v2120, 96
    %v2161 = vpop.permute.xlu0 %2160
    %2162 = vrot.lane.b32.xlu0 %v2121, 96
    %v2163 = vpop.permute.xlu0 %2162
    %2164 = vrot.lane.b32.xlu0 %v2122, 96
    %v2165 = vpop.permute.xlu0 %2164
    %2166 = vrot.lane.b32.xlu0 %v2123, 96
    %v2167 = vpop.permute.xlu0 %2166
    %2168 = vrot.lane.b32.xlu0 %v2124, 96
    %v2169 = vpop.permute.xlu0 %2168
    %2170 = vrot.lane.b32.xlu0 %v2125, 96
    %v2171 = vpop.permute.xlu0 %2170
    %2172 = vrot.lane.b32.xlu0 %v2126, 96
    %v2173 = vpop.permute.xlu0 %2172
    %2174 = vrot.lane.b32.xlu0 %v2127, 96
    %v2175 = vpop.permute.xlu0 %2174
    %v2192 = vmax.f32 %v2112, %v2145
    %v2193 = vmax.f32 %v2113, %v2147
    %v2194 = vmax.f32 %v2114, %v2149
    %v2195 = vmax.f32 %v2115, %v2151
    %v2196 = vmax.f32 %v2116, %v2153
    %v2197 = vmax.f32 %v2117, %v2155
    %v2198 = vmax.f32 %v2118, %v2157
    %v2199 = vmax.f32 %v2119, %v2159
    %v2200 = vmax.f32 %v2120, %v2161
    %v2201 = vmax.f32 %v2121, %v2163
    %v2202 = vmax.f32 %v2122, %v2165
    %v2203 = vmax.f32 %v2123, %v2167
    %v2204 = vmax.f32 %v2124, %v2169
    %v2205 = vmax.f32 %v2125, %v2171
    %v2206 = vmax.f32 %v2126, %v2173
    %v2207 = vmax.f32 %v2127, %v2175
    %2224 = vrot.lane.b32.xlu0 %v2192, 64
    %v2225 = vpop.permute.xlu0 %2224
    %2226 = vrot.lane.b32.xlu0 %v2193, 64
    %v2227 = vpop.permute.xlu0 %2226
    %2228 = vrot.lane.b32.xlu0 %v2194, 64
    %v2229 = vpop.permute.xlu0 %2228
    %2230 = vrot.lane.b32.xlu0 %v2195, 64
    %v2231 = vpop.permute.xlu0 %2230
    %2232 = vrot.lane.b32.xlu0 %v2196, 64
    %v2233 = vpop.permute.xlu0 %2232
    %2234 = vrot.lane.b32.xlu0 %v2197, 64
    %v2235 = vpop.permute.xlu0 %2234
    %2236 = vrot.lane.b32.xlu0 %v2198, 64
    %v2237 = vpop.permute.xlu0 %2236
    %2238 = vrot.lane.b32.xlu0 %v2199, 64
    %v2239 = vpop.permute.xlu0 %2238
    %2240 = vrot.lane.b32.xlu0 %v2200, 64
    %v2241 = vpop.permute.xlu0 %2240
    %2242 = vrot.lane.b32.xlu0 %v2201, 64
    %v2243 = vpop.permute.xlu0 %2242
    %2244 = vrot.lane.b32.xlu0 %v2202, 64
    %v2245 = vpop.permute.xlu0 %2244
    %2246 = vrot.lane.b32.xlu0 %v2203, 64
    %v2247 = vpop.permute.xlu0 %2246
    %2248 = vrot.lane.b32.xlu0 %v2204, 64
    %v2249 = vpop.permute.xlu0 %2248
    %2250 = vrot.lane.b32.xlu0 %v2205, 64
    %v2251 = vpop.permute.xlu0 %2250
    %2252 = vrot.lane.b32.xlu0 %v2206, 64
    %v2253 = vpop.permute.xlu0 %2252
    %2254 = vrot.lane.b32.xlu0 %v2207, 64
    %v2255 = vpop.permute.xlu0 %2254
    %v2272 = vmax.f32 %v2192, %v2225
    %v2273 = vmax.f32 %v2193, %v2227
    %v2274 = vmax.f32 %v2194, %v2229
    %v2275 = vmax.f32 %v2195, %v2231
    %v2276 = vmax.f32 %v2196, %v2233
    %v2277 = vmax.f32 %v2197, %v2235
    %v2278 = vmax.f32 %v2198, %v2237
    %v2279 = vmax.f32 %v2199, %v2239
    %v2280 = vmax.f32 %v2200, %v2241
    %v2281 = vmax.f32 %v2201, %v2243
    %v2282 = vmax.f32 %v2202, %v2245
    %v2283 = vmax.f32 %v2203, %v2247
    %v2284 = vmax.f32 %v2204, %v2249
    %v2285 = vmax.f32 %v2205, %v2251
    %v2286 = vmax.f32 %v2206, %v2253
    %v2287 = vmax.f32 %v2207, %v2255
    %v2288 = vpack.c.bf16 %v2272, %v2272
    %v2289 = vpack.c.bf16 %v2273, %v2273
    %v2290 = vpack.c.bf16 %v2274, %v2274
    %v2291 = vpack.c.bf16 %v2275, %v2275
    %v2292 = vpack.c.bf16 %v2276, %v2276
    %v2293 = vpack.c.bf16 %v2277, %v2277
    %v2294 = vpack.c.bf16 %v2278, %v2278
    %v2295 = vpack.c.bf16 %v2279, %v2279
    %v2296 = vpack.c.bf16 %v2280, %v2280
    %v2297 = vpack.c.bf16 %v2281, %v2281
    %v2298 = vpack.c.bf16 %v2282, %v2282
    %v2299 = vpack.c.bf16 %v2283, %v2283
    %v2300 = vpack.c.bf16 %v2284, %v2284
    %v2301 = vpack.c.bf16 %v2285, %v2285
    %v2302 = vpack.c.bf16 %v2286, %v2286
    %v2303 = vpack.c.bf16 %v2287, %v2287
    %v2306 = vunpack.c.l.b16 %v2288
    %v2307 = vunpack.c.l.b16 %v2296
    %v2308 = vpack.c.b16 %v2306, %v2306
    %v2309 = vpack.c.b16 %v2307, %v2307
    %v2310 = vunpack.c.l.b16 %v2308
    %v2311 = vunpack.c.l.b16 %v2309
    %v2312 = vrot.slane %v2311, 7
    %vm2313 = vcmask 1041409
    %v2314 = vsel %vm2313, %v2312, %v2310
    %v2315 = vpack.c.b16 %v2314, %v2314
    %v2316 = vrot.slane %v2310, 1
    %v2317 = vsel %vm2313, %v2311, %v2316
    %v2318 = vpack.c.b16 %v2317, %v2317
    %2319 = vrot.lane.b32.xlu0 %v2318, 32
    %v2320 = vpop.permute.xlu0 %2319
    %v2321 = vrot.slane %v2310, 2
    %v2322 = vrot.slane %v2311, 1
    %v2323 = vsel %vm2313, %v2322, %v2321
    %v2324 = vpack.c.b16 %v2323, %v2323
    %2325 = vrot.lane.b32.xlu0 %v2324, 64
    %v2326 = vpop.permute.xlu0 %2325
    %v2327 = vrot.slane %v2310, 3
    %v2328 = vrot.slane %v2311, 2
    %v2329 = vsel %vm2313, %v2328, %v2327
    %v2330 = vpack.c.b16 %v2329, %v2329
    %2331 = vrot.lane.b32.xlu0 %v2330, 96
    %v2332 = vpop.permute.xlu0 %2331
    %v2333 = vrot.slane %v2310, 4
    %v2334 = vrot.slane %v2311, 3
    %v2335 = vsel %vm2313, %v2334, %v2333
    %v2336 = vpack.c.b16 %v2335, %v2335
    %v2337 = vrot.slane %v2310, 5
    %v2338 = vrot.slane %v2311, 4
    %v2339 = vsel %vm2313, %v2338, %v2337
    %v2340 = vpack.c.b16 %v2339, %v2339
    %2341 = vrot.lane.b32.xlu0 %v2340, 32
    %v2342 = vpop.permute.xlu0 %2341
    %v2343 = vrot.slane %v2310, 6
    %v2344 = vrot.slane %v2311, 5
    %v2345 = vsel %vm2313, %v2344, %v2343
    %v2346 = vpack.c.b16 %v2345, %v2345
    %2347 = vrot.lane.b32.xlu0 %v2346, 64
    %v2348 = vpop.permute.xlu0 %2347
    %v2349 = vrot.slane %v2310, 7
    %v2350 = vrot.slane %v2311, 6
    %v2351 = vsel %vm2313, %v2350, %v2349
    %v2352 = vpack.c.b16 %v2351, %v2351
    %2353 = vrot.lane.b32.xlu0 %v2352, 96
    %v2354 = vpop.permute.xlu0 %2353
    %v2357 = vunpack.c.l.b16 %v2289
    %v2358 = vunpack.c.l.b16 %v2297
    %v2359 = vpack.c.b16 %v2357, %v2357
    %v2360 = vpack.c.b16 %v2358, %v2358
    %v2361 = vunpack.c.l.b16 %v2359
    %v2362 = vunpack.c.l.b16 %v2360
    %v2363 = vrot.slane %v2362, 7
    %v2364 = vsel %vm2313, %v2363, %v2361
    %v2365 = vpack.c.b16 %v2364, %v2364
    %v2366 = vrot.slane %v2361, 1
    %v2367 = vsel %vm2313, %v2362, %v2366
    %v2368 = vpack.c.b16 %v2367, %v2367
    %2369 = vrot.lane.b32.xlu0 %v2368, 32
    %v2370 = vpop.permute.xlu0 %2369
    %v2371 = vrot.slane %v2361, 2
    %v2372 = vrot.slane %v2362, 1
    %v2373 = vsel %vm2313, %v2372, %v2371
    %v2374 = vpack.c.b16 %v2373, %v2373
    %2375 = vrot.lane.b32.xlu0 %v2374, 64
    %v2376 = vpop.permute.xlu0 %2375
    %v2377 = vrot.slane %v2361, 3
    %v2378 = vrot.slane %v2362, 2
    %v2379 = vsel %vm2313, %v2378, %v2377
    %v2380 = vpack.c.b16 %v2379, %v2379
    %2381 = vrot.lane.b32.xlu0 %v2380, 96
    %v2382 = vpop.permute.xlu0 %2381
    %v2383 = vrot.slane %v2361, 4
    %v2384 = vrot.slane %v2362, 3
    %v2385 = vsel %vm2313, %v2384, %v2383
    %v2386 = vpack.c.b16 %v2385, %v2385
    %v2387 = vrot.slane %v2361, 5
    %v2388 = vrot.slane %v2362, 4
    %v2389 = vsel %vm2313, %v2388, %v2387
    %v2390 = vpack.c.b16 %v2389, %v2389
    %2391 = vrot.lane.b32.xlu0 %v2390, 32
    %v2392 = vpop.permute.xlu0 %2391
    %v2393 = vrot.slane %v2361, 6
    %v2394 = vrot.slane %v2362, 5
    %v2395 = vsel %vm2313, %v2394, %v2393
    %v2396 = vpack.c.b16 %v2395, %v2395
    %2397 = vrot.lane.b32.xlu0 %v2396, 64
    %v2398 = vpop.permute.xlu0 %2397
    %v2399 = vrot.slane %v2361, 7
    %v2400 = vrot.slane %v2362, 6
    %v2401 = vsel %vm2313, %v2400, %v2399
    %v2402 = vpack.c.b16 %v2401, %v2401
    %2403 = vrot.lane.b32.xlu0 %v2402, 96
    %v2404 = vpop.permute.xlu0 %2403
    %v2407 = vsel %vm1354, %v2315, %v2320
    %v2409 = vsel %vm1360, %v2407, %v2326
    %v2411 = vsel %vm1366, %v2409, %v2332
    %v2415 = vsel %vm1354, %v2336, %v2342
    %v2417 = vsel %vm1360, %v2415, %v2348
    %v2419 = vsel %vm1366, %v2417, %v2354
    %v2423 = vsel %vm1354, %v2365, %v2370
    %v2425 = vsel %vm1360, %v2423, %v2376
    %v2427 = vsel %vm1366, %v2425, %v2382
    %v2431 = vsel %vm1354, %v2386, %v2392
    %v2433 = vsel %vm1360, %v2431, %v2398
    %v2435 = vsel %vm1366, %v2433, %v2404
    %v2439 = vunpack.c.l.b16 %v2290
    %v2440 = vunpack.c.l.b16 %v2298
    %v2441 = vpack.c.b16 %v2439, %v2439
    %v2442 = vpack.c.b16 %v2440, %v2440
    %v2443 = vunpack.c.l.b16 %v2441
    %v2444 = vunpack.c.l.b16 %v2442
    %v2445 = vrot.slane %v2444, 7
    %v2446 = vsel %vm2313, %v2445, %v2443
    %v2447 = vpack.c.b16 %v2446, %v2446
    %v2448 = vrot.slane %v2443, 1
    %v2449 = vsel %vm2313, %v2444, %v2448
    %v2450 = vpack.c.b16 %v2449, %v2449
    %2451 = vrot.lane.b32.xlu0 %v2450, 32
    %v2452 = vpop.permute.xlu0 %2451
    %v2453 = vrot.slane %v2443, 2
    %v2454 = vrot.slane %v2444, 1
    %v2455 = vsel %vm2313, %v2454, %v2453
    %v2456 = vpack.c.b16 %v2455, %v2455
    %2457 = vrot.lane.b32.xlu0 %v2456, 64
    %v2458 = vpop.permute.xlu0 %2457
    %v2459 = vrot.slane %v2443, 3
    %v2460 = vrot.slane %v2444, 2
    %v2461 = vsel %vm2313, %v2460, %v2459
    %v2462 = vpack.c.b16 %v2461, %v2461
    %2463 = vrot.lane.b32.xlu0 %v2462, 96
    %v2464 = vpop.permute.xlu0 %2463
    %v2465 = vrot.slane %v2443, 4
    %v2466 = vrot.slane %v2444, 3
    %v2467 = vsel %vm2313, %v2466, %v2465
    %v2468 = vpack.c.b16 %v2467, %v2467
    %v2469 = vrot.slane %v2443, 5
    %v2470 = vrot.slane %v2444, 4
    %v2471 = vsel %vm2313, %v2470, %v2469
    %v2472 = vpack.c.b16 %v2471, %v2471
    %2473 = vrot.lane.b32.xlu0 %v2472, 32
    %v2474 = vpop.permute.xlu0 %2473
    %v2475 = vrot.slane %v2443, 6
    %v2476 = vrot.slane %v2444, 5
    %v2477 = vsel %vm2313, %v2476, %v2475
    %v2478 = vpack.c.b16 %v2477, %v2477
    %2479 = vrot.lane.b32.xlu0 %v2478, 64
    %v2480 = vpop.permute.xlu0 %2479
    %v2481 = vrot.slane %v2443, 7
    %v2482 = vrot.slane %v2444, 6
    %v2483 = vsel %vm2313, %v2482, %v2481
    %v2484 = vpack.c.b16 %v2483, %v2483
    %2485 = vrot.lane.b32.xlu0 %v2484, 96
    %v2486 = vpop.permute.xlu0 %2485
    %v2489 = vunpack.c.l.b16 %v2291
    %v2490 = vunpack.c.l.b16 %v2299
    %v2491 = vpack.c.b16 %v2489, %v2489
    %v2492 = vpack.c.b16 %v2490, %v2490
    %v2493 = vunpack.c.l.b16 %v2491
    %v2494 = vunpack.c.l.b16 %v2492
    %v2495 = vrot.slane %v2494, 7
    %v2496 = vsel %vm2313, %v2495, %v2493
    %v2497 = vpack.c.b16 %v2496, %v2496
    %v2498 = vrot.slane %v2493, 1
    %v2499 = vsel %vm2313, %v2494, %v2498
    %v2500 = vpack.c.b16 %v2499, %v2499
    %2501 = vrot.lane.b32.xlu0 %v2500, 32
    %v2502 = vpop.permute.xlu0 %2501
    %v2503 = vrot.slane %v2493, 2
    %v2504 = vrot.slane %v2494, 1
    %v2505 = vsel %vm2313, %v2504, %v2503
    %v2506 = vpack.c.b16 %v2505, %v2505
    %2507 = vrot.lane.b32.xlu0 %v2506, 64
    %v2508 = vpop.permute.xlu0 %2507
    %v2509 = vrot.slane %v2493, 3
    %v2510 = vrot.slane %v2494, 2
    %v2511 = vsel %vm2313, %v2510, %v2509
    %v2512 = vpack.c.b16 %v2511, %v2511
    %2513 = vrot.lane.b32.xlu0 %v2512, 96
    %v2514 = vpop.permute.xlu0 %2513
    %v2515 = vrot.slane %v2493, 4
    %v2516 = vrot.slane %v2494, 3
    %v2517 = vsel %vm2313, %v2516, %v2515
    %v2518 = vpack.c.b16 %v2517, %v2517
    %v2519 = vrot.slane %v2493, 5
    %v2520 = vrot.slane %v2494, 4
    %v2521 = vsel %vm2313, %v2520, %v2519
    %v2522 = vpack.c.b16 %v2521, %v2521
    %2523 = vrot.lane.b32.xlu0 %v2522, 32
    %v2524 = vpop.permute.xlu0 %2523
    %v2525 = vrot.slane %v2493, 6
    %v2526 = vrot.slane %v2494, 5
    %v2527 = vsel %vm2313, %v2526, %v2525
    %v2528 = vpack.c.b16 %v2527, %v2527
    %2529 = vrot.lane.b32.xlu0 %v2528, 64
    %v2530 = vpop.permute.xlu0 %2529
    %v2531 = vrot.slane %v2493, 7
    %v2532 = vrot.slane %v2494, 6
    %v2533 = vsel %vm2313, %v2532, %v2531
    %v2534 = vpack.c.b16 %v2533, %v2533
    %2535 = vrot.lane.b32.xlu0 %v2534, 96
    %v2536 = vpop.permute.xlu0 %2535
    %v2539 = vsel %vm1354, %v2447, %v2452
    %v2541 = vsel %vm1360, %v2539, %v2458
    %v2543 = vsel %vm1366, %v2541, %v2464
    %v2547 = vsel %vm1354, %v2468, %v2474
    %v2549 = vsel %vm1360, %v2547, %v2480
    %v2551 = vsel %vm1366, %v2549, %v2486
    %v2555 = vsel %vm1354, %v2497, %v2502
    %v2557 = vsel %vm1360, %v2555, %v2508
    %v2559 = vsel %vm1366, %v2557, %v2514
    %v2563 = vsel %vm1354, %v2518, %v2524
    %v2565 = vsel %vm1360, %v2563, %v2530
    %v2567 = vsel %vm1366, %v2565, %v2536
    %v2571 = vunpack.c.l.b16 %v2292
    %v2572 = vunpack.c.l.b16 %v2300
    %v2573 = vpack.c.b16 %v2571, %v2571
    %v2574 = vpack.c.b16 %v2572, %v2572
    %v2575 = vunpack.c.l.b16 %v2573
    %v2576 = vunpack.c.l.b16 %v2574
    %v2577 = vrot.slane %v2576, 7
    %v2578 = vsel %vm2313, %v2577, %v2575
    %v2579 = vpack.c.b16 %v2578, %v2578
    %v2580 = vrot.slane %v2575, 1
    %v2581 = vsel %vm2313, %v2576, %v2580
    %v2582 = vpack.c.b16 %v2581, %v2581
    %2583 = vrot.lane.b32.xlu0 %v2582, 32
    %v2584 = vpop.permute.xlu0 %2583
    %v2585 = vrot.slane %v2575, 2
    %v2586 = vrot.slane %v2576, 1
    %v2587 = vsel %vm2313, %v2586, %v2585
    %v2588 = vpack.c.b16 %v2587, %v2587
    %2589 = vrot.lane.b32.xlu0 %v2588, 64
    %v2590 = vpop.permute.xlu0 %2589
    %v2591 = vrot.slane %v2575, 3
    %v2592 = vrot.slane %v2576, 2
    %v2593 = vsel %vm2313, %v2592, %v2591
    %v2594 = vpack.c.b16 %v2593, %v2593
    %2595 = vrot.lane.b32.xlu0 %v2594, 96
    %v2596 = vpop.permute.xlu0 %2595
    %v2597 = vrot.slane %v2575, 4
    %v2598 = vrot.slane %v2576, 3
    %v2599 = vsel %vm2313, %v2598, %v2597
    %v2600 = vpack.c.b16 %v2599, %v2599
    %v2601 = vrot.slane %v2575, 5
    %v2602 = vrot.slane %v2576, 4
    %v2603 = vsel %vm2313, %v2602, %v2601
    %v2604 = vpack.c.b16 %v2603, %v2603
    %2605 = vrot.lane.b32.xlu0 %v2604, 32
    %v2606 = vpop.permute.xlu0 %2605
    %v2607 = vrot.slane %v2575, 6
    %v2608 = vrot.slane %v2576, 5
    %v2609 = vsel %vm2313, %v2608, %v2607
    %v2610 = vpack.c.b16 %v2609, %v2609
    %2611 = vrot.lane.b32.xlu0 %v2610, 64
    %v2612 = vpop.permute.xlu0 %2611
    %v2613 = vrot.slane %v2575, 7
    %v2614 = vrot.slane %v2576, 6
    %v2615 = vsel %vm2313, %v2614, %v2613
    %v2616 = vpack.c.b16 %v2615, %v2615
    %2617 = vrot.lane.b32.xlu0 %v2616, 96
    %v2618 = vpop.permute.xlu0 %2617
    %v2621 = vunpack.c.l.b16 %v2293
    %v2622 = vunpack.c.l.b16 %v2301
    %v2623 = vpack.c.b16 %v2621, %v2621
    %v2624 = vpack.c.b16 %v2622, %v2622
    %v2625 = vunpack.c.l.b16 %v2623
    %v2626 = vunpack.c.l.b16 %v2624
    %v2627 = vrot.slane %v2626, 7
    %v2628 = vsel %vm2313, %v2627, %v2625
    %v2629 = vpack.c.b16 %v2628, %v2628
    %v2630 = vrot.slane %v2625, 1
    %v2631 = vsel %vm2313, %v2626, %v2630
    %v2632 = vpack.c.b16 %v2631, %v2631
    %2633 = vrot.lane.b32.xlu0 %v2632, 32
    %v2634 = vpop.permute.xlu0 %2633
    %v2635 = vrot.slane %v2625, 2
    %v2636 = vrot.slane %v2626, 1
    %v2637 = vsel %vm2313, %v2636, %v2635
    %v2638 = vpack.c.b16 %v2637, %v2637
    %2639 = vrot.lane.b32.xlu0 %v2638, 64
    %v2640 = vpop.permute.xlu0 %2639
    %v2641 = vrot.slane %v2625, 3
    %v2642 = vrot.slane %v2626, 2
    %v2643 = vsel %vm2313, %v2642, %v2641
    %v2644 = vpack.c.b16 %v2643, %v2643
    %2645 = vrot.lane.b32.xlu0 %v2644, 96
    %v2646 = vpop.permute.xlu0 %2645
    %v2647 = vrot.slane %v2625, 4
    %v2648 = vrot.slane %v2626, 3
    %v2649 = vsel %vm2313, %v2648, %v2647
    %v2650 = vpack.c.b16 %v2649, %v2649
    %v2651 = vrot.slane %v2625, 5
    %v2652 = vrot.slane %v2626, 4
    %v2653 = vsel %vm2313, %v2652, %v2651
    %v2654 = vpack.c.b16 %v2653, %v2653
    %2655 = vrot.lane.b32.xlu0 %v2654, 32
    %v2656 = vpop.permute.xlu0 %2655
    %v2657 = vrot.slane %v2625, 6
    %v2658 = vrot.slane %v2626, 5
    %v2659 = vsel %vm2313, %v2658, %v2657
    %v2660 = vpack.c.b16 %v2659, %v2659
    %2661 = vrot.lane.b32.xlu0 %v2660, 64
    %v2662 = vpop.permute.xlu0 %2661
    %v2663 = vrot.slane %v2625, 7
    %v2664 = vrot.slane %v2626, 6
    %v2665 = vsel %vm2313, %v2664, %v2663
    %v2666 = vpack.c.b16 %v2665, %v2665
    %2667 = vrot.lane.b32.xlu0 %v2666, 96
    %v2668 = vpop.permute.xlu0 %2667
    %v2671 = vsel %vm1354, %v2579, %v2584
    %v2673 = vsel %vm1360, %v2671, %v2590
    %v2675 = vsel %vm1366, %v2673, %v2596
    %v2679 = vsel %vm1354, %v2600, %v2606
    %v2681 = vsel %vm1360, %v2679, %v2612
    %v2683 = vsel %vm1366, %v2681, %v2618
    %v2687 = vsel %vm1354, %v2629, %v2634
    %v2689 = vsel %vm1360, %v2687, %v2640
    %v2691 = vsel %vm1366, %v2689, %v2646
    %v2695 = vsel %vm1354, %v2650, %v2656
    %v2697 = vsel %vm1360, %v2695, %v2662
    %v2699 = vsel %vm1366, %v2697, %v2668
    %v2703 = vunpack.c.l.b16 %v2294
    %v2704 = vunpack.c.l.b16 %v2302
    %v2705 = vpack.c.b16 %v2703, %v2703
    %v2706 = vpack.c.b16 %v2704, %v2704
    %v2707 = vunpack.c.l.b16 %v2705
    %v2708 = vunpack.c.l.b16 %v2706
    %v2709 = vrot.slane %v2708, 7
    %v2710 = vsel %vm2313, %v2709, %v2707
    %v2711 = vpack.c.b16 %v2710, %v2710
    %v2712 = vrot.slane %v2707, 1
    %v2713 = vsel %vm2313, %v2708, %v2712
    %v2714 = vpack.c.b16 %v2713, %v2713
    %2715 = vrot.lane.b32.xlu0 %v2714, 32
    %v2716 = vpop.permute.xlu0 %2715
    %v2717 = vrot.slane %v2707, 2
    %v2718 = vrot.slane %v2708, 1
    %v2719 = vsel %vm2313, %v2718, %v2717
    %v2720 = vpack.c.b16 %v2719, %v2719
    %2721 = vrot.lane.b32.xlu0 %v2720, 64
    %v2722 = vpop.permute.xlu0 %2721
    %v2723 = vrot.slane %v2707, 3
    %v2724 = vrot.slane %v2708, 2
    %v2725 = vsel %vm2313, %v2724, %v2723
    %v2726 = vpack.c.b16 %v2725, %v2725
    %2727 = vrot.lane.b32.xlu0 %v2726, 96
    %v2728 = vpop.permute.xlu0 %2727
    %v2729 = vrot.slane %v2707, 4
    %v2730 = vrot.slane %v2708, 3
    %v2731 = vsel %vm2313, %v2730, %v2729
    %v2732 = vpack.c.b16 %v2731, %v2731
    %v2733 = vrot.slane %v2707, 5
    %v2734 = vrot.slane %v2708, 4
    %v2735 = vsel %vm2313, %v2734, %v2733
    %v2736 = vpack.c.b16 %v2735, %v2735
    %2737 = vrot.lane.b32.xlu0 %v2736, 32
    %v2738 = vpop.permute.xlu0 %2737
    %v2739 = vrot.slane %v2707, 6
    %v2740 = vrot.slane %v2708, 5
    %v2741 = vsel %vm2313, %v2740, %v2739
    %v2742 = vpack.c.b16 %v2741, %v2741
    %2743 = vrot.lane.b32.xlu0 %v2742, 64
    %v2744 = vpop.permute.xlu0 %2743
    %v2745 = vrot.slane %v2707, 7
    %v2746 = vrot.slane %v2708, 6
    %v2747 = vsel %vm2313, %v2746, %v2745
    %v2748 = vpack.c.b16 %v2747, %v2747
    %2749 = vrot.lane.b32.xlu0 %v2748, 96
    %v2750 = vpop.permute.xlu0 %2749
    %v2753 = vunpack.c.l.b16 %v2295
    %v2754 = vunpack.c.l.b16 %v2303
    %v2755 = vpack.c.b16 %v2753, %v2753
    %v2756 = vpack.c.b16 %v2754, %v2754
    %v2757 = vunpack.c.l.b16 %v2755
    %v2758 = vunpack.c.l.b16 %v2756
    %v2759 = vrot.slane %v2758, 7
    %v2760 = vsel %vm2313, %v2759, %v2757
    %v2761 = vpack.c.b16 %v2760, %v2760
    %v2762 = vrot.slane %v2757, 1
    %v2763 = vsel %vm2313, %v2758, %v2762
    %v2764 = vpack.c.b16 %v2763, %v2763
    %2765 = vrot.lane.b32.xlu0 %v2764, 32
    %v2766 = vpop.permute.xlu0 %2765
    %v2767 = vrot.slane %v2757, 2
    %v2768 = vrot.slane %v2758, 1
    %v2769 = vsel %vm2313, %v2768, %v2767
    %v2770 = vpack.c.b16 %v2769, %v2769
    %2771 = vrot.lane.b32.xlu0 %v2770, 64
    %v2772 = vpop.permute.xlu0 %2771
    %v2773 = vrot.slane %v2757, 3
    %v2774 = vrot.slane %v2758, 2
    %v2775 = vsel %vm2313, %v2774, %v2773
    %v2776 = vpack.c.b16 %v2775, %v2775
    %2777 = vrot.lane.b32.xlu0 %v2776, 96
    %v2778 = vpop.permute.xlu0 %2777
    %v2779 = vrot.slane %v2757, 4
    %v2780 = vrot.slane %v2758, 3
    %v2781 = vsel %vm2313, %v2780, %v2779
    %v2782 = vpack.c.b16 %v2781, %v2781
    %v2783 = vrot.slane %v2757, 5
    %v2784 = vrot.slane %v2758, 4
    %v2785 = vsel %vm2313, %v2784, %v2783
    %v2786 = vpack.c.b16 %v2785, %v2785
    %2787 = vrot.lane.b32.xlu0 %v2786, 32
    %v2788 = vpop.permute.xlu0 %2787
    %v2789 = vrot.slane %v2757, 6
    %v2790 = vrot.slane %v2758, 5
    %v2791 = vsel %vm2313, %v2790, %v2789
    %v2792 = vpack.c.b16 %v2791, %v2791
    %2793 = vrot.lane.b32.xlu0 %v2792, 64
    %v2794 = vpop.permute.xlu0 %2793
    %v2795 = vrot.slane %v2757, 7
    %v2796 = vrot.slane %v2758, 6
    %v2797 = vsel %vm2313, %v2796, %v2795
    %v2798 = vpack.c.b16 %v2797, %v2797
    %2799 = vrot.lane.b32.xlu0 %v2798, 96
    %v2800 = vpop.permute.xlu0 %2799
    %v2803 = vsel %vm1354, %v2711, %v2716
    %v2805 = vsel %vm1360, %v2803, %v2722
    %v2807 = vsel %vm1366, %v2805, %v2728
    %v2811 = vsel %vm1354, %v2732, %v2738
    %v2813 = vsel %vm1360, %v2811, %v2744
    %v2815 = vsel %vm1366, %v2813, %v2750
    %v2819 = vsel %vm1354, %v2761, %v2766
    %v2821 = vsel %vm1360, %v2819, %v2772
    %v2823 = vsel %vm1366, %v2821, %v2778
    %v2827 = vsel %vm1354, %v2782, %v2788
    %v2829 = vsel %vm1360, %v2827, %v2794
    %v2831 = vsel %vm1366, %v2829, %v2800
    %v2833 = vld [vmem:[%s5] sm:$0xf]
    %v2834 = vld [vmem:[%s5 + $0x4] sm:$0xf]
    %v2835 = vld [vmem:[%s5 + $0x8] sm:$0xf]
    %v2836 = vld [vmem:[%s5 + $0xc] sm:$0xf]
    %v2837 = vld [vmem:[%s5 + $0x10] sm:$0xf]
    %v2838 = vld [vmem:[%s5 + $0x14] sm:$0xf]
    %v2839 = vld [vmem:[%s5 + $0x18] sm:$0xf]
    %v2840 = vld [vmem:[%s5 + $0x1c] sm:$0xf]
    %v2841 = vld [vmem:[%s5 + $0x20] sm:$0xf]
    %v2842 = vld [vmem:[%s5 + $0x24] sm:$0xf]
    %v2843 = vld [vmem:[%s5 + $0x28] sm:$0xf]
    %v2844 = vld [vmem:[%s5 + $0x2c] sm:$0xf]
    %v2845 = vld [vmem:[%s5 + $0x30] sm:$0xf]
    %v2846 = vld [vmem:[%s5 + $0x34] sm:$0xf]
    %v2847 = vld [vmem:[%s5 + $0x38] sm:$0xf]
    %v2848 = vld [vmem:[%s5 + $0x3c] sm:$0xf]
    %v2849 = vld [vmem:[%s5 + $0x40] sm:$0xf]
    %v2850 = vld [vmem:[%s5 + $0x44] sm:$0xf]
    %v2851 = vld [vmem:[%s5 + $0x48] sm:$0xf]
    %v2852 = vld [vmem:[%s5 + $0x4c] sm:$0xf]
    %v2853 = vld [vmem:[%s5 + $0x50] sm:$0xf]
    %v2854 = vld [vmem:[%s5 + $0x54] sm:$0xf]
    %v2855 = vld [vmem:[%s5 + $0x58] sm:$0xf]
    %v2856 = vld [vmem:[%s5 + $0x5c] sm:$0xf]
    %v2857 = vld [vmem:[%s5 + $0x60] sm:$0xf]
    %v2858 = vld [vmem:[%s5 + $0x64] sm:$0xf]
    %v2859 = vld [vmem:[%s5 + $0x68] sm:$0xf]
    %v2860 = vld [vmem:[%s5 + $0x6c] sm:$0xf]
    %v2861 = vld [vmem:[%s5 + $0x70] sm:$0xf]
    %v2862 = vld [vmem:[%s5 + $0x74] sm:$0xf]
    %v2863 = vld [vmem:[%s5 + $0x78] sm:$0xf]
    %v2864 = vld [vmem:[%s5 + $0x7c] sm:$0xf]
    %v2865 = vld [vmem:[%s5 + $0x80] sm:$0xf]
    %v2866 = vld [vmem:[%s5 + $0x84] sm:$0xf]
    %v2867 = vld [vmem:[%s5 + $0x88] sm:$0xf]
    %v2868 = vld [vmem:[%s5 + $0x8c] sm:$0xf]
    %v2869 = vld [vmem:[%s5 + $0x90] sm:$0xf]
    %v2870 = vld [vmem:[%s5 + $0x94] sm:$0xf]
    %v2871 = vld [vmem:[%s5 + $0x98] sm:$0xf]
    %v2872 = vld [vmem:[%s5 + $0x9c] sm:$0xf]
    %v2873 = vld [vmem:[%s5 + $0xa0] sm:$0xf]
    %v2874 = vld [vmem:[%s5 + $0xa4] sm:$0xf]
    %v2875 = vld [vmem:[%s5 + $0xa8] sm:$0xf]
    %v2876 = vld [vmem:[%s5 + $0xac] sm:$0xf]
    %v2877 = vld [vmem:[%s5 + $0xb0] sm:$0xf]
    %v2878 = vld [vmem:[%s5 + $0xb4] sm:$0xf]
    %v2879 = vld [vmem:[%s5 + $0xb8] sm:$0xf]
    %v2880 = vld [vmem:[%s5 + $0xbc] sm:$0xf]
    %v2881 = vld [vmem:[%s5 + $0xc0] sm:$0xf]
    %v2882 = vld [vmem:[%s5 + $0xc4] sm:$0xf]
    %v2883 = vld [vmem:[%s5 + $0xc8] sm:$0xf]
    %v2884 = vld [vmem:[%s5 + $0xcc] sm:$0xf]
    %v2885 = vld [vmem:[%s5 + $0xd0] sm:$0xf]
    %v2886 = vld [vmem:[%s5 + $0xd4] sm:$0xf]
    %v2887 = vld [vmem:[%s5 + $0xd8] sm:$0xf]
    %v2888 = vld [vmem:[%s5 + $0xdc] sm:$0xf]
    %v2889 = vld [vmem:[%s5 + $0xe0] sm:$0xf]
    %v2890 = vld [vmem:[%s5 + $0xe4] sm:$0xf]
    %v2891 = vld [vmem:[%s5 + $0xe8] sm:$0xf]
    %v2892 = vld [vmem:[%s5 + $0xec] sm:$0xf]
    %v2893 = vld [vmem:[%s5 + $0xf0] sm:$0xf]
    %v2894 = vld [vmem:[%s5 + $0xf4] sm:$0xf]
    %v2895 = vld [vmem:[%s5 + $0xf8] sm:$0xf]
    %v2896 = vld [vmem:[%s5 + $0xfc] sm:$0xf]
    %v2897 = vld [vmem:[%s5 + $0x100] sm:$0xf]
    %v2898 = vld [vmem:[%s5 + $0x104] sm:$0xf]
    %v2899 = vld [vmem:[%s5 + $0x108] sm:$0xf]
    %v2900 = vld [vmem:[%s5 + $0x10c] sm:$0xf]
    %v2901 = vld [vmem:[%s5 + $0x110] sm:$0xf]
    %v2902 = vld [vmem:[%s5 + $0x114] sm:$0xf]
    %v2903 = vld [vmem:[%s5 + $0x118] sm:$0xf]
    %v2904 = vld [vmem:[%s5 + $0x11c] sm:$0xf]
    %v2905 = vld [vmem:[%s5 + $0x120] sm:$0xf]
    %v2906 = vld [vmem:[%s5 + $0x124] sm:$0xf]
    %v2907 = vld [vmem:[%s5 + $0x128] sm:$0xf]
    %v2908 = vld [vmem:[%s5 + $0x12c] sm:$0xf]
    %v2909 = vld [vmem:[%s5 + $0x130] sm:$0xf]
    %v2910 = vld [vmem:[%s5 + $0x134] sm:$0xf]
    %v2911 = vld [vmem:[%s5 + $0x138] sm:$0xf]
    %v2912 = vld [vmem:[%s5 + $0x13c] sm:$0xf]
    %v2913 = vld [vmem:[%s5 + $0x140] sm:$0xf]
    %v2914 = vld [vmem:[%s5 + $0x144] sm:$0xf]
    %v2915 = vld [vmem:[%s5 + $0x148] sm:$0xf]
    %v2916 = vld [vmem:[%s5 + $0x14c] sm:$0xf]
    %v2917 = vld [vmem:[%s5 + $0x150] sm:$0xf]
    %v2918 = vld [vmem:[%s5 + $0x154] sm:$0xf]
    %v2919 = vld [vmem:[%s5 + $0x158] sm:$0xf]
    %v2920 = vld [vmem:[%s5 + $0x15c] sm:$0xf]
    %v2921 = vld [vmem:[%s5 + $0x160] sm:$0xf]
    %v2922 = vld [vmem:[%s5 + $0x164] sm:$0xf]
    %v2923 = vld [vmem:[%s5 + $0x168] sm:$0xf]
    %v2924 = vld [vmem:[%s5 + $0x16c] sm:$0xf]
    %v2925 = vld [vmem:[%s5 + $0x170] sm:$0xf]
    %v2926 = vld [vmem:[%s5 + $0x174] sm:$0xf]
    %v2927 = vld [vmem:[%s5 + $0x178] sm:$0xf]
    %v2928 = vld [vmem:[%s5 + $0x17c] sm:$0xf]
    %v2929 = vld [vmem:[%s5 + $0x180] sm:$0xf]
    %v2930 = vld [vmem:[%s5 + $0x184] sm:$0xf]
    %v2931 = vld [vmem:[%s5 + $0x188] sm:$0xf]
    %v2932 = vld [vmem:[%s5 + $0x18c] sm:$0xf]
    %v2933 = vld [vmem:[%s5 + $0x190] sm:$0xf]
    %v2934 = vld [vmem:[%s5 + $0x194] sm:$0xf]
    %v2935 = vld [vmem:[%s5 + $0x198] sm:$0xf]
    %v2936 = vld [vmem:[%s5 + $0x19c] sm:$0xf]
    %v2937 = vld [vmem:[%s5 + $0x1a0] sm:$0xf]
    %v2938 = vld [vmem:[%s5 + $0x1a4] sm:$0xf]
    %v2939 = vld [vmem:[%s5 + $0x1a8] sm:$0xf]
    %v2940 = vld [vmem:[%s5 + $0x1ac] sm:$0xf]
    %v2941 = vld [vmem:[%s5 + $0x1b0] sm:$0xf]
    %v2942 = vld [vmem:[%s5 + $0x1b4] sm:$0xf]
    %v2943 = vld [vmem:[%s5 + $0x1b8] sm:$0xf]
    %v2944 = vld [vmem:[%s5 + $0x1bc] sm:$0xf]
    %v2945 = vld [vmem:[%s5 + $0x1c0] sm:$0xf]
    %v2946 = vld [vmem:[%s5 + $0x1c4] sm:$0xf]
    %v2947 = vld [vmem:[%s5 + $0x1c8] sm:$0xf]
    %v2948 = vld [vmem:[%s5 + $0x1cc] sm:$0xf]
    %v2949 = vld [vmem:[%s5 + $0x1d0] sm:$0xf]
    %v2950 = vld [vmem:[%s5 + $0x1d4] sm:$0xf]
    %v2951 = vld [vmem:[%s5 + $0x1d8] sm:$0xf]
    %v2952 = vld [vmem:[%s5 + $0x1dc] sm:$0xf]
    %v2953 = vld [vmem:[%s5 + $0x1e0] sm:$0xf]
    %v2954 = vld [vmem:[%s5 + $0x1e4] sm:$0xf]
    %v2955 = vld [vmem:[%s5 + $0x1e8] sm:$0xf]
    %v2956 = vld [vmem:[%s5 + $0x1ec] sm:$0xf]
    %v2957 = vld [vmem:[%s5 + $0x1f0] sm:$0xf]
    %v2958 = vld [vmem:[%s5 + $0x1f4] sm:$0xf]
    %v2959 = vld [vmem:[%s5 + $0x1f8] sm:$0xf]
    %v2960 = vld [vmem:[%s5 + $0x1fc] sm:$0xf]
    %v2961 = vld [vmem:[%s5 + $0x200] sm:$0xf]
    %v2962 = vld [vmem:[%s5 + $0x204] sm:$0xf]
    %v2963 = vld [vmem:[%s5 + $0x208] sm:$0xf]
    %v2964 = vld [vmem:[%s5 + $0x20c] sm:$0xf]
    %v2965 = vld [vmem:[%s5 + $0x210] sm:$0xf]
    %v2966 = vld [vmem:[%s5 + $0x214] sm:$0xf]
    %v2967 = vld [vmem:[%s5 + $0x218] sm:$0xf]
    %v2968 = vld [vmem:[%s5 + $0x21c] sm:$0xf]
    %v2969 = vld [vmem:[%s5 + $0x220] sm:$0xf]
    %v2970 = vld [vmem:[%s5 + $0x224] sm:$0xf]
    %v2971 = vld [vmem:[%s5 + $0x228] sm:$0xf]
    %v2972 = vld [vmem:[%s5 + $0x22c] sm:$0xf]
    %v2973 = vld [vmem:[%s5 + $0x230] sm:$0xf]
    %v2974 = vld [vmem:[%s5 + $0x234] sm:$0xf]
    %v2975 = vld [vmem:[%s5 + $0x238] sm:$0xf]
    %v2976 = vld [vmem:[%s5 + $0x23c] sm:$0xf]
    %v2977 = vld [vmem:[%s5 + $0x240] sm:$0xf]
    %v2978 = vld [vmem:[%s5 + $0x244] sm:$0xf]
    %v2979 = vld [vmem:[%s5 + $0x248] sm:$0xf]
    %v2980 = vld [vmem:[%s5 + $0x24c] sm:$0xf]
    %v2981 = vld [vmem:[%s5 + $0x250] sm:$0xf]
    %v2982 = vld [vmem:[%s5 + $0x254] sm:$0xf]
    %v2983 = vld [vmem:[%s5 + $0x258] sm:$0xf]
    %v2984 = vld [vmem:[%s5 + $0x25c] sm:$0xf]
    %v2985 = vld [vmem:[%s5 + $0x260] sm:$0xf]
    %v2986 = vld [vmem:[%s5 + $0x264] sm:$0xf]
    %v2987 = vld [vmem:[%s5 + $0x268] sm:$0xf]
    %v2988 = vld [vmem:[%s5 + $0x26c] sm:$0xf]
    %v2989 = vld [vmem:[%s5 + $0x270] sm:$0xf]
    %v2990 = vld [vmem:[%s5 + $0x274] sm:$0xf]
    %v2991 = vld [vmem:[%s5 + $0x278] sm:$0xf]
    %v2992 = vld [vmem:[%s5 + $0x27c] sm:$0xf]
    %v2993 = vld [vmem:[%s5 + $0x280] sm:$0xf]
    %v2994 = vld [vmem:[%s5 + $0x284] sm:$0xf]
    %v2995 = vld [vmem:[%s5 + $0x288] sm:$0xf]
    %v2996 = vld [vmem:[%s5 + $0x28c] sm:$0xf]
    %v2997 = vld [vmem:[%s5 + $0x290] sm:$0xf]
    %v2998 = vld [vmem:[%s5 + $0x294] sm:$0xf]
    %v2999 = vld [vmem:[%s5 + $0x298] sm:$0xf]
    %v3000 = vld [vmem:[%s5 + $0x29c] sm:$0xf]
    %v3001 = vld [vmem:[%s5 + $0x2a0] sm:$0xf]
    %v3002 = vld [vmem:[%s5 + $0x2a4] sm:$0xf]
    %v3003 = vld [vmem:[%s5 + $0x2a8] sm:$0xf]
    %v3004 = vld [vmem:[%s5 + $0x2ac] sm:$0xf]
    %v3005 = vld [vmem:[%s5 + $0x2b0] sm:$0xf]
    %v3006 = vld [vmem:[%s5 + $0x2b4] sm:$0xf]
    %v3007 = vld [vmem:[%s5 + $0x2b8] sm:$0xf]
    %v3008 = vld [vmem:[%s5 + $0x2bc] sm:$0xf]
    %v3009 = vld [vmem:[%s5 + $0x2c0] sm:$0xf]
    %v3010 = vld [vmem:[%s5 + $0x2c4] sm:$0xf]
    %v3011 = vld [vmem:[%s5 + $0x2c8] sm:$0xf]
    %v3012 = vld [vmem:[%s5 + $0x2cc] sm:$0xf]
    %v3013 = vld [vmem:[%s5 + $0x2d0] sm:$0xf]
    %v3014 = vld [vmem:[%s5 + $0x2d4] sm:$0xf]
    %v3015 = vld [vmem:[%s5 + $0x2d8] sm:$0xf]
    %v3016 = vld [vmem:[%s5 + $0x2dc] sm:$0xf]
    %v3017 = vld [vmem:[%s5 + $0x2e0] sm:$0xf]
    %v3018 = vld [vmem:[%s5 + $0x2e4] sm:$0xf]
    %v3019 = vld [vmem:[%s5 + $0x2e8] sm:$0xf]
    %v3020 = vld [vmem:[%s5 + $0x2ec] sm:$0xf]
    %v3021 = vld [vmem:[%s5 + $0x2f0] sm:$0xf]
    %v3022 = vld [vmem:[%s5 + $0x2f4] sm:$0xf]
    %v3023 = vld [vmem:[%s5 + $0x2f8] sm:$0xf]
    %v3024 = vld [vmem:[%s5 + $0x2fc] sm:$0xf]
    %v3025 = vld [vmem:[%s5 + $0x300] sm:$0xf]
    %v3026 = vld [vmem:[%s5 + $0x304] sm:$0xf]
    %v3027 = vld [vmem:[%s5 + $0x308] sm:$0xf]
    %v3028 = vld [vmem:[%s5 + $0x30c] sm:$0xf]
    %v3029 = vld [vmem:[%s5 + $0x310] sm:$0xf]
    %v3030 = vld [vmem:[%s5 + $0x314] sm:$0xf]
    %v3031 = vld [vmem:[%s5 + $0x318] sm:$0xf]
    %v3032 = vld [vmem:[%s5 + $0x31c] sm:$0xf]
    %v3033 = vld [vmem:[%s5 + $0x320] sm:$0xf]
    %v3034 = vld [vmem:[%s5 + $0x324] sm:$0xf]
    %v3035 = vld [vmem:[%s5 + $0x328] sm:$0xf]
    %v3036 = vld [vmem:[%s5 + $0x32c] sm:$0xf]
    %v3037 = vld [vmem:[%s5 + $0x330] sm:$0xf]
    %v3038 = vld [vmem:[%s5 + $0x334] sm:$0xf]
    %v3039 = vld [vmem:[%s5 + $0x338] sm:$0xf]
    %v3040 = vld [vmem:[%s5 + $0x33c] sm:$0xf]
    %v3041 = vld [vmem:[%s5 + $0x340] sm:$0xf]
    %v3042 = vld [vmem:[%s5 + $0x344] sm:$0xf]
    %v3043 = vld [vmem:[%s5 + $0x348] sm:$0xf]
    %v3044 = vld [vmem:[%s5 + $0x34c] sm:$0xf]
    %v3045 = vld [vmem:[%s5 + $0x350] sm:$0xf]
    %v3046 = vld [vmem:[%s5 + $0x354] sm:$0xf]
    %v3047 = vld [vmem:[%s5 + $0x358] sm:$0xf]
    %v3048 = vld [vmem:[%s5 + $0x35c] sm:$0xf]
    %v3049 = vld [vmem:[%s5 + $0x360] sm:$0xf]
    %v3050 = vld [vmem:[%s5 + $0x364] sm:$0xf]
    %v3051 = vld [vmem:[%s5 + $0x368] sm:$0xf]
    %v3052 = vld [vmem:[%s5 + $0x36c] sm:$0xf]
    %v3053 = vld [vmem:[%s5 + $0x370] sm:$0xf]
    %v3054 = vld [vmem:[%s5 + $0x374] sm:$0xf]
    %v3055 = vld [vmem:[%s5 + $0x378] sm:$0xf]
    %v3056 = vld [vmem:[%s5 + $0x37c] sm:$0xf]
    %v3057 = vld [vmem:[%s5 + $0x380] sm:$0xf]
    %v3058 = vld [vmem:[%s5 + $0x384] sm:$0xf]
    %v3059 = vld [vmem:[%s5 + $0x388] sm:$0xf]
    %v3060 = vld [vmem:[%s5 + $0x38c] sm:$0xf]
    %v3061 = vld [vmem:[%s5 + $0x390] sm:$0xf]
    %v3062 = vld [vmem:[%s5 + $0x394] sm:$0xf]
    %v3063 = vld [vmem:[%s5 + $0x398] sm:$0xf]
    %v3064 = vld [vmem:[%s5 + $0x39c] sm:$0xf]
    %v3065 = vld [vmem:[%s5 + $0x3a0] sm:$0xf]
    %v3066 = vld [vmem:[%s5 + $0x3a4] sm:$0xf]
    %v3067 = vld [vmem:[%s5 + $0x3a8] sm:$0xf]
    %v3068 = vld [vmem:[%s5 + $0x3ac] sm:$0xf]
    %v3069 = vld [vmem:[%s5 + $0x3b0] sm:$0xf]
    %v3070 = vld [vmem:[%s5 + $0x3b4] sm:$0xf]
    %v3071 = vld [vmem:[%s5 + $0x3b8] sm:$0xf]
    %v3072 = vld [vmem:[%s5 + $0x3bc] sm:$0xf]
    %v3073 = vld [vmem:[%s5 + $0x3c0] sm:$0xf]
    %v3074 = vld [vmem:[%s5 + $0x3c4] sm:$0xf]
    %v3075 = vld [vmem:[%s5 + $0x3c8] sm:$0xf]
    %v3076 = vld [vmem:[%s5 + $0x3cc] sm:$0xf]
    %v3077 = vld [vmem:[%s5 + $0x3d0] sm:$0xf]
    %v3078 = vld [vmem:[%s5 + $0x3d4] sm:$0xf]
    %v3079 = vld [vmem:[%s5 + $0x3d8] sm:$0xf]
    %v3080 = vld [vmem:[%s5 + $0x3dc] sm:$0xf]
    %v3081 = vld [vmem:[%s5 + $0x3e0] sm:$0xf]
    %v3082 = vld [vmem:[%s5 + $0x3e4] sm:$0xf]
    %v3083 = vld [vmem:[%s5 + $0x3e8] sm:$0xf]
    %v3084 = vld [vmem:[%s5 + $0x3ec] sm:$0xf]
    %v3085 = vld [vmem:[%s5 + $0x3f0] sm:$0xf]
    %v3086 = vld [vmem:[%s5 + $0x3f4] sm:$0xf]
    %v3087 = vld [vmem:[%s5 + $0x3f8] sm:$0xf]
    %v3088 = vld [vmem:[%s5 + $0x3fc] sm:$0xf]
    %v3089 = vld [vmem:[%s6] sm:$0x1]
    %v3091 = vperm.slane %v3089, 0
    %v3349 = vunpack.c.l.b16 %v2833
    %v3350 = vunpack.c.l.b16 %v2834
    %v3351 = vunpack.c.l.b16 %v2835
    %v3352 = vunpack.c.l.b16 %v2836
    %v3353 = vunpack.c.l.b16 %v2837
    %v3354 = vunpack.c.l.b16 %v2838
    %v3355 = vunpack.c.l.b16 %v2839
    %v3356 = vunpack.c.l.b16 %v2840
    %v3357 = vunpack.c.l.b16 %v2841
    %v3358 = vunpack.c.l.b16 %v2842
    %v3359 = vunpack.c.l.b16 %v2843
    %v3360 = vunpack.c.l.b16 %v2844
    %v3361 = vunpack.c.l.b16 %v2845
    %v3362 = vunpack.c.l.b16 %v2846
    %v3363 = vunpack.c.l.b16 %v2847
    %v3364 = vunpack.c.l.b16 %v2848
    %v3365 = vunpack.c.l.b16 %v2849
    %v3366 = vunpack.c.l.b16 %v2850
    %v3367 = vunpack.c.l.b16 %v2851
    %v3368 = vunpack.c.l.b16 %v2852
    %v3369 = vunpack.c.l.b16 %v2853
    %v3370 = vunpack.c.l.b16 %v2854
    %v3371 = vunpack.c.l.b16 %v2855
    %v3372 = vunpack.c.l.b16 %v2856
    %v3373 = vunpack.c.l.b16 %v2857
    %v3374 = vunpack.c.l.b16 %v2858
    %v3375 = vunpack.c.l.b16 %v2859
    %v3376 = vunpack.c.l.b16 %v2860
    %v3377 = vunpack.c.l.b16 %v2861
    %v3378 = vunpack.c.l.b16 %v2862
    %v3379 = vunpack.c.l.b16 %v2863
    %v3380 = vunpack.c.l.b16 %v2864
    %v3381 = vunpack.c.l.b16 %v2865
    %v3382 = vunpack.c.l.b16 %v2866
    %v3383 = vunpack.c.l.b16 %v2867
    %v3384 = vunpack.c.l.b16 %v2868
    %v3385 = vunpack.c.l.b16 %v2869
    %v3386 = vunpack.c.l.b16 %v2870
    %v3387 = vunpack.c.l.b16 %v2871
    %v3388 = vunpack.c.l.b16 %v2872
    %v3389 = vunpack.c.l.b16 %v2873
    %v3390 = vunpack.c.l.b16 %v2874
    %v3391 = vunpack.c.l.b16 %v2875
    %v3392 = vunpack.c.l.b16 %v2876
    %v3393 = vunpack.c.l.b16 %v2877
    %v3394 = vunpack.c.l.b16 %v2878
    %v3395 = vunpack.c.l.b16 %v2879
    %v3396 = vunpack.c.l.b16 %v2880
    %v3397 = vunpack.c.l.b16 %v2881
    %v3398 = vunpack.c.l.b16 %v2882
    %v3399 = vunpack.c.l.b16 %v2883
    %v3400 = vunpack.c.l.b16 %v2884
    %v3401 = vunpack.c.l.b16 %v2885
    %v3402 = vunpack.c.l.b16 %v2886
    %v3403 = vunpack.c.l.b16 %v2887
    %v3404 = vunpack.c.l.b16 %v2888
    %v3405 = vunpack.c.l.b16 %v2889
    %v3406 = vunpack.c.l.b16 %v2890
    %v3407 = vunpack.c.l.b16 %v2891
    %v3408 = vunpack.c.l.b16 %v2892
    %v3409 = vunpack.c.l.b16 %v2893
    %v3410 = vunpack.c.l.b16 %v2894
    %v3411 = vunpack.c.l.b16 %v2895
    %v3412 = vunpack.c.l.b16 %v2896
    %v3413 = vunpack.c.l.b16 %v2897
    %v3414 = vunpack.c.l.b16 %v2898
    %v3415 = vunpack.c.l.b16 %v2899
    %v3416 = vunpack.c.l.b16 %v2900
    %v3417 = vunpack.c.l.b16 %v2901
    %v3418 = vunpack.c.l.b16 %v2902
    %v3419 = vunpack.c.l.b16 %v2903
    %v3420 = vunpack.c.l.b16 %v2904
    %v3421 = vunpack.c.l.b16 %v2905
    %v3422 = vunpack.c.l.b16 %v2906
    %v3423 = vunpack.c.l.b16 %v2907
    %v3424 = vunpack.c.l.b16 %v2908
    %v3425 = vunpack.c.l.b16 %v2909
    %v3426 = vunpack.c.l.b16 %v2910
    %v3427 = vunpack.c.l.b16 %v2911
    %v3428 = vunpack.c.l.b16 %v2912
    %v3429 = vunpack.c.l.b16 %v2913
    %v3430 = vunpack.c.l.b16 %v2914
    %v3431 = vunpack.c.l.b16 %v2915
    %v3432 = vunpack.c.l.b16 %v2916
    %v3433 = vunpack.c.l.b16 %v2917
    %v3434 = vunpack.c.l.b16 %v2918
    %v3435 = vunpack.c.l.b16 %v2919
    %v3436 = vunpack.c.l.b16 %v2920
    %v3437 = vunpack.c.l.b16 %v2921
    %v3438 = vunpack.c.l.b16 %v2922
    %v3439 = vunpack.c.l.b16 %v2923
    %v3440 = vunpack.c.l.b16 %v2924
    %v3441 = vunpack.c.l.b16 %v2925
    %v3442 = vunpack.c.l.b16 %v2926
    %v3443 = vunpack.c.l.b16 %v2927
    %v3444 = vunpack.c.l.b16 %v2928
    %v3445 = vunpack.c.l.b16 %v2929
    %v3446 = vunpack.c.l.b16 %v2930
    %v3447 = vunpack.c.l.b16 %v2931
    %v3448 = vunpack.c.l.b16 %v2932
    %v3449 = vunpack.c.l.b16 %v2933
    %v3450 = vunpack.c.l.b16 %v2934
    %v3451 = vunpack.c.l.b16 %v2935
    %v3452 = vunpack.c.l.b16 %v2936
    %v3453 = vunpack.c.l.b16 %v2937
    %v3454 = vunpack.c.l.b16 %v2938
    %v3455 = vunpack.c.l.b16 %v2939
    %v3456 = vunpack.c.l.b16 %v2940
    %v3457 = vunpack.c.l.b16 %v2941
    %v3458 = vunpack.c.l.b16 %v2942
    %v3459 = vunpack.c.l.b16 %v2943
    %v3460 = vunpack.c.l.b16 %v2944
    %v3461 = vunpack.c.l.b16 %v2945
    %v3462 = vunpack.c.l.b16 %v2946
    %v3463 = vunpack.c.l.b16 %v2947
    %v3464 = vunpack.c.l.b16 %v2948
    %v3465 = vunpack.c.l.b16 %v2949
    %v3466 = vunpack.c.l.b16 %v2950
    %v3467 = vunpack.c.l.b16 %v2951
    %v3468 = vunpack.c.l.b16 %v2952
    %v3469 = vunpack.c.l.b16 %v2953
    %v3470 = vunpack.c.l.b16 %v2954
    %v3471 = vunpack.c.l.b16 %v2955
    %v3472 = vunpack.c.l.b16 %v2956
    %v3473 = vunpack.c.l.b16 %v2957
    %v3474 = vunpack.c.l.b16 %v2958
    %v3475 = vunpack.c.l.b16 %v2959
    %v3476 = vunpack.c.l.b16 %v2960
    %v3477 = vunpack.c.l.b16 %v2961
    %v3478 = vunpack.c.l.b16 %v2962
    %v3479 = vunpack.c.l.b16 %v2963
    %v3480 = vunpack.c.l.b16 %v2964
    %v3481 = vunpack.c.l.b16 %v2965
    %v3482 = vunpack.c.l.b16 %v2966
    %v3483 = vunpack.c.l.b16 %v2967
    %v3484 = vunpack.c.l.b16 %v2968
    %v3485 = vunpack.c.l.b16 %v2969
    %v3486 = vunpack.c.l.b16 %v2970
    %v3487 = vunpack.c.l.b16 %v2971
    %v3488 = vunpack.c.l.b16 %v2972
    %v3489 = vunpack.c.l.b16 %v2973
    %v3490 = vunpack.c.l.b16 %v2974
    %v3491 = vunpack.c.l.b16 %v2975
    %v3492 = vunpack.c.l.b16 %v2976
    %v3493 = vunpack.c.l.b16 %v2977
    %v3494 = vunpack.c.l.b16 %v2978
    %v3495 = vunpack.c.l.b16 %v2979
    %v3496 = vunpack.c.l.b16 %v2980
    %v3497 = vunpack.c.l.b16 %v2981
    %v3498 = vunpack.c.l.b16 %v2982
    %v3499 = vunpack.c.l.b16 %v2983
    %v3500 = vunpack.c.l.b16 %v2984
    %v3501 = vunpack.c.l.b16 %v2985
    %v3502 = vunpack.c.l.b16 %v2986
    %v3503 = vunpack.c.l.b16 %v2987
    %v3504 = vunpack.c.l.b16 %v2988
    %v3505 = vunpack.c.l.b16 %v2989
    %v3506 = vunpack.c.l.b16 %v2990
    %v3507 = vunpack.c.l.b16 %v2991
    %v3508 = vunpack.c.l.b16 %v2992
    %v3509 = vunpack.c.l.b16 %v2993
    %v3510 = vunpack.c.l.b16 %v2994
    %v3511 = vunpack.c.l.b16 %v2995
    %v3512 = vunpack.c.l.b16 %v2996
    %v3513 = vunpack.c.l.b16 %v2997
    %v3514 = vunpack.c.l.b16 %v2998
    %v3515 = vunpack.c.l.b16 %v2999
    %v3516 = vunpack.c.l.b16 %v3000
    %v3517 = vunpack.c.l.b16 %v3001
    %v3518 = vunpack.c.l.b16 %v3002
    %v3519 = vunpack.c.l.b16 %v3003
    %v3520 = vunpack.c.l.b16 %v3004
    %v3521 = vunpack.c.l.b16 %v3005
    %v3522 = vunpack.c.l.b16 %v3006
    %v3523 = vunpack.c.l.b16 %v3007
    %v3524 = vunpack.c.l.b16 %v3008
    %v3525 = vunpack.c.l.b16 %v3009
    %v3526 = vunpack.c.l.b16 %v3010
    %v3527 = vunpack.c.l.b16 %v3011
    %v3528 = vunpack.c.l.b16 %v3012
    %v3529 = vunpack.c.l.b16 %v3013
    %v3530 = vunpack.c.l.b16 %v3014
    %v3531 = vunpack.c.l.b16 %v3015
    %v3532 = vunpack.c.l.b16 %v3016
    %v3533 = vunpack.c.l.b16 %v3017
    %v3534 = vunpack.c.l.b16 %v3018
    %v3535 = vunpack.c.l.b16 %v3019
    %v3536 = vunpack.c.l.b16 %v3020
    %v3537 = vunpack.c.l.b16 %v3021
    %v3538 = vunpack.c.l.b16 %v3022
    %v3539 = vunpack.c.l.b16 %v3023
    %v3540 = vunpack.c.l.b16 %v3024
    %v3541 = vunpack.c.l.b16 %v3025
    %v3542 = vunpack.c.l.b16 %v3026
    %v3543 = vunpack.c.l.b16 %v3027
    %v3544 = vunpack.c.l.b16 %v3028
    %v3545 = vunpack.c.l.b16 %v3029
    %v3546 = vunpack.c.l.b16 %v3030
    %v3547 = vunpack.c.l.b16 %v3031
    %v3548 = vunpack.c.l.b16 %v3032
    %v3549 = vunpack.c.l.b16 %v3033
    %v3550 = vunpack.c.l.b16 %v3034
    %v3551 = vunpack.c.l.b16 %v3035
    %v3552 = vunpack.c.l.b16 %v3036
    %v3553 = vunpack.c.l.b16 %v3037
    %v3554 = vunpack.c.l.b16 %v3038
    %v3555 = vunpack.c.l.b16 %v3039
    %v3556 = vunpack.c.l.b16 %v3040
    %v3557 = vunpack.c.l.b16 %v3041
    %v3558 = vunpack.c.l.b16 %v3042
    %v3559 = vunpack.c.l.b16 %v3043
    %v3560 = vunpack.c.l.b16 %v3044
    %v3561 = vunpack.c.l.b16 %v3045
    %v3562 = vunpack.c.l.b16 %v3046
    %v3563 = vunpack.c.l.b16 %v3047
    %v3564 = vunpack.c.l.b16 %v3048
    %v3565 = vunpack.c.l.b16 %v3049
    %v3566 = vunpack.c.l.b16 %v3050
    %v3567 = vunpack.c.l.b16 %v3051
    %v3568 = vunpack.c.l.b16 %v3052
    %v3569 = vunpack.c.l.b16 %v3053
    %v3570 = vunpack.c.l.b16 %v3054
    %v3571 = vunpack.c.l.b16 %v3055
    %v3572 = vunpack.c.l.b16 %v3056
    %v3573 = vunpack.c.l.b16 %v3057
    %v3574 = vunpack.c.l.b16 %v3058
    %v3575 = vunpack.c.l.b16 %v3059
    %v3576 = vunpack.c.l.b16 %v3060
    %v3577 = vunpack.c.l.b16 %v3061
    %v3578 = vunpack.c.l.b16 %v3062
    %v3579 = vunpack.c.l.b16 %v3063
    %v3580 = vunpack.c.l.b16 %v3064
    %v3581 = vunpack.c.l.b16 %v3065
    %v3582 = vunpack.c.l.b16 %v3066
    %v3583 = vunpack.c.l.b16 %v3067
    %v3584 = vunpack.c.l.b16 %v3068
    %v3585 = vunpack.c.l.b16 %v3069
    %v3586 = vunpack.c.l.b16 %v3070
    %v3587 = vunpack.c.l.b16 %v3071
    %v3588 = vunpack.c.l.b16 %v3072
    %v3589 = vunpack.c.l.b16 %v3073
    %v3590 = vunpack.c.l.b16 %v3074
    %v3591 = vunpack.c.l.b16 %v3075
    %v3592 = vunpack.c.l.b16 %v3076
    %v3593 = vunpack.c.l.b16 %v3077
    %v3594 = vunpack.c.l.b16 %v3078
    %v3595 = vunpack.c.l.b16 %v3079
    %v3596 = vunpack.c.l.b16 %v3080
    %v3597 = vunpack.c.l.b16 %v3081
    %v3598 = vunpack.c.l.b16 %v3082
    %v3599 = vunpack.c.l.b16 %v3083
    %v3600 = vunpack.c.l.b16 %v3084
    %v3601 = vunpack.c.l.b16 %v3085
    %v3602 = vunpack.c.l.b16 %v3086
    %v3603 = vunpack.c.l.b16 %v3087
    %v3604 = vunpack.c.l.b16 %v3088
    %v3605 = vpack.c.b16 %v3350, %v3349
    %v3606 = vpack.c.b16 %v3352, %v3351
    %v3607 = vpack.c.b16 %v3354, %v3353
    %v3608 = vpack.c.b16 %v3356, %v3355
    %v3609 = vpack.c.b16 %v3358, %v3357
    %v3610 = vpack.c.b16 %v3360, %v3359
    %v3611 = vpack.c.b16 %v3362, %v3361
    %v3612 = vpack.c.b16 %v3364, %v3363
    %v3613 = vpack.c.b16 %v3366, %v3365
    %v3614 = vpack.c.b16 %v3368, %v3367
    %v3615 = vpack.c.b16 %v3370, %v3369
    %v3616 = vpack.c.b16 %v3372, %v3371
    %v3617 = vpack.c.b16 %v3374, %v3373
    %v3618 = vpack.c.b16 %v3376, %v3375
    %v3619 = vpack.c.b16 %v3378, %v3377
    %v3620 = vpack.c.b16 %v3380, %v3379
    %v3621 = vpack.c.b16 %v3382, %v3381
    %v3622 = vpack.c.b16 %v3384, %v3383
    %v3623 = vpack.c.b16 %v3386, %v3385
    %v3624 = vpack.c.b16 %v3388, %v3387
    %v3625 = vpack.c.b16 %v3390, %v3389
    %v3626 = vpack.c.b16 %v3392, %v3391
    %v3627 = vpack.c.b16 %v3394, %v3393
    %v3628 = vpack.c.b16 %v3396, %v3395
    %v3629 = vpack.c.b16 %v3398, %v3397
    %v3630 = vpack.c.b16 %v3400, %v3399
    %v3631 = vpack.c.b16 %v3402, %v3401
    %v3632 = vpack.c.b16 %v3404, %v3403
    %v3633 = vpack.c.b16 %v3406, %v3405
    %v3634 = vpack.c.b16 %v3408, %v3407
    %v3635 = vpack.c.b16 %v3410, %v3409
    %v3636 = vpack.c.b16 %v3412, %v3411
    %v3637 = vpack.c.b16 %v3414, %v3413
    %v3638 = vpack.c.b16 %v3416, %v3415
    %v3639 = vpack.c.b16 %v3418, %v3417
    %v3640 = vpack.c.b16 %v3420, %v3419
    %v3641 = vpack.c.b16 %v3422, %v3421
    %v3642 = vpack.c.b16 %v3424, %v3423
    %v3643 = vpack.c.b16 %v3426, %v3425
    %v3644 = vpack.c.b16 %v3428, %v3427
    %v3645 = vpack.c.b16 %v3430, %v3429
    %v3646 = vpack.c.b16 %v3432, %v3431
    %v3647 = vpack.c.b16 %v3434, %v3433
    %v3648 = vpack.c.b16 %v3436, %v3435
    %v3649 = vpack.c.b16 %v3438, %v3437
    %v3650 = vpack.c.b16 %v3440, %v3439
    %v3651 = vpack.c.b16 %v3442, %v3441
    %v3652 = vpack.c.b16 %v3444, %v3443
    %v3653 = vpack.c.b16 %v3446, %v3445
    %v3654 = vpack.c.b16 %v3448, %v3447
    %v3655 = vpack.c.b16 %v3450, %v3449
    %v3656 = vpack.c.b16 %v3452, %v3451
    %v3657 = vpack.c.b16 %v3454, %v3453
    %v3658 = vpack.c.b16 %v3456, %v3455
    %v3659 = vpack.c.b16 %v3458, %v3457
    %v3660 = vpack.c.b16 %v3460, %v3459
    %v3661 = vpack.c.b16 %v3462, %v3461
    %v3662 = vpack.c.b16 %v3464, %v3463
    %v3663 = vpack.c.b16 %v3466, %v3465
    %v3664 = vpack.c.b16 %v3468, %v3467
    %v3665 = vpack.c.b16 %v3470, %v3469
    %v3666 = vpack.c.b16 %v3472, %v3471
    %v3667 = vpack.c.b16 %v3474, %v3473
    %v3668 = vpack.c.b16 %v3476, %v3475
    %v3669 = vpack.c.b16 %v3478, %v3477
    %v3670 = vpack.c.b16 %v3480, %v3479
    %v3671 = vpack.c.b16 %v3482, %v3481
    %v3672 = vpack.c.b16 %v3484, %v3483
    %v3673 = vpack.c.b16 %v3486, %v3485
    %v3674 = vpack.c.b16 %v3488, %v3487
    %v3675 = vpack.c.b16 %v3490, %v3489
    %v3676 = vpack.c.b16 %v3492, %v3491
    %v3677 = vpack.c.b16 %v3494, %v3493
    %v3678 = vpack.c.b16 %v3496, %v3495
    %v3679 = vpack.c.b16 %v3498, %v3497
    %v3680 = vpack.c.b16 %v3500, %v3499
    %v3681 = vpack.c.b16 %v3502, %v3501
    %v3682 = vpack.c.b16 %v3504, %v3503
    %v3683 = vpack.c.b16 %v3506, %v3505
    %v3684 = vpack.c.b16 %v3508, %v3507
    %v3685 = vpack.c.b16 %v3510, %v3509
    %v3686 = vpack.c.b16 %v3512, %v3511
    %v3687 = vpack.c.b16 %v3514, %v3513
    %v3688 = vpack.c.b16 %v3516, %v3515
    %v3689 = vpack.c.b16 %v3518, %v3517
    %v3690 = vpack.c.b16 %v3520, %v3519
    %v3691 = vpack.c.b16 %v3522, %v3521
    %v3692 = vpack.c.b16 %v3524, %v3523
    %v3693 = vpack.c.b16 %v3526, %v3525
    %v3694 = vpack.c.b16 %v3528, %v3527
    %v3695 = vpack.c.b16 %v3530, %v3529
    %v3696 = vpack.c.b16 %v3532, %v3531
    %v3697 = vpack.c.b16 %v3534, %v3533
    %v3698 = vpack.c.b16 %v3536, %v3535
    %v3699 = vpack.c.b16 %v3538, %v3537
    %v3700 = vpack.c.b16 %v3540, %v3539
    %v3701 = vpack.c.b16 %v3542, %v3541
    %v3702 = vpack.c.b16 %v3544, %v3543
    %v3703 = vpack.c.b16 %v3546, %v3545
    %v3704 = vpack.c.b16 %v3548, %v3547
    %v3705 = vpack.c.b16 %v3550, %v3549
    %v3706 = vpack.c.b16 %v3552, %v3551
    %v3707 = vpack.c.b16 %v3554, %v3553
    %v3708 = vpack.c.b16 %v3556, %v3555
    %v3709 = vpack.c.b16 %v3558, %v3557
    %v3710 = vpack.c.b16 %v3560, %v3559
    %v3711 = vpack.c.b16 %v3562, %v3561
    %v3712 = vpack.c.b16 %v3564, %v3563
    %v3713 = vpack.c.b16 %v3566, %v3565
    %v3714 = vpack.c.b16 %v3568, %v3567
    %v3715 = vpack.c.b16 %v3570, %v3569
    %v3716 = vpack.c.b16 %v3572, %v3571
    %v3717 = vpack.c.b16 %v3574, %v3573
    %v3718 = vpack.c.b16 %v3576, %v3575
    %v3719 = vpack.c.b16 %v3578, %v3577
    %v3720 = vpack.c.b16 %v3580, %v3579
    %v3721 = vpack.c.b16 %v3582, %v3581
    %v3722 = vpack.c.b16 %v3584, %v3583
    %v3723 = vpack.c.b16 %v3586, %v3585
    %v3724 = vpack.c.b16 %v3588, %v3587
    %v3725 = vpack.c.b16 %v3590, %v3589
    %v3726 = vpack.c.b16 %v3592, %v3591
    %v3727 = vpack.c.b16 %v3594, %v3593
    %v3728 = vpack.c.b16 %v3596, %v3595
    %v3729 = vpack.c.b16 %v3598, %v3597
    %v3730 = vpack.c.b16 %v3600, %v3599
    %v3731 = vpack.c.b16 %v3602, %v3601
    %v3732 = vpack.c.b16 %v3604, %v3603
    %3861 = vmatpush.bf16.msra.mxu0 %v3612
    %3862 = vmatpush.bf16.msra.mxu0 %v3611
    %3863 = vmatpush.bf16.msra.mxu0 %v3610
    %3864 = vmatpush.bf16.msra.mxu0 %v3609
    %3865 = vmatpush.bf16.msra.mxu0 %v3608
    %3866 = vmatpush.bf16.msra.mxu0 %v3607
    %3867 = vmatpush.bf16.msra.mxu0 %v3606
    %3868 = vmatpush.bf16.msra.mxu0 %v3605
    %3869 = vmatmul.bf16.gmra.mxu0 %v2411
    %v3870 = vpop.f32.mrf.mxu0
    %v3871 = vadd.f32 %v3091, %v3870
    %v3872 = vpop.f32.mrf.mxu0
    %3873 = vdwg.mxu0
    %3874 = vmatpush.bf16.msra.mxu0 %v3620
    %3875 = vmatpush.bf16.msra.mxu0 %v3619
    %3876 = vmatpush.bf16.msra.mxu0 %v3618
    %3877 = vmatpush.bf16.msra.mxu0 %v3617
    %3878 = vmatpush.bf16.msra.mxu0 %v3616
    %3879 = vmatpush.bf16.msra.mxu0 %v3615
    %3880 = vmatpush.bf16.msra.mxu0 %v3614
    %3881 = vmatpush.bf16.msra.mxu0 %v3613
    %3882 = vmatmul.bf16.gmra.mxu0 %v2419
    %v3883 = vpop.f32.mrf.mxu0
    %v3884 = vadd.f32 %v3871, %v3883
    %v3885 = vpop.f32.mrf.mxu0
    %3886 = vdwg.mxu0
    %3887 = vmatpush.bf16.msra.mxu0 %v3628
    %3888 = vmatpush.bf16.msra.mxu0 %v3627
    %3889 = vmatpush.bf16.msra.mxu0 %v3626
    %3890 = vmatpush.bf16.msra.mxu0 %v3625
    %3891 = vmatpush.bf16.msra.mxu0 %v3624
    %3892 = vmatpush.bf16.msra.mxu0 %v3623
    %3893 = vmatpush.bf16.msra.mxu0 %v3622
    %3894 = vmatpush.bf16.msra.mxu0 %v3621
    %3895 = vmatmul.bf16.gmra.mxu0 %v2427
    %v3896 = vpop.f32.mrf.mxu0
    %v3897 = vadd.f32 %v3884, %v3896
    %v3898 = vpop.f32.mrf.mxu0
    %3899 = vdwg.mxu0
    %3900 = vmatpush.bf16.msra.mxu0 %v3636
    %3901 = vmatpush.bf16.msra.mxu0 %v3635
    %3902 = vmatpush.bf16.msra.mxu0 %v3634
    %3903 = vmatpush.bf16.msra.mxu0 %v3633
    %3904 = vmatpush.bf16.msra.mxu0 %v3632
    %3905 = vmatpush.bf16.msra.mxu0 %v3631
    %3906 = vmatpush.bf16.msra.mxu0 %v3630
    %3907 = vmatpush.bf16.msra.mxu0 %v3629
    %3908 = vmatmul.bf16.gmra.mxu0 %v2435
    %v3909 = vpop.f32.mrf.mxu0
    %v3910 = vadd.f32 %v3897, %v3909
    %v3911 = vpop.f32.mrf.mxu0
    %3912 = vdwg.mxu0
    %3913 = vmatpush.bf16.msra.mxu0 %v3644
    %3914 = vmatpush.bf16.msra.mxu0 %v3643
    %3915 = vmatpush.bf16.msra.mxu0 %v3642
    %3916 = vmatpush.bf16.msra.mxu0 %v3641
    %3917 = vmatpush.bf16.msra.mxu0 %v3640
    %3918 = vmatpush.bf16.msra.mxu0 %v3639
    %3919 = vmatpush.bf16.msra.mxu0 %v3638
    %3920 = vmatpush.bf16.msra.mxu0 %v3637
    %3921 = vmatmul.bf16.gmra.mxu0 %v2543
    %v3922 = vpop.f32.mrf.mxu0
    %v3923 = vadd.f32 %v3910, %v3922
    %v3924 = vpop.f32.mrf.mxu0
    %3925 = vdwg.mxu0
    %3926 = vmatpush.bf16.msra.mxu0 %v3652
    %3927 = vmatpush.bf16.msra.mxu0 %v3651
    %3928 = vmatpush.bf16.msra.mxu0 %v3650
    %3929 = vmatpush.bf16.msra.mxu0 %v3649
    %3930 = vmatpush.bf16.msra.mxu0 %v3648
    %3931 = vmatpush.bf16.msra.mxu0 %v3647
    %3932 = vmatpush.bf16.msra.mxu0 %v3646
    %3933 = vmatpush.bf16.msra.mxu0 %v3645
    %3934 = vmatmul.bf16.gmra.mxu0 %v2551
    %v3935 = vpop.f32.mrf.mxu0
    %v3936 = vadd.f32 %v3923, %v3935
    %v3937 = vpop.f32.mrf.mxu0
    %3938 = vdwg.mxu0
    %3939 = vmatpush.bf16.msra.mxu0 %v3660
    %3940 = vmatpush.bf16.msra.mxu0 %v3659
    %3941 = vmatpush.bf16.msra.mxu0 %v3658
    %3942 = vmatpush.bf16.msra.mxu0 %v3657
    %3943 = vmatpush.bf16.msra.mxu0 %v3656
    %3944 = vmatpush.bf16.msra.mxu0 %v3655
    %3945 = vmatpush.bf16.msra.mxu0 %v3654
    %3946 = vmatpush.bf16.msra.mxu0 %v3653
    %3947 = vmatmul.bf16.gmra.mxu0 %v2559
    %v3948 = vpop.f32.mrf.mxu0
    %v3949 = vadd.f32 %v3936, %v3948
    %v3950 = vpop.f32.mrf.mxu0
    %3951 = vdwg.mxu0
    %3952 = vmatpush.bf16.msra.mxu0 %v3668
    %3953 = vmatpush.bf16.msra.mxu0 %v3667
    %3954 = vmatpush.bf16.msra.mxu0 %v3666
    %3955 = vmatpush.bf16.msra.mxu0 %v3665
    %3956 = vmatpush.bf16.msra.mxu0 %v3664
    %3957 = vmatpush.bf16.msra.mxu0 %v3663
    %3958 = vmatpush.bf16.msra.mxu0 %v3662
    %3959 = vmatpush.bf16.msra.mxu0 %v3661
    %3960 = vmatmul.bf16.gmra.mxu0 %v2567
    %v3961 = vpop.f32.mrf.mxu0
    %v3962 = vadd.f32 %v3949, %v3961
    %v3963 = vpop.f32.mrf.mxu0
    %3964 = vdwg.mxu0
    %3965 = vmatpush.bf16.msra.mxu0 %v3676
    %3966 = vmatpush.bf16.msra.mxu0 %v3675
    %3967 = vmatpush.bf16.msra.mxu0 %v3674
    %3968 = vmatpush.bf16.msra.mxu0 %v3673
    %3969 = vmatpush.bf16.msra.mxu0 %v3672
    %3970 = vmatpush.bf16.msra.mxu0 %v3671
    %3971 = vmatpush.bf16.msra.mxu0 %v3670
    %3972 = vmatpush.bf16.msra.mxu0 %v3669
    %3973 = vmatmul.bf16.gmra.mxu0 %v2675
    %v3974 = vpop.f32.mrf.mxu0
    %v3975 = vadd.f32 %v3962, %v3974
    %v3976 = vpop.f32.mrf.mxu0
    %3977 = vdwg.mxu0
    %3978 = vmatpush.bf16.msra.mxu0 %v3684
    %3979 = vmatpush.bf16.msra.mxu0 %v3683
    %3980 = vmatpush.bf16.msra.mxu0 %v3682
    %3981 = vmatpush.bf16.msra.mxu0 %v3681
    %3982 = vmatpush.bf16.msra.mxu0 %v3680
    %3983 = vmatpush.bf16.msra.mxu0 %v3679
    %3984 = vmatpush.bf16.msra.mxu0 %v3678
    %3985 = vmatpush.bf16.msra.mxu0 %v3677
    %3986 = vmatmul.bf16.gmra.mxu0 %v2683
    %v3987 = vpop.f32.mrf.mxu0
    %v3988 = vadd.f32 %v3975, %v3987
    %v3989 = vpop.f32.mrf.mxu0
    %3990 = vdwg.mxu0
    %3991 = vmatpush.bf16.msra.mxu0 %v3692
    %3992 = vmatpush.bf16.msra.mxu0 %v3691
    %3993 = vmatpush.bf16.msra.mxu0 %v3690
    %3994 = vmatpush.bf16.msra.mxu0 %v3689
    %3995 = vmatpush.bf16.msra.mxu0 %v3688
    %3996 = vmatpush.bf16.msra.mxu0 %v3687
    %3997 = vmatpush.bf16.msra.mxu0 %v3686
    %3998 = vmatpush.bf16.msra.mxu0 %v3685
    %3999 = vmatmul.bf16.gmra.mxu0 %v2691
    %v4000 = vpop.f32.mrf.mxu0
    %v4001 = vadd.f32 %v3988, %v4000
    %v4002 = vpop.f32.mrf.mxu0
    %4003 = vdwg.mxu0
    %4004 = vmatpush.bf16.msra.mxu0 %v3700
    %4005 = vmatpush.bf16.msra.mxu0 %v3699
    %4006 = vmatpush.bf16.msra.mxu0 %v3698
    %4007 = vmatpush.bf16.msra.mxu0 %v3697
    %4008 = vmatpush.bf16.msra.mxu0 %v3696
    %4009 = vmatpush.bf16.msra.mxu0 %v3695
    %4010 = vmatpush.bf16.msra.mxu0 %v3694
    %4011 = vmatpush.bf16.msra.mxu0 %v3693
    %4012 = vmatmul.bf16.gmra.mxu0 %v2699
    %v4013 = vpop.f32.mrf.mxu0
    %v4014 = vadd.f32 %v4001, %v4013
    %v4015 = vpop.f32.mrf.mxu0
    %4016 = vdwg.mxu0
    %4017 = vmatpush.bf16.msra.mxu0 %v3708
    %4018 = vmatpush.bf16.msra.mxu0 %v3707
    %4019 = vmatpush.bf16.msra.mxu0 %v3706
    %4020 = vmatpush.bf16.msra.mxu0 %v3705
    %4021 = vmatpush.bf16.msra.mxu0 %v3704
    %4022 = vmatpush.bf16.msra.mxu0 %v3703
    %4023 = vmatpush.bf16.msra.mxu0 %v3702
    %4024 = vmatpush.bf16.msra.mxu0 %v3701
    %4025 = vmatmul.bf16.gmra.mxu0 %v2807
    %v4026 = vpop.f32.mrf.mxu0
    %v4027 = vadd.f32 %v4014, %v4026
    %v4028 = vpop.f32.mrf.mxu0
    %4029 = vdwg.mxu0
    %4030 = vmatpush.bf16.msra.mxu0 %v3716
    %4031 = vmatpush.bf16.msra.mxu0 %v3715
    %4032 = vmatpush.bf16.msra.mxu0 %v3714
    %4033 = vmatpush.bf16.msra.mxu0 %v3713
    %4034 = vmatpush.bf16.msra.mxu0 %v3712
    %4035 = vmatpush.bf16.msra.mxu0 %v3711
    %4036 = vmatpush.bf16.msra.mxu0 %v3710
    %4037 = vmatpush.bf16.msra.mxu0 %v3709
    %4038 = vmatmul.bf16.gmra.mxu0 %v2815
    %v4039 = vpop.f32.mrf.mxu0
    %v4040 = vadd.f32 %v4027, %v4039
    %v4041 = vpop.f32.mrf.mxu0
    %4042 = vdwg.mxu0
    %4043 = vmatpush.bf16.msra.mxu0 %v3724
    %4044 = vmatpush.bf16.msra.mxu0 %v3723
    %4045 = vmatpush.bf16.msra.mxu0 %v3722
    %4046 = vmatpush.bf16.msra.mxu0 %v3721
    %4047 = vmatpush.bf16.msra.mxu0 %v3720
    %4048 = vmatpush.bf16.msra.mxu0 %v3719
    %4049 = vmatpush.bf16.msra.mxu0 %v3718
    %4050 = vmatpush.bf16.msra.mxu0 %v3717
    %4051 = vmatmul.bf16.gmra.mxu0 %v2823
    %v4052 = vpop.f32.mrf.mxu0
    %v4053 = vadd.f32 %v4040, %v4052
    %v4054 = vpop.f32.mrf.mxu0
    %4055 = vdwg.mxu0
    %4056 = vmatpush.bf16.msra.mxu0 %v3732
    %4057 = vmatpush.bf16.msra.mxu0 %v3731
    %4058 = vmatpush.bf16.msra.mxu0 %v3730
    %4059 = vmatpush.bf16.msra.mxu0 %v3729
    %4060 = vmatpush.bf16.msra.mxu0 %v3728
    %4061 = vmatpush.bf16.msra.mxu0 %v3727
    %4062 = vmatpush.bf16.msra.mxu0 %v3726
    %4063 = vmatpush.bf16.msra.mxu0 %v3725
    %4064 = vmatmul.bf16.gmra.mxu0 %v2831
    %v4065 = vpop.f32.mrf.mxu0
    %v4066 = vadd.f32 %v4053, %v4065
    %v4067 = vpop.f32.mrf.mxu0
    %4068 = vdwg.mxu0
    %v4069 = vmax.f32 %v4066, 0.0
    %v4070 = vpack.c.bf16 %v4069, %v4069
    %v4071 = vld [vmem:[%s7] sm:$0xf]
    %v4072 = vld [vmem:[%s7 + $0x4] sm:$0xf]
    %v4073 = vld [vmem:[%s7 + $0x8] sm:$0xf]
    %v4074 = vld [vmem:[%s7 + $0xc] sm:$0xf]
    %v4075 = vld [vmem:[%s7 + $0x10] sm:$0xf]
    %v4076 = vld [vmem:[%s7 + $0x14] sm:$0xf]
    %v4077 = vld [vmem:[%s7 + $0x18] sm:$0xf]
    %v4078 = vld [vmem:[%s7 + $0x1c] sm:$0xf]
    %v4079 = vld [vmem:[%s7 + $0x20] sm:$0xf]
    %v4080 = vld [vmem:[%s7 + $0x24] sm:$0xf]
    %v4081 = vld [vmem:[%s7 + $0x28] sm:$0xf]
    %v4082 = vld [vmem:[%s7 + $0x2c] sm:$0xf]
    %v4083 = vld [vmem:[%s7 + $0x30] sm:$0xf]
    %v4084 = vld [vmem:[%s7 + $0x34] sm:$0xf]
    %v4085 = vld [vmem:[%s7 + $0x38] sm:$0xf]
    %v4086 = vld [vmem:[%s7 + $0x3c] sm:$0xf]
    %v4087 = vld [vmem:[%s8] sm:$0x1]
    %v4089 = vperm.slane %v4087, 0
    %v4107 = vunpack.c.l.b16 %v4071
    %v4108 = vunpack.c.l.b16 %v4072
    %v4109 = vunpack.c.l.b16 %v4073
    %v4110 = vunpack.c.l.b16 %v4074
    %v4111 = vunpack.c.l.b16 %v4075
    %v4112 = vunpack.c.l.b16 %v4076
    %v4113 = vunpack.c.l.b16 %v4077
    %v4114 = vunpack.c.l.b16 %v4078
    %v4115 = vunpack.c.l.b16 %v4079
    %v4116 = vunpack.c.l.b16 %v4080
    %v4117 = vunpack.c.l.b16 %v4081
    %v4118 = vunpack.c.l.b16 %v4082
    %v4119 = vunpack.c.l.b16 %v4083
    %v4120 = vunpack.c.l.b16 %v4084
    %v4121 = vunpack.c.l.b16 %v4085
    %v4122 = vunpack.c.l.b16 %v4086
    %v4123 = vpack.c.b16 %v4108, %v4107
    %v4124 = vpack.c.b16 %v4110, %v4109
    %v4125 = vpack.c.b16 %v4112, %v4111
    %v4126 = vpack.c.b16 %v4114, %v4113
    %v4127 = vpack.c.b16 %v4116, %v4115
    %v4128 = vpack.c.b16 %v4118, %v4117
    %v4129 = vpack.c.b16 %v4120, %v4119
    %v4130 = vpack.c.b16 %v4122, %v4121
    %4139 = vmatpush.bf16.msra.mxu0 %v4130
    %4140 = vmatpush.bf16.msra.mxu0 %v4129
    %4141 = vmatpush.bf16.msra.mxu0 %v4128
    %4142 = vmatpush.bf16.msra.mxu0 %v4127
    %4143 = vmatpush.bf16.msra.mxu0 %v4126
    %4144 = vmatpush.bf16.msra.mxu0 %v4125
    %4145 = vmatpush.bf16.msra.mxu0 %v4124
    %4146 = vmatpush.bf16.msra.mxu0 %v4123
    %4147 = vmatmul.bf16.gmra.mxu0 %v4070
    %v4148 = vpop.f32.mrf.mxu0
    %v4149 = vadd.f32 %v4089, %v4148
    %v4150 = vpop.f32.mrf.mxu0
    %4151 = vdwg.mxu0
    %4152 = vst [vmem:[#allocation2] sm:$0x3] %v4149
    // Predicated region
    $region38: #{cnn_forward.1} parent=1 // pred_check
      _
    $region39: #{cnn_forward.1} parent=1 // pred_check_branch
      %4154 = sbr.rel (0) target = $region41
    $region40: #{cnn_forward.1} parent=1 // pred_region
      %4156 = vsyncadd [#allocation3], 0
      %s4158 = sshll.u32 [#allocation2], 4
      %s4159 = int_to_ptr.vmem [resolvable:$true] %s4158
      %s4160 = sshll.u32 %s9, 4
      %s4161 = int_to_ptr.hbm [resolvable:$true] %s4160
      %4163 = dma.vmem_to_hbm [thread:$0]  %s4159, 32, %s4161, [#allocation3]
    $region41: #{cnn_forward.1} parent=1 // pred_fallthru
      _
    // Predicated region
    $region42: #{cnn_forward.1} parent=1 // pred_check
      _
    $region43: #{cnn_forward.1} parent=1 // pred_check_branch
      %4165 = sbr.rel (0) target = $region45
    $region44: #{cnn_forward.1} parent=1 // pred_region
      %4167 = dma.done [#allocation3], 32
    $region45: #{cnn_forward.1} parent=1 // pred_fallthru
      _
    %4168 = vsyncpa [#allocation3], 1

</llo_original>
